<compile_context>
chip_gen: v5e
topology: v5e:2x2
jax: 0.10.0
libtpu: 0.0.40
codegen_flags: <defaults>
</compile_context>

<pallas_src>
import jax
import jax.numpy as jnp
from jax.experimental import pallas as pl
from jax.experimental.pallas import tpu as pltpu


# ---------------------------------------------------------------------------
# Fused forward kernel.  Per-image layouts (rows = sublanes, cols = lanes):
#   s_e/s_o : (9,68)/(8,68)  space-to-depth input, lane = v*4 + 2p + q
#   conv1   : a_even/a_odd (7,224), lane = ow*16 + cout   (rows 2i / 2i+1)
#   pool1   : p_even/p_odd (7,208)/(6,208), lane = j*16 + c
#   conv2   : (5,160), lane = ow2*32 + cout
#   pool2   : (4,128), lane = w3*32 + cout   -> staged into gbuf[(4, tb, 128)]
#   fc1/fc2 : batched over the tile: (tb,32) / (tb,128) (fc2 padded to 128)
# ---------------------------------------------------------------------------
def _convnet_kernel(se_ref, so_ref, w1_ref, b1_ref, w2_ref, b2_ref,
                    v1_ref, c1_ref, v2_ref, c2_ref, out_ref, gbuf_ref):
    f32 = jnp.float32
    bf16 = jnp.bfloat16
    b1 = b1_ref[...]          # (1, 224) conv1 bias (tiled over ow)
    b2 = b2_ref[...]          # (1, 160) conv2 bias
    c1 = c1_ref[...]          # (1, 32)  fc1 bias
    c2 = c2_ref[...]          # (1, 128) fc2 bias (padded)

    tb = se_ref.shape[0]
    for t in range(tb):                       # static unroll over batch tile
        se = se_ref[t]                        # (9, 68) bf16, even s2d rows
        so = so_ref[t]                        # (8, 68) bf16, odd  s2d rows

        # ---- conv1: 8x8, stride 2, pad 3 as 8 banded MXU matmuls -----------
        # (consecutive dots share the same RHS band -> MXU weight reuse)
        a_even = jnp.zeros((7, 224), f32)     # conv1 rows 0, 2, ..., 12
        a_odd = jnp.zeros((7, 224), f32)      # conv1 rows 1, 3, ..., 13
        for a in range(2):
            band0 = w1_ref[2 * a]
            band1 = w1_ref[2 * a + 1]
            a_even += jnp.dot(se[a:a + 7, :], band0, preferred_element_type=f32)
            a_odd += jnp.dot(so[a:a + 7, :], band0, preferred_element_type=f32)
            a_even += jnp.dot(so[a:a + 7, :], band1, preferred_element_type=f32)
            a_odd += jnp.dot(se[a + 1:a + 8, :], band1,
                             preferred_element_type=f32)
        a_even = jnp.maximum(a_even + b1, 0.0)
        a_odd = jnp.maximum(a_odd + b1, 0.0)

        # ---- max_pool2d(2, 1): 14x14 -> 13x13 (W shift, then H shift) ------
        we = jnp.maximum(a_even[:, :208], a_even[:, 16:])        # (7, 208)
        wo = jnp.maximum(a_odd[:, :208], a_odd[:, 16:])          # (7, 208)
        p_even = jnp.maximum(we, wo).astype(bf16)                # pool rows 0,2,..,12
        p_odd = jnp.maximum(wo[:6, :], we[1:7, :]).astype(bf16)  # pool rows 1,3,..,11

        # ---- conv2: 4x4, stride 2 as 4 banded MXU matmuls ------------------
        y = jnp.zeros((5, 160), f32)
        for a in range(2):
            y += jnp.dot(p_even[a:a + 5, :], w2_ref[2 * a],
                         preferred_element_type=f32)
            y += jnp.dot(p_odd[a:a + 5, :], w2_ref[2 * a + 1],
                         preferred_element_type=f32)
        y = jnp.maximum(y + b2, 0.0)                             # (5, 160)

        # ---- max_pool2d(2, 1): 5x5 -> 4x4 ----------------------------------
        wp = jnp.maximum(y[:, :128], y[:, 32:])                  # (5, 128)
        g = jnp.maximum(wp[:4, :], wp[1:5, :])                   # (4, 128) f32

        # Stage this image's flattened features for the batched fc layers.
        for h in range(4):
            gbuf_ref[h, t:t + 1, :] = g[h:h + 1, :]

    # ---- fc1: 512 -> 32, batched over the tile (4 row-blocks of 128) -------
    h1 = jnp.zeros((tb, 32), f32)
    for h in range(4):
        h1 += jnp.dot(gbuf_ref[h].astype(bf16), v1_ref[h],
                      preferred_element_type=f32)
    h1 = jnp.maximum(h1 + c1, 0.0).astype(bf16)                  # (tb, 32)

    # ---- fc2: 32 -> 10 (padded to 128 lanes), one full-block store ---------
    out_ref[...] = jnp.dot(h1, v2_ref[...], preferred_element_type=f32) + c2


# ---------------------------------------------------------------------------
# Wrapper-side glue (runs once per forward on the tiny input tensor only).
# ---------------------------------------------------------------------------
def _space_to_depth_input(x_nchw, b_pad):
    """NCHW (B,1,28,28) -> parity-split space-to-depth rows (bf16)."""
    b = x_nchw.shape[0]
    x = x_nchw.reshape(b, 28, 28).astype(jnp.float32)
    if b_pad > b:
        x = jnp.pad(x, ((0, b_pad - b), (0, 0), (0, 0)))
    xp = jnp.pad(x, ((0, 0), (3, 3), (3, 3)))                   # (Bp, 34, 34)
    s = xp.reshape(b_pad, 17, 2, 17, 2)                         # (b, u, p, v, q)
    s = s.transpose(0, 1, 3, 2, 4).reshape(b_pad, 17, 68)       # lane = v*4+2p+q
    s = s.astype(jnp.bfloat16)
    return s[:, 0::2, :], s[:, 1::2, :]                         # (Bp,9,68),(Bp,8,68)


def convnet_forward(kparams, x_nchw, *, batch_tile=8):
    """Fused SampleConvNet forward.  x_nchw: (B, 1, 28, 28) f32 -> (B, 10) f32."""
    b = x_nchw.shape[0]
    if b <= batch_tile:
        tb, b_pad = b, b
    else:
        assert batch_tile % 8 == 0, "batch_tile must be a multiple of 8"
        tb = batch_tile
        b_pad = ((b + tb - 1) // tb) * tb
    s_e, s_o = _space_to_depth_input(x_nchw, b_pad)

    out = pl.pallas_call(
        _convnet_kernel,
        out_shape=jax.ShapeDtypeStruct((b_pad, 128), jnp.float32),
        grid=(b_pad // tb,),
        in_specs=[
            pl.BlockSpec((tb, 9, 68), lambda i: (i, 0, 0)),      # s_e (per tile)
            pl.BlockSpec((tb, 8, 68), lambda i: (i, 0, 0)),      # s_o (per tile)
            pl.BlockSpec((4, 68, 224), lambda i: (0, 0, 0)),     # conv1 banded W
            pl.BlockSpec((1, 224), lambda i: (0, 0)),            # conv1 bias
            pl.BlockSpec((4, 208, 160), lambda i: (0, 0, 0)),    # conv2 banded W
            pl.BlockSpec((1, 160), lambda i: (0, 0)),            # conv2 bias
            pl.BlockSpec((4, 128, 32), lambda i: (0, 0, 0)),     # fc1 W (packed)
            pl.BlockSpec((1, 32), lambda i: (0, 0)),             # fc1 bias
            pl.BlockSpec((32, 128), lambda i: (0, 0)),           # fc2 W (padded)
            pl.BlockSpec((1, 128), lambda i: (0, 0)),            # fc2 bias (padded)
        ],
        out_specs=pl.BlockSpec((tb, 128), lambda i: (i, 0)),
        scratch_shapes=[pltpu.VMEM((4, tb, 128), jnp.float32)],  # pool2 staging
        compiler_params=pltpu.CompilerParams(
            dimension_semantics=("parallel",)),
    )(s_e, s_o, kparams["w1b"], kparams["b1v"], kparams["w2b"], kparams["b2v"],
      kparams["v1"], kparams["c1"], kparams["v2"], kparams["c2"])

    return out[:b, :10]


# ---------------------------------------------------------------------------
# One-time weight repacking (hoisted out of the per-call path).
# ---------------------------------------------------------------------------
def prepare_kernel_params(params):
    f32, bf16 = jnp.float32, jnp.bfloat16
    w1 = params["conv1_w"].astype(f32)       # (16, 1, 8, 8)  OIHW
    w2 = params["conv2_w"].astype(f32)       # (32, 16, 4, 4)
    wf1 = params["fc1_w"].astype(f32)        # (32, 512)
    wf2 = params["fc2_w"].astype(f32)        # (10, 32)

    # conv1: building block M1[dh, dw*4 + 2p + q, cout]  (kh=2dh+p, kw=2dw+q)
    m1 = w1[:, 0].reshape(16, 4, 2, 4, 2)                  # (co, dh, p, dw, q)
    m1 = m1.transpose(1, 3, 2, 4, 0).reshape(4, 16, 16)
    # banded matrix: column block ow occupies rows [4*ow, 4*ow + 16)
    w1b = jnp.stack([jnp.pad(m1, ((0, 0), (4 * ow, 52 - 4 * ow), (0, 0)))
                     for ow in range(14)], axis=1)         # (4, 14, 68, 16)
    w1b = w1b.transpose(0, 2, 1, 3).reshape(4, 68, 224).astype(bf16)
    b1v = jnp.tile(params["conv1_b"].astype(f32), 14).reshape(1, 224)

    # conv2: building block M2[kh, kw*16 + cin, cout]
    m2 = w2.transpose(2, 3, 1, 0).reshape(4, 64, 32)
    # column block ow2 occupies rows [32*ow2, 32*ow2 + 64)
    w2b = jnp.stack([jnp.pad(m2, ((0, 0), (32 * ow, 144 - 32 * ow), (0, 0)))
                     for ow in range(5)], axis=1)          # (4, 5, 208, 32)
    w2b = w2b.transpose(0, 2, 1, 3).reshape(4, 208, 160).astype(bf16)
    b2v = jnp.tile(params["conv2_b"].astype(f32), 5).reshape(1, 160)

    # fc1: V1[h3, w3*32 + cout, n] = fc1_w[n, co*16 + h3*4 + w3] (matches
    # PyTorch's NCHW .view(-1, 512) flatten order).
    v1 = wf1.reshape(32, 32, 4, 4).transpose(2, 3, 1, 0).reshape(4, 128, 32)
    v1 = v1.astype(bf16)
    c1 = params["fc1_b"].astype(f32).reshape(1, 32)

    # fc2 padded from 10 to 128 output lanes (sliced off outside the kernel).
    v2 = jnp.zeros((32, 128), f32).at[:, :10].set(wf2.T).astype(bf16)
    c2 = jnp.zeros((1, 128), f32).at[0, :10].set(params["fc2_b"].astype(f32))

    return {"w1b": w1b, "b1v": b1v, "w2b": w2b, "b2v": b2v,
            "v1": v1, "c1": c1, "v2": v2, "c2": c2}


def init_params(key):
    """Deterministic synthetic init (PyTorch parameter shapes, fan-in uniform)."""
    ks = jax.random.split(key, 8)

    def u(k, shape, fan_in):
        bound = 1.0 / jnp.sqrt(jnp.float32(fan_in))
        return jax.random.uniform(k, shape, jnp.float32, -bound, bound)

    return {
        "conv1_w": u(ks[0], (16, 1, 8, 8), 1 * 8 * 8),
        "conv1_b": u(ks[1], (16,), 1 * 8 * 8),
        "conv2_w": u(ks[2], (32, 16, 4, 4), 16 * 4 * 4),
        "conv2_b": u(ks[3], (32,), 16 * 4 * 4),
        "fc1_w": u(ks[4], (32, 32 * 4 * 4), 32 * 4 * 4),
        "fc1_b": u(ks[5], (32,), 32 * 4 * 4),
        "fc2_w": u(ks[6], (10, 32), 32),
        "fc2_b": u(ks[7], (10,), 32),
    }


def reference_forward(params, x_nchw):
    """Plain-JAX reference (PyTorch semantics) for a numerical sanity check."""
    hi = jax.lax.Precision.HIGHEST
    y = jax.lax.conv_general_dilated(
        x_nchw, params["conv1_w"], window_strides=(2, 2),
        padding=((3, 3), (3, 3)),
        dimension_numbers=("NCHW", "OIHW", "NCHW"), precision=hi)
    y = jax.nn.relu(y + params["conv1_b"][None, :, None, None])
    y = jax.lax.reduce_window(y, -jnp.inf, jax.lax.max,
                              (1, 1, 2, 2), (1, 1, 1, 1), "VALID")
    y = jax.lax.conv_general_dilated(
        y, params["conv2_w"], window_strides=(2, 2), padding="VALID",
        dimension_numbers=("NCHW", "OIHW", "NCHW"), precision=hi)
    y = jax.nn.relu(y + params["conv2_b"][None, :, None, None])
    y = jax.lax.reduce_window(y, -jnp.inf, jax.lax.max,
                              (1, 1, 2, 2), (1, 1, 1, 1), "VALID")
    y = y.reshape(y.shape[0], 512)
    y = jax.nn.relu(jnp.dot(y, params["fc1_w"].T, precision=hi) + params["fc1_b"])
    y = jnp.dot(y, params["fc2_w"].T, precision=hi) + params["fc2_b"]
    return y


if __name__ == "__main__":
    key = jax.random.PRNGKey(0)
    pkey, xkey = jax.random.split(key)
    params = init_params(pkey)
    kparams = prepare_kernel_params(params)

    # MNIST-shaped input (28x28 is required so the flatten yields 32*4*4=512).
    x = jax.random.normal(xkey, (2, 1, 28, 28), jnp.float32)

    fwd = jax.jit(convnet_forward)
    out = jax.block_until_ready(fwd(kparams, x))
    assert out.shape == (2, 10) and out.dtype == jnp.float32

    # Numerical sanity check (tolerance covers bf16 matmul inputs).
    ref = reference_forward(params, x)
    max_err = float(jnp.max(jnp.abs(out - ref)))
    assert max_err < 7.5e-2, f"kernel/reference mismatch: max_err={max_err}"
    print("KERNEL_OK")
</pallas_src>

<mosaic_0001>
module attributes {stable_mosaic.version = 11 : i64} {
  func.func @_convnet_kernel(%arg0: i32, %arg1: memref<2x9x68xbf16, #tpu.memory_space<vmem>>, %arg2: memref<2x8x68xbf16, #tpu.memory_space<vmem>>, %arg3: memref<4x68x224xbf16, #tpu.memory_space<vmem>>, %arg4: memref<1x224xf32, #tpu.memory_space<vmem>>, %arg5: memref<4x208x160xbf16, #tpu.memory_space<vmem>>, %arg6: memref<1x160xf32, #tpu.memory_space<vmem>>, %arg7: memref<4x128x32xbf16, #tpu.memory_space<vmem>>, %arg8: memref<1x32xf32, #tpu.memory_space<vmem>>, %arg9: memref<32x128xbf16, #tpu.memory_space<vmem>>, %arg10: memref<1x128xf32, #tpu.memory_space<vmem>>, %arg11: memref<2x128xf32, #tpu.memory_space<vmem>>, %arg12: memref<4x2x128xf32, #tpu.memory_space<vmem>>) attributes {dimension_semantics = [#tpu.dimension_semantics<parallel>], iteration_bounds = array<i64: 1>, scalar_prefetch = 0 : i64, scratch_operands = 1 : i64, tpu.core_type = #tpu.core_type<tc>, window_params = [{transform_indices = @transform_0, window_bounds = array<i64: 2, 9, 68>}, {transform_indices = @transform_1, window_bounds = array<i64: 2, 8, 68>}, {pipeline_mode = #tpu.pipeline_mode<synchronous>, transform_indices = @transform_2, window_bounds = array<i64: 4, 68, 224>}, {pipeline_mode = #tpu.pipeline_mode<synchronous>, transform_indices = @transform_3, window_bounds = array<i64: 1, 224>}, {pipeline_mode = #tpu.pipeline_mode<synchronous>, transform_indices = @transform_4, window_bounds = array<i64: 4, 208, 160>}, {pipeline_mode = #tpu.pipeline_mode<synchronous>, transform_indices = @transform_5, window_bounds = array<i64: 1, 160>}, {pipeline_mode = #tpu.pipeline_mode<synchronous>, transform_indices = @transform_6, window_bounds = array<i64: 4, 128, 32>}, {pipeline_mode = #tpu.pipeline_mode<synchronous>, transform_indices = @transform_7, window_bounds = array<i64: 1, 32>}, {pipeline_mode = #tpu.pipeline_mode<synchronous>, transform_indices = @transform_8, window_bounds = array<i64: 32, 128>}, {pipeline_mode = #tpu.pipeline_mode<synchronous>, transform_indices = @transform_9, window_bounds = array<i64: 1, 128>}, {transform_indices = @transform_10, window_bounds = array<i64: 2, 128>}]} {
    %c0 = arith.constant 0 : index
    %c0_0 = arith.constant 0 : index
    %0 = vector.load %arg4[%c0, %c0_0] : memref<1x224xf32, #tpu.memory_space<vmem>>, vector<1x224xf32>
    %c0_1 = arith.constant 0 : index
    %c0_2 = arith.constant 0 : index
    %1 = vector.load %arg6[%c0_1, %c0_2] : memref<1x160xf32, #tpu.memory_space<vmem>>, vector<1x160xf32>
    %c0_3 = arith.constant 0 : index
    %c0_4 = arith.constant 0 : index
    %2 = vector.load %arg8[%c0_3, %c0_4] : memref<1x32xf32, #tpu.memory_space<vmem>>, vector<1x32xf32>
    %c0_5 = arith.constant 0 : index
    %c0_6 = arith.constant 0 : index
    %3 = vector.load %arg10[%c0_5, %c0_6] : memref<1x128xf32, #tpu.memory_space<vmem>>, vector<1x128xf32>
    %c0_7 = arith.constant 0 : index
    %c0_8 = arith.constant 0 : index
    %c0_9 = arith.constant 0 : index
    %4 = vector.load %arg1[%c0_7, %c0_8, %c0_9] : memref<2x9x68xbf16, #tpu.memory_space<vmem>>, vector<1x9x68xbf16>
    %5 = vector.shape_cast %4 : vector<1x9x68xbf16> to vector<9x68xbf16>
    %c0_10 = arith.constant 0 : index
    %c0_11 = arith.constant 0 : index
    %c0_12 = arith.constant 0 : index
    %6 = vector.load %arg2[%c0_10, %c0_11, %c0_12] : memref<2x8x68xbf16, #tpu.memory_space<vmem>>, vector<1x8x68xbf16>
    %7 = vector.shape_cast %6 : vector<1x8x68xbf16> to vector<8x68xbf16>
    %cst = arith.constant 0.000000e+00 : f32
    %8 = vector.broadcast %cst : f32 to vector<7x224xf32>
    %cst_13 = arith.constant 0.000000e+00 : f32
    %9 = vector.broadcast %cst_13 : f32 to vector<7x224xf32>
    %c0_14 = arith.constant 0 : index
    %c0_15 = arith.constant 0 : index
    %c0_16 = arith.constant 0 : index
    %10 = vector.load %arg3[%c0_14, %c0_15, %c0_16] : memref<4x68x224xbf16, #tpu.memory_space<vmem>>, vector<1x68x224xbf16>
    %11 = vector.shape_cast %10 : vector<1x68x224xbf16> to vector<68x224xbf16>
    %c1 = arith.constant 1 : index
    %c0_17 = arith.constant 0 : index
    %c0_18 = arith.constant 0 : index
    %12 = vector.load %arg3[%c1, %c0_17, %c0_18] : memref<4x68x224xbf16, #tpu.memory_space<vmem>>, vector<1x68x224xbf16>
    %13 = vector.shape_cast %12 : vector<1x68x224xbf16> to vector<68x224xbf16>
    %14 = vector.extract_strided_slice %5 {offsets = [0, 0], sizes = [7, 68], strides = [1, 1]} : vector<9x68xbf16> to vector<7x68xbf16>
    %cst_19 = arith.constant dense<0.000000e+00> : vector<7x224xf32>
    %15 = tpu.matmul %14, %11, %cst_19 {dimension_numbers = #tpu.dot_dimension_numbers<[1], [0], [0], [1], [0, 0, 1, 1], [], []>} : vector<7x68xbf16>, vector<68x224xbf16>, vector<7x224xf32> -> vector<7x224xf32>
    %16 = arith.addf %8, %15 : vector<7x224xf32>
    %17 = vector.extract_strided_slice %7 {offsets = [0, 0], sizes = [7, 68], strides = [1, 1]} : vector<8x68xbf16> to vector<7x68xbf16>
    %cst_20 = arith.constant dense<0.000000e+00> : vector<7x224xf32>
    %18 = tpu.matmul %17, %11, %cst_20 {dimension_numbers = #tpu.dot_dimension_numbers<[1], [0], [0], [1], [0, 0, 1, 1], [], []>} : vector<7x68xbf16>, vector<68x224xbf16>, vector<7x224xf32> -> vector<7x224xf32>
    %19 = arith.addf %9, %18 : vector<7x224xf32>
    %20 = vector.extract_strided_slice %7 {offsets = [0, 0], sizes = [7, 68], strides = [1, 1]} : vector<8x68xbf16> to vector<7x68xbf16>
    %cst_21 = arith.constant dense<0.000000e+00> : vector<7x224xf32>
    %21 = tpu.matmul %20, %13, %cst_21 {dimension_numbers = #tpu.dot_dimension_numbers<[1], [0], [0], [1], [0, 0, 1, 1], [], []>} : vector<7x68xbf16>, vector<68x224xbf16>, vector<7x224xf32> -> vector<7x224xf32>
    %22 = arith.addf %16, %21 : vector<7x224xf32>
    %23 = vector.extract_strided_slice %5 {offsets = [1, 0], sizes = [7, 68], strides = [1, 1]} : vector<9x68xbf16> to vector<7x68xbf16>
    %cst_22 = arith.constant dense<0.000000e+00> : vector<7x224xf32>
    %24 = tpu.matmul %23, %13, %cst_22 {dimension_numbers = #tpu.dot_dimension_numbers<[1], [0], [0], [1], [0, 0, 1, 1], [], []>} : vector<7x68xbf16>, vector<68x224xbf16>, vector<7x224xf32> -> vector<7x224xf32>
    %25 = arith.addf %19, %24 : vector<7x224xf32>
    %c2 = arith.constant 2 : index
    %c0_23 = arith.constant 0 : index
    %c0_24 = arith.constant 0 : index
    %26 = vector.load %arg3[%c2, %c0_23, %c0_24] : memref<4x68x224xbf16, #tpu.memory_space<vmem>>, vector<1x68x224xbf16>
    %27 = vector.shape_cast %26 : vector<1x68x224xbf16> to vector<68x224xbf16>
    %c3 = arith.constant 3 : index
    %c0_25 = arith.constant 0 : index
    %c0_26 = arith.constant 0 : index
    %28 = vector.load %arg3[%c3, %c0_25, %c0_26] : memref<4x68x224xbf16, #tpu.memory_space<vmem>>, vector<1x68x224xbf16>
    %29 = vector.shape_cast %28 : vector<1x68x224xbf16> to vector<68x224xbf16>
    %30 = vector.extract_strided_slice %5 {offsets = [1, 0], sizes = [7, 68], strides = [1, 1]} : vector<9x68xbf16> to vector<7x68xbf16>
    %cst_27 = arith.constant dense<0.000000e+00> : vector<7x224xf32>
    %31 = tpu.matmul %30, %27, %cst_27 {dimension_numbers = #tpu.dot_dimension_numbers<[1], [0], [0], [1], [0, 0, 1, 1], [], []>} : vector<7x68xbf16>, vector<68x224xbf16>, vector<7x224xf32> -> vector<7x224xf32>
    %32 = arith.addf %22, %31 : vector<7x224xf32>
    %33 = vector.extract_strided_slice %7 {offsets = [1, 0], sizes = [7, 68], strides = [1, 1]} : vector<8x68xbf16> to vector<7x68xbf16>
    %cst_28 = arith.constant dense<0.000000e+00> : vector<7x224xf32>
    %34 = tpu.matmul %33, %27, %cst_28 {dimension_numbers = #tpu.dot_dimension_numbers<[1], [0], [0], [1], [0, 0, 1, 1], [], []>} : vector<7x68xbf16>, vector<68x224xbf16>, vector<7x224xf32> -> vector<7x224xf32>
    %35 = arith.addf %25, %34 : vector<7x224xf32>
    %36 = vector.extract_strided_slice %7 {offsets = [1, 0], sizes = [7, 68], strides = [1, 1]} : vector<8x68xbf16> to vector<7x68xbf16>
    %cst_29 = arith.constant dense<0.000000e+00> : vector<7x224xf32>
    %37 = tpu.matmul %36, %29, %cst_29 {dimension_numbers = #tpu.dot_dimension_numbers<[1], [0], [0], [1], [0, 0, 1, 1], [], []>} : vector<7x68xbf16>, vector<68x224xbf16>, vector<7x224xf32> -> vector<7x224xf32>
    %38 = arith.addf %32, %37 : vector<7x224xf32>
    %39 = vector.extract_strided_slice %5 {offsets = [2, 0], sizes = [7, 68], strides = [1, 1]} : vector<9x68xbf16> to vector<7x68xbf16>
    %cst_30 = arith.constant dense<0.000000e+00> : vector<7x224xf32>
    %40 = tpu.matmul %39, %29, %cst_30 {dimension_numbers = #tpu.dot_dimension_numbers<[1], [0], [0], [1], [0, 0, 1, 1], [], []>} : vector<7x68xbf16>, vector<68x224xbf16>, vector<7x224xf32> -> vector<7x224xf32>
    %41 = arith.addf %35, %40 : vector<7x224xf32>
    %42 = vector.broadcast %0 : vector<1x224xf32> to vector<7x224xf32>
    %43 = arith.addf %38, %42 : vector<7x224xf32>
    %cst_31 = arith.constant 0.000000e+00 : f32
    %44 = vector.broadcast %cst_31 : f32 to vector<7x224xf32>
    %45 = arith.maximumf %43, %44 : vector<7x224xf32>
    %46 = vector.broadcast %0 : vector<1x224xf32> to vector<7x224xf32>
    %47 = arith.addf %41, %46 : vector<7x224xf32>
    %cst_32 = arith.constant 0.000000e+00 : f32
    %48 = vector.broadcast %cst_32 : f32 to vector<7x224xf32>
    %49 = arith.maximumf %47, %48 : vector<7x224xf32>
    %50 = vector.extract_strided_slice %45 {offsets = [0, 0], sizes = [7, 208], strides = [1, 1]} : vector<7x224xf32> to vector<7x208xf32>
    %51 = vector.extract_strided_slice %45 {offsets = [0, 16], sizes = [7, 208], strides = [1, 1]} : vector<7x224xf32> to vector<7x208xf32>
    %52 = arith.maximumf %50, %51 : vector<7x208xf32>
    %53 = vector.extract_strided_slice %49 {offsets = [0, 0], sizes = [7, 208], strides = [1, 1]} : vector<7x224xf32> to vector<7x208xf32>
    %54 = vector.extract_strided_slice %49 {offsets = [0, 16], sizes = [7, 208], strides = [1, 1]} : vector<7x224xf32> to vector<7x208xf32>
    %55 = arith.maximumf %53, %54 : vector<7x208xf32>
    %56 = arith.maximumf %52, %55 : vector<7x208xf32>
    %57 = arith.truncf %56 : vector<7x208xf32> to vector<7x208xbf16>
    %58 = vector.extract_strided_slice %55 {offsets = [0, 0], sizes = [6, 208], strides = [1, 1]} : vector<7x208xf32> to vector<6x208xf32>
    %59 = vector.extract_strided_slice %52 {offsets = [1, 0], sizes = [6, 208], strides = [1, 1]} : vector<7x208xf32> to vector<6x208xf32>
    %60 = arith.maximumf %58, %59 : vector<6x208xf32>
    %61 = arith.truncf %60 : vector<6x208xf32> to vector<6x208xbf16>
    %cst_33 = arith.constant 0.000000e+00 : f32
    %62 = vector.broadcast %cst_33 : f32 to vector<5x160xf32>
    %63 = vector.extract_strided_slice %57 {offsets = [0, 0], sizes = [5, 208], strides = [1, 1]} : vector<7x208xbf16> to vector<5x208xbf16>
    %c0_34 = arith.constant 0 : index
    %c0_35 = arith.constant 0 : index
    %c0_36 = arith.constant 0 : index
    %64 = vector.load %arg5[%c0_34, %c0_35, %c0_36] : memref<4x208x160xbf16, #tpu.memory_space<vmem>>, vector<1x208x160xbf16>
    %65 = vector.shape_cast %64 : vector<1x208x160xbf16> to vector<208x160xbf16>
    %cst_37 = arith.constant dense<0.000000e+00> : vector<5x160xf32>
    %66 = tpu.matmul %63, %65, %cst_37 {dimension_numbers = #tpu.dot_dimension_numbers<[1], [0], [0], [1], [0, 0, 1, 1], [], []>} : vector<5x208xbf16>, vector<208x160xbf16>, vector<5x160xf32> -> vector<5x160xf32>
    %67 = arith.addf %62, %66 : vector<5x160xf32>
    %68 = vector.extract_strided_slice %61 {offsets = [0, 0], sizes = [5, 208], strides = [1, 1]} : vector<6x208xbf16> to vector<5x208xbf16>
    %c1_38 = arith.constant 1 : index
    %c0_39 = arith.constant 0 : index
    %c0_40 = arith.constant 0 : index
    %69 = vector.load %arg5[%c1_38, %c0_39, %c0_40] : memref<4x208x160xbf16, #tpu.memory_space<vmem>>, vector<1x208x160xbf16>
    %70 = vector.shape_cast %69 : vector<1x208x160xbf16> to vector<208x160xbf16>
    %cst_41 = arith.constant dense<0.000000e+00> : vector<5x160xf32>
    %71 = tpu.matmul %68, %70, %cst_41 {dimension_numbers = #tpu.dot_dimension_numbers<[1], [0], [0], [1], [0, 0, 1, 1], [], []>} : vector<5x208xbf16>, vector<208x160xbf16>, vector<5x160xf32> -> vector<5x160xf32>
    %72 = arith.addf %67, %71 : vector<5x160xf32>
    %73 = vector.extract_strided_slice %57 {offsets = [1, 0], sizes = [5, 208], strides = [1, 1]} : vector<7x208xbf16> to vector<5x208xbf16>
    %c2_42 = arith.constant 2 : index
    %c0_43 = arith.constant 0 : index
    %c0_44 = arith.constant 0 : index
    %74 = vector.load %arg5[%c2_42, %c0_43, %c0_44] : memref<4x208x160xbf16, #tpu.memory_space<vmem>>, vector<1x208x160xbf16>
    %75 = vector.shape_cast %74 : vector<1x208x160xbf16> to vector<208x160xbf16>
    %cst_45 = arith.constant dense<0.000000e+00> : vector<5x160xf32>
    %76 = tpu.matmul %73, %75, %cst_45 {dimension_numbers = #tpu.dot_dimension_numbers<[1], [0], [0], [1], [0, 0, 1, 1], [], []>} : vector<5x208xbf16>, vector<208x160xbf16>, vector<5x160xf32> -> vector<5x160xf32>
    %77 = arith.addf %72, %76 : vector<5x160xf32>
    %78 = vector.extract_strided_slice %61 {offsets = [1, 0], sizes = [5, 208], strides = [1, 1]} : vector<6x208xbf16> to vector<5x208xbf16>
    %c3_46 = arith.constant 3 : index
    %c0_47 = arith.constant 0 : index
    %c0_48 = arith.constant 0 : index
    %79 = vector.load %arg5[%c3_46, %c0_47, %c0_48] : memref<4x208x160xbf16, #tpu.memory_space<vmem>>, vector<1x208x160xbf16>
    %80 = vector.shape_cast %79 : vector<1x208x160xbf16> to vector<208x160xbf16>
    %cst_49 = arith.constant dense<0.000000e+00> : vector<5x160xf32>
    %81 = tpu.matmul %78, %80, %cst_49 {dimension_numbers = #tpu.dot_dimension_numbers<[1], [0], [0], [1], [0, 0, 1, 1], [], []>} : vector<5x208xbf16>, vector<208x160xbf16>, vector<5x160xf32> -> vector<5x160xf32>
    %82 = arith.addf %77, %81 : vector<5x160xf32>
    %83 = vector.broadcast %1 : vector<1x160xf32> to vector<5x160xf32>
    %84 = arith.addf %82, %83 : vector<5x160xf32>
    %cst_50 = arith.constant 0.000000e+00 : f32
    %85 = vector.broadcast %cst_50 : f32 to vector<5x160xf32>
    %86 = arith.maximumf %84, %85 : vector<5x160xf32>
    %87 = vector.extract_strided_slice %86 {offsets = [0, 0], sizes = [5, 128], strides = [1, 1]} : vector<5x160xf32> to vector<5x128xf32>
    %88 = vector.extract_strided_slice %86 {offsets = [0, 32], sizes = [5, 128], strides = [1, 1]} : vector<5x160xf32> to vector<5x128xf32>
    %89 = arith.maximumf %87, %88 : vector<5x128xf32>
    %90 = vector.extract_strided_slice %89 {offsets = [0, 0], sizes = [4, 128], strides = [1, 1]} : vector<5x128xf32> to vector<4x128xf32>
    %91 = vector.extract_strided_slice %89 {offsets = [1, 0], sizes = [4, 128], strides = [1, 1]} : vector<5x128xf32> to vector<4x128xf32>
    %92 = arith.maximumf %90, %91 : vector<4x128xf32>
    %93 = vector.extract_strided_slice %92 {offsets = [0, 0], sizes = [1, 128], strides = [1, 1]} : vector<4x128xf32> to vector<1x128xf32>
    %c0_51 = arith.constant 0 : index
    %c0_52 = arith.constant 0 : index
    %c0_53 = arith.constant 0 : index
    %94 = vector.load %arg12[%c0_51, %c0_52, %c0_53] : memref<4x2x128xf32, #tpu.memory_space<vmem>>, vector<1x1x128xf32>
    %95 = vector.shape_cast %94 : vector<1x1x128xf32> to vector<1x128xf32>
    %96 = vector.shape_cast %93 : vector<1x128xf32> to vector<1x1x128xf32>
    tpu.vector_store %arg12[%c0_51, %c0_52, %c0_53], %96 {strides = array<i32>} : memref<4x2x128xf32, #tpu.memory_space<vmem>>, vector<1x1x128xf32>,
    %97 = vector.extract_strided_slice %92 {offsets = [1, 0], sizes = [1, 128], strides = [1, 1]} : vector<4x128xf32> to vector<1x128xf32>
    %c1_54 = arith.constant 1 : index
    %c0_55 = arith.constant 0 : index
    %c0_56 = arith.constant 0 : index
    %98 = vector.load %arg12[%c1_54, %c0_55, %c0_56] : memref<4x2x128xf32, #tpu.memory_space<vmem>>, vector<1x1x128xf32>
    %99 = vector.shape_cast %98 : vector<1x1x128xf32> to vector<1x128xf32>
    %100 = vector.shape_cast %97 : vector<1x128xf32> to vector<1x1x128xf32>
    tpu.vector_store %arg12[%c1_54, %c0_55, %c0_56], %100 {strides = array<i32>} : memref<4x2x128xf32, #tpu.memory_space<vmem>>, vector<1x1x128xf32>,
    %101 = vector.extract_strided_slice %92 {offsets = [2, 0], sizes = [1, 128], strides = [1, 1]} : vector<4x128xf32> to vector<1x128xf32>
    %c2_57 = arith.constant 2 : index
    %c0_58 = arith.constant 0 : index
    %c0_59 = arith.constant 0 : index
    %102 = vector.load %arg12[%c2_57, %c0_58, %c0_59] : memref<4x2x128xf32, #tpu.memory_space<vmem>>, vector<1x1x128xf32>
    %103 = vector.shape_cast %102 : vector<1x1x128xf32> to vector<1x128xf32>
    %104 = vector.shape_cast %101 : vector<1x128xf32> to vector<1x1x128xf32>
    tpu.vector_store %arg12[%c2_57, %c0_58, %c0_59], %104 {strides = array<i32>} : memref<4x2x128xf32, #tpu.memory_space<vmem>>, vector<1x1x128xf32>,
    %105 = vector.extract_strided_slice %92 {offsets = [3, 0], sizes = [1, 128], strides = [1, 1]} : vector<4x128xf32> to vector<1x128xf32>
    %c3_60 = arith.constant 3 : index
    %c0_61 = arith.constant 0 : index
    %c0_62 = arith.constant 0 : index
    %106 = vector.load %arg12[%c3_60, %c0_61, %c0_62] : memref<4x2x128xf32, #tpu.memory_space<vmem>>, vector<1x1x128xf32>
    %107 = vector.shape_cast %106 : vector<1x1x128xf32> to vector<1x128xf32>
    %108 = vector.shape_cast %105 : vector<1x128xf32> to vector<1x1x128xf32>
    tpu.vector_store %arg12[%c3_60, %c0_61, %c0_62], %108 {strides = array<i32>} : memref<4x2x128xf32, #tpu.memory_space<vmem>>, vector<1x1x128xf32>,
    %c1_63 = arith.constant 1 : index
    %c0_64 = arith.constant 0 : index
    %c0_65 = arith.constant 0 : index
    %109 = vector.load %arg1[%c1_63, %c0_64, %c0_65] : memref<2x9x68xbf16, #tpu.memory_space<vmem>>, vector<1x9x68xbf16>
    %110 = vector.shape_cast %109 : vector<1x9x68xbf16> to vector<9x68xbf16>
    %c1_66 = arith.constant 1 : index
    %c0_67 = arith.constant 0 : index
    %c0_68 = arith.constant 0 : index
    %111 = vector.load %arg2[%c1_66, %c0_67, %c0_68] : memref<2x8x68xbf16, #tpu.memory_space<vmem>>, vector<1x8x68xbf16>
    %112 = vector.shape_cast %111 : vector<1x8x68xbf16> to vector<8x68xbf16>
    %cst_69 = arith.constant 0.000000e+00 : f32
    %113 = vector.broadcast %cst_69 : f32 to vector<7x224xf32>
    %cst_70 = arith.constant 0.000000e+00 : f32
    %114 = vector.broadcast %cst_70 : f32 to vector<7x224xf32>
    %c0_71 = arith.constant 0 : index
    %c0_72 = arith.constant 0 : index
    %c0_73 = arith.constant 0 : index
    %115 = vector.load %arg3[%c0_71, %c0_72, %c0_73] : memref<4x68x224xbf16, #tpu.memory_space<vmem>>, vector<1x68x224xbf16>
    %116 = vector.shape_cast %115 : vector<1x68x224xbf16> to vector<68x224xbf16>
    %c1_74 = arith.constant 1 : index
    %c0_75 = arith.constant 0 : index
    %c0_76 = arith.constant 0 : index
    %117 = vector.load %arg3[%c1_74, %c0_75, %c0_76] : memref<4x68x224xbf16, #tpu.memory_space<vmem>>, vector<1x68x224xbf16>
    %118 = vector.shape_cast %117 : vector<1x68x224xbf16> to vector<68x224xbf16>
    %119 = vector.extract_strided_slice %110 {offsets = [0, 0], sizes = [7, 68], strides = [1, 1]} : vector<9x68xbf16> to vector<7x68xbf16>
    %cst_77 = arith.constant dense<0.000000e+00> : vector<7x224xf32>
    %120 = tpu.matmul %119, %116, %cst_77 {dimension_numbers = #tpu.dot_dimension_numbers<[1], [0], [0], [1], [0, 0, 1, 1], [], []>} : vector<7x68xbf16>, vector<68x224xbf16>, vector<7x224xf32> -> vector<7x224xf32>
    %121 = arith.addf %113, %120 : vector<7x224xf32>
    %122 = vector.extract_strided_slice %112 {offsets = [0, 0], sizes = [7, 68], strides = [1, 1]} : vector<8x68xbf16> to vector<7x68xbf16>
    %cst_78 = arith.constant dense<0.000000e+00> : vector<7x224xf32>
    %123 = tpu.matmul %122, %116, %cst_78 {dimension_numbers = #tpu.dot_dimension_numbers<[1], [0], [0], [1], [0, 0, 1, 1], [], []>} : vector<7x68xbf16>, vector<68x224xbf16>, vector<7x224xf32> -> vector<7x224xf32>
    %124 = arith.addf %114, %123 : vector<7x224xf32>
    %125 = vector.extract_strided_slice %112 {offsets = [0, 0], sizes = [7, 68], strides = [1, 1]} : vector<8x68xbf16> to vector<7x68xbf16>
    %cst_79 = arith.constant dense<0.000000e+00> : vector<7x224xf32>
    %126 = tpu.matmul %125, %118, %cst_79 {dimension_numbers = #tpu.dot_dimension_numbers<[1], [0], [0], [1], [0, 0, 1, 1], [], []>} : vector<7x68xbf16>, vector<68x224xbf16>, vector<7x224xf32> -> vector<7x224xf32>
    %127 = arith.addf %121, %126 : vector<7x224xf32>
    %128 = vector.extract_strided_slice %110 {offsets = [1, 0], sizes = [7, 68], strides = [1, 1]} : vector<9x68xbf16> to vector<7x68xbf16>
    %cst_80 = arith.constant dense<0.000000e+00> : vector<7x224xf32>
    %129 = tpu.matmul %128, %118, %cst_80 {dimension_numbers = #tpu.dot_dimension_numbers<[1], [0], [0], [1], [0, 0, 1, 1], [], []>} : vector<7x68xbf16>, vector<68x224xbf16>, vector<7x224xf32> -> vector<7x224xf32>
    %130 = arith.addf %124, %129 : vector<7x224xf32>
    %c2_81 = arith.constant 2 : index
    %c0_82 = arith.constant 0 : index
    %c0_83 = arith.constant 0 : index
    %131 = vector.load %arg3[%c2_81, %c0_82, %c0_83] : memref<4x68x224xbf16, #tpu.memory_space<vmem>>, vector<1x68x224xbf16>
    %132 = vector.shape_cast %131 : vector<1x68x224xbf16> to vector<68x224xbf16>
    %c3_84 = arith.constant 3 : index
    %c0_85 = arith.constant 0 : index
    %c0_86 = arith.constant 0 : index
    %133 = vector.load %arg3[%c3_84, %c0_85, %c0_86] : memref<4x68x224xbf16, #tpu.memory_space<vmem>>, vector<1x68x224xbf16>
    %134 = vector.shape_cast %133 : vector<1x68x224xbf16> to vector<68x224xbf16>
    %135 = vector.extract_strided_slice %110 {offsets = [1, 0], sizes = [7, 68], strides = [1, 1]} : vector<9x68xbf16> to vector<7x68xbf16>
    %cst_87 = arith.constant dense<0.000000e+00> : vector<7x224xf32>
    %136 = tpu.matmul %135, %132, %cst_87 {dimension_numbers = #tpu.dot_dimension_numbers<[1], [0], [0], [1], [0, 0, 1, 1], [], []>} : vector<7x68xbf16>, vector<68x224xbf16>, vector<7x224xf32> -> vector<7x224xf32>
    %137 = arith.addf %127, %136 : vector<7x224xf32>
    %138 = vector.extract_strided_slice %112 {offsets = [1, 0], sizes = [7, 68], strides = [1, 1]} : vector<8x68xbf16> to vector<7x68xbf16>
    %cst_88 = arith.constant dense<0.000000e+00> : vector<7x224xf32>
    %139 = tpu.matmul %138, %132, %cst_88 {dimension_numbers = #tpu.dot_dimension_numbers<[1], [0], [0], [1], [0, 0, 1, 1], [], []>} : vector<7x68xbf16>, vector<68x224xbf16>, vector<7x224xf32> -> vector<7x224xf32>
    %140 = arith.addf %130, %139 : vector<7x224xf32>
    %141 = vector.extract_strided_slice %112 {offsets = [1, 0], sizes = [7, 68], strides = [1, 1]} : vector<8x68xbf16> to vector<7x68xbf16>
    %cst_89 = arith.constant dense<0.000000e+00> : vector<7x224xf32>
    %142 = tpu.matmul %141, %134, %cst_89 {dimension_numbers = #tpu.dot_dimension_numbers<[1], [0], [0], [1], [0, 0, 1, 1], [], []>} : vector<7x68xbf16>, vector<68x224xbf16>, vector<7x224xf32> -> vector<7x224xf32>
    %143 = arith.addf %137, %142 : vector<7x224xf32>
    %144 = vector.extract_strided_slice %110 {offsets = [2, 0], sizes = [7, 68], strides = [1, 1]} : vector<9x68xbf16> to vector<7x68xbf16>
    %cst_90 = arith.constant dense<0.000000e+00> : vector<7x224xf32>
    %145 = tpu.matmul %144, %134, %cst_90 {dimension_numbers = #tpu.dot_dimension_numbers<[1], [0], [0], [1], [0, 0, 1, 1], [], []>} : vector<7x68xbf16>, vector<68x224xbf16>, vector<7x224xf32> -> vector<7x224xf32>
    %146 = arith.addf %140, %145 : vector<7x224xf32>
    %147 = vector.broadcast %0 : vector<1x224xf32> to vector<7x224xf32>
    %148 = arith.addf %143, %147 : vector<7x224xf32>
    %cst_91 = arith.constant 0.000000e+00 : f32
    %149 = vector.broadcast %cst_91 : f32 to vector<7x224xf32>
    %150 = arith.maximumf %148, %149 : vector<7x224xf32>
    %151 = vector.broadcast %0 : vector<1x224xf32> to vector<7x224xf32>
    %152 = arith.addf %146, %151 : vector<7x224xf32>
    %cst_92 = arith.constant 0.000000e+00 : f32
    %153 = vector.broadcast %cst_92 : f32 to vector<7x224xf32>
    %154 = arith.maximumf %152, %153 : vector<7x224xf32>
    %155 = vector.extract_strided_slice %150 {offsets = [0, 0], sizes = [7, 208], strides = [1, 1]} : vector<7x224xf32> to vector<7x208xf32>
    %156 = vector.extract_strided_slice %150 {offsets = [0, 16], sizes = [7, 208], strides = [1, 1]} : vector<7x224xf32> to vector<7x208xf32>
    %157 = arith.maximumf %155, %156 : vector<7x208xf32>
    %158 = vector.extract_strided_slice %154 {offsets = [0, 0], sizes = [7, 208], strides = [1, 1]} : vector<7x224xf32> to vector<7x208xf32>
    %159 = vector.extract_strided_slice %154 {offsets = [0, 16], sizes = [7, 208], strides = [1, 1]} : vector<7x224xf32> to vector<7x208xf32>
    %160 = arith.maximumf %158, %159 : vector<7x208xf32>
    %161 = arith.maximumf %157, %160 : vector<7x208xf32>
    %162 = arith.truncf %161 : vector<7x208xf32> to vector<7x208xbf16>
    %163 = vector.extract_strided_slice %160 {offsets = [0, 0], sizes = [6, 208], strides = [1, 1]} : vector<7x208xf32> to vector<6x208xf32>
    %164 = vector.extract_strided_slice %157 {offsets = [1, 0], sizes = [6, 208], strides = [1, 1]} : vector<7x208xf32> to vector<6x208xf32>
    %165 = arith.maximumf %163, %164 : vector<6x208xf32>
    %166 = arith.truncf %165 : vector<6x208xf32> to vector<6x208xbf16>
    %cst_93 = arith.constant 0.000000e+00 : f32
    %167 = vector.broadcast %cst_93 : f32 to vector<5x160xf32>
    %168 = vector.extract_strided_slice %162 {offsets = [0, 0], sizes = [5, 208], strides = [1, 1]} : vector<7x208xbf16> to vector<5x208xbf16>
    %c0_94 = arith.constant 0 : index
    %c0_95 = arith.constant 0 : index
    %c0_96 = arith.constant 0 : index
    %169 = vector.load %arg5[%c0_94, %c0_95, %c0_96] : memref<4x208x160xbf16, #tpu.memory_space<vmem>>, vector<1x208x160xbf16>
    %170 = vector.shape_cast %169 : vector<1x208x160xbf16> to vector<208x160xbf16>
    %cst_97 = arith.constant dense<0.000000e+00> : vector<5x160xf32>
    %171 = tpu.matmul %168, %170, %cst_97 {dimension_numbers = #tpu.dot_dimension_numbers<[1], [0], [0], [1], [0, 0, 1, 1], [], []>} : vector<5x208xbf16>, vector<208x160xbf16>, vector<5x160xf32> -> vector<5x160xf32>
    %172 = arith.addf %167, %171 : vector<5x160xf32>
    %173 = vector.extract_strided_slice %166 {offsets = [0, 0], sizes = [5, 208], strides = [1, 1]} : vector<6x208xbf16> to vector<5x208xbf16>
    %c1_98 = arith.constant 1 : index
    %c0_99 = arith.constant 0 : index
    %c0_100 = arith.constant 0 : index
    %174 = vector.load %arg5[%c1_98, %c0_99, %c0_100] : memref<4x208x160xbf16, #tpu.memory_space<vmem>>, vector<1x208x160xbf16>
    %175 = vector.shape_cast %174 : vector<1x208x160xbf16> to vector<208x160xbf16>
    %cst_101 = arith.constant dense<0.000000e+00> : vector<5x160xf32>
    %176 = tpu.matmul %173, %175, %cst_101 {dimension_numbers = #tpu.dot_dimension_numbers<[1], [0], [0], [1], [0, 0, 1, 1], [], []>} : vector<5x208xbf16>, vector<208x160xbf16>, vector<5x160xf32> -> vector<5x160xf32>
    %177 = arith.addf %172, %176 : vector<5x160xf32>
    %178 = vector.extract_strided_slice %162 {offsets = [1, 0], sizes = [5, 208], strides = [1, 1]} : vector<7x208xbf16> to vector<5x208xbf16>
    %c2_102 = arith.constant 2 : index
    %c0_103 = arith.constant 0 : index
    %c0_104 = arith.constant 0 : index
    %179 = vector.load %arg5[%c2_102, %c0_103, %c0_104] : memref<4x208x160xbf16, #tpu.memory_space<vmem>>, vector<1x208x160xbf16>
    %180 = vector.shape_cast %179 : vector<1x208x160xbf16> to vector<208x160xbf16>
    %cst_105 = arith.constant dense<0.000000e+00> : vector<5x160xf32>
    %181 = tpu.matmul %178, %180, %cst_105 {dimension_numbers = #tpu.dot_dimension_numbers<[1], [0], [0], [1], [0, 0, 1, 1], [], []>} : vector<5x208xbf16>, vector<208x160xbf16>, vector<5x160xf32> -> vector<5x160xf32>
    %182 = arith.addf %177, %181 : vector<5x160xf32>
    %183 = vector.extract_strided_slice %166 {offsets = [1, 0], sizes = [5, 208], strides = [1, 1]} : vector<6x208xbf16> to vector<5x208xbf16>
    %c3_106 = arith.constant 3 : index
    %c0_107 = arith.constant 0 : index
    %c0_108 = arith.constant 0 : index
    %184 = vector.load %arg5[%c3_106, %c0_107, %c0_108] : memref<4x208x160xbf16, #tpu.memory_space<vmem>>, vector<1x208x160xbf16>
    %185 = vector.shape_cast %184 : vector<1x208x160xbf16> to vector<208x160xbf16>
    %cst_109 = arith.constant dense<0.000000e+00> : vector<5x160xf32>
    %186 = tpu.matmul %183, %185, %cst_109 {dimension_numbers = #tpu.dot_dimension_numbers<[1], [0], [0], [1], [0, 0, 1, 1], [], []>} : vector<5x208xbf16>, vector<208x160xbf16>, vector<5x160xf32> -> vector<5x160xf32>
    %187 = arith.addf %182, %186 : vector<5x160xf32>
    %188 = vector.broadcast %1 : vector<1x160xf32> to vector<5x160xf32>
    %189 = arith.addf %187, %188 : vector<5x160xf32>
    %cst_110 = arith.constant 0.000000e+00 : f32
    %190 = vector.broadcast %cst_110 : f32 to vector<5x160xf32>
    %191 = arith.maximumf %189, %190 : vector<5x160xf32>
    %192 = vector.extract_strided_slice %191 {offsets = [0, 0], sizes = [5, 128], strides = [1, 1]} : vector<5x160xf32> to vector<5x128xf32>
    %193 = vector.extract_strided_slice %191 {offsets = [0, 32], sizes = [5, 128], strides = [1, 1]} : vector<5x160xf32> to vector<5x128xf32>
    %194 = arith.maximumf %192, %193 : vector<5x128xf32>
    %195 = vector.extract_strided_slice %194 {offsets = [0, 0], sizes = [4, 128], strides = [1, 1]} : vector<5x128xf32> to vector<4x128xf32>
    %196 = vector.extract_strided_slice %194 {offsets = [1, 0], sizes = [4, 128], strides = [1, 1]} : vector<5x128xf32> to vector<4x128xf32>
    %197 = arith.maximumf %195, %196 : vector<4x128xf32>
    %198 = vector.extract_strided_slice %197 {offsets = [0, 0], sizes = [1, 128], strides = [1, 1]} : vector<4x128xf32> to vector<1x128xf32>
    %c0_111 = arith.constant 0 : index
    %c1_112 = arith.constant 1 : index
    %c0_113 = arith.constant 0 : index
    %199 = vector.load %arg12[%c0_111, %c1_112, %c0_113] : memref<4x2x128xf32, #tpu.memory_space<vmem>>, vector<1x1x128xf32>
    %200 = vector.shape_cast %199 : vector<1x1x128xf32> to vector<1x128xf32>
    %201 = vector.shape_cast %198 : vector<1x128xf32> to vector<1x1x128xf32>
    tpu.vector_store %arg12[%c0_111, %c1_112, %c0_113], %201 {strides = array<i32>} : memref<4x2x128xf32, #tpu.memory_space<vmem>>, vector<1x1x128xf32>,
    %202 = vector.extract_strided_slice %197 {offsets = [1, 0], sizes = [1, 128], strides = [1, 1]} : vector<4x128xf32> to vector<1x128xf32>
    %c1_114 = arith.constant 1 : index
    %c1_115 = arith.constant 1 : index
    %c0_116 = arith.constant 0 : index
    %203 = vector.load %arg12[%c1_114, %c1_115, %c0_116] : memref<4x2x128xf32, #tpu.memory_space<vmem>>, vector<1x1x128xf32>
    %204 = vector.shape_cast %203 : vector<1x1x128xf32> to vector<1x128xf32>
    %205 = vector.shape_cast %202 : vector<1x128xf32> to vector<1x1x128xf32>
    tpu.vector_store %arg12[%c1_114, %c1_115, %c0_116], %205 {strides = array<i32>} : memref<4x2x128xf32, #tpu.memory_space<vmem>>, vector<1x1x128xf32>,
    %206 = vector.extract_strided_slice %197 {offsets = [2, 0], sizes = [1, 128], strides = [1, 1]} : vector<4x128xf32> to vector<1x128xf32>
    %c2_117 = arith.constant 2 : index
    %c1_118 = arith.constant 1 : index
    %c0_119 = arith.constant 0 : index
    %207 = vector.load %arg12[%c2_117, %c1_118, %c0_119] : memref<4x2x128xf32, #tpu.memory_space<vmem>>, vector<1x1x128xf32>
    %208 = vector.shape_cast %207 : vector<1x1x128xf32> to vector<1x128xf32>
    %209 = vector.shape_cast %206 : vector<1x128xf32> to vector<1x1x128xf32>
    tpu.vector_store %arg12[%c2_117, %c1_118, %c0_119], %209 {strides = array<i32>} : memref<4x2x128xf32, #tpu.memory_space<vmem>>, vector<1x1x128xf32>,
    %210 = vector.extract_strided_slice %197 {offsets = [3, 0], sizes = [1, 128], strides = [1, 1]} : vector<4x128xf32> to vector<1x128xf32>
    %c3_120 = arith.constant 3 : index
    %c1_121 = arith.constant 1 : index
    %c0_122 = arith.constant 0 : index
    %211 = vector.load %arg12[%c3_120, %c1_121, %c0_122] : memref<4x2x128xf32, #tpu.memory_space<vmem>>, vector<1x1x128xf32>
    %212 = vector.shape_cast %211 : vector<1x1x128xf32> to vector<1x128xf32>
    %213 = vector.shape_cast %210 : vector<1x128xf32> to vector<1x1x128xf32>
    tpu.vector_store %arg12[%c3_120, %c1_121, %c0_122], %213 {strides = array<i32>} : memref<4x2x128xf32, #tpu.memory_space<vmem>>, vector<1x1x128xf32>,
    %cst_123 = arith.constant 0.000000e+00 : f32
    %214 = vector.broadcast %cst_123 : f32 to vector<2x32xf32>
    %c0_124 = arith.constant 0 : index
    %c0_125 = arith.constant 0 : index
    %c0_126 = arith.constant 0 : index
    %215 = vector.load %arg12[%c0_124, %c0_125, %c0_126] : memref<4x2x128xf32, #tpu.memory_space<vmem>>, vector<1x2x128xf32>
    %216 = vector.shape_cast %215 : vector<1x2x128xf32> to vector<2x128xf32>
    %217 = arith.truncf %216 : vector<2x128xf32> to vector<2x128xbf16>
    %c0_127 = arith.constant 0 : index
    %c0_128 = arith.constant 0 : index
    %c0_129 = arith.constant 0 : index
    %218 = vector.load %arg7[%c0_127, %c0_128, %c0_129] : memref<4x128x32xbf16, #tpu.memory_space<vmem>>, vector<1x128x32xbf16>
    %219 = vector.shape_cast %218 : vector<1x128x32xbf16> to vector<128x32xbf16>
    %cst_130 = arith.constant dense<0.000000e+00> : vector<2x32xf32>
    %220 = tpu.matmul %217, %219, %cst_130 {dimension_numbers = #tpu.dot_dimension_numbers<[1], [0], [0], [1], [0, 0, 1, 1], [], []>} : vector<2x128xbf16>, vector<128x32xbf16>, vector<2x32xf32> -> vector<2x32xf32>
    %221 = arith.addf %214, %220 : vector<2x32xf32>
    %c1_131 = arith.constant 1 : index
    %c0_132 = arith.constant 0 : index
    %c0_133 = arith.constant 0 : index
    %222 = vector.load %arg12[%c1_131, %c0_132, %c0_133] : memref<4x2x128xf32, #tpu.memory_space<vmem>>, vector<1x2x128xf32>
    %223 = vector.shape_cast %222 : vector<1x2x128xf32> to vector<2x128xf32>
    %224 = arith.truncf %223 : vector<2x128xf32> to vector<2x128xbf16>
    %c1_134 = arith.constant 1 : index
    %c0_135 = arith.constant 0 : index
    %c0_136 = arith.constant 0 : index
    %225 = vector.load %arg7[%c1_134, %c0_135, %c0_136] : memref<4x128x32xbf16, #tpu.memory_space<vmem>>, vector<1x128x32xbf16>
    %226 = vector.shape_cast %225 : vector<1x128x32xbf16> to vector<128x32xbf16>
    %cst_137 = arith.constant dense<0.000000e+00> : vector<2x32xf32>
    %227 = tpu.matmul %224, %226, %cst_137 {dimension_numbers = #tpu.dot_dimension_numbers<[1], [0], [0], [1], [0, 0, 1, 1], [], []>} : vector<2x128xbf16>, vector<128x32xbf16>, vector<2x32xf32> -> vector<2x32xf32>
    %228 = arith.addf %221, %227 : vector<2x32xf32>
    %c2_138 = arith.constant 2 : index
    %c0_139 = arith.constant 0 : index
    %c0_140 = arith.constant 0 : index
    %229 = vector.load %arg12[%c2_138, %c0_139, %c0_140] : memref<4x2x128xf32, #tpu.memory_space<vmem>>, vector<1x2x128xf32>
    %230 = vector.shape_cast %229 : vector<1x2x128xf32> to vector<2x128xf32>
    %231 = arith.truncf %230 : vector<2x128xf32> to vector<2x128xbf16>
    %c2_141 = arith.constant 2 : index
    %c0_142 = arith.constant 0 : index
    %c0_143 = arith.constant 0 : index
    %232 = vector.load %arg7[%c2_141, %c0_142, %c0_143] : memref<4x128x32xbf16, #tpu.memory_space<vmem>>, vector<1x128x32xbf16>
    %233 = vector.shape_cast %232 : vector<1x128x32xbf16> to vector<128x32xbf16>
    %cst_144 = arith.constant dense<0.000000e+00> : vector<2x32xf32>
    %234 = tpu.matmul %231, %233, %cst_144 {dimension_numbers = #tpu.dot_dimension_numbers<[1], [0], [0], [1], [0, 0, 1, 1], [], []>} : vector<2x128xbf16>, vector<128x32xbf16>, vector<2x32xf32> -> vector<2x32xf32>
    %235 = arith.addf %228, %234 : vector<2x32xf32>
    %c3_145 = arith.constant 3 : index
    %c0_146 = arith.constant 0 : index
    %c0_147 = arith.constant 0 : index
    %236 = vector.load %arg12[%c3_145, %c0_146, %c0_147] : memref<4x2x128xf32, #tpu.memory_space<vmem>>, vector<1x2x128xf32>
    %237 = vector.shape_cast %236 : vector<1x2x128xf32> to vector<2x128xf32>
    %238 = arith.truncf %237 : vector<2x128xf32> to vector<2x128xbf16>
    %c3_148 = arith.constant 3 : index
    %c0_149 = arith.constant 0 : index
    %c0_150 = arith.constant 0 : index
    %239 = vector.load %arg7[%c3_148, %c0_149, %c0_150] : memref<4x128x32xbf16, #tpu.memory_space<vmem>>, vector<1x128x32xbf16>
    %240 = vector.shape_cast %239 : vector<1x128x32xbf16> to vector<128x32xbf16>
    %cst_151 = arith.constant dense<0.000000e+00> : vector<2x32xf32>
    %241 = tpu.matmul %238, %240, %cst_151 {dimension_numbers = #tpu.dot_dimension_numbers<[1], [0], [0], [1], [0, 0, 1, 1], [], []>} : vector<2x128xbf16>, vector<128x32xbf16>, vector<2x32xf32> -> vector<2x32xf32>
    %242 = arith.addf %235, %241 : vector<2x32xf32>
    %243 = vector.broadcast %2 : vector<1x32xf32> to vector<2x32xf32>
    %244 = arith.addf %242, %243 : vector<2x32xf32>
    %cst_152 = arith.constant 0.000000e+00 : f32
    %245 = vector.broadcast %cst_152 : f32 to vector<2x32xf32>
    %246 = arith.maximumf %244, %245 : vector<2x32xf32>
    %247 = arith.truncf %246 : vector<2x32xf32> to vector<2x32xbf16>
    %c0_153 = arith.constant 0 : index
    %c0_154 = arith.constant 0 : index
    %248 = vector.load %arg9[%c0_153, %c0_154] : memref<32x128xbf16, #tpu.memory_space<vmem>>, vector<32x128xbf16>
    %cst_155 = arith.constant dense<0.000000e+00> : vector<2x128xf32>
    %249 = tpu.matmul %247, %248, %cst_155 {dimension_numbers = #tpu.dot_dimension_numbers<[1], [0], [0], [1], [0, 0, 1, 1], [], []>} : vector<2x32xbf16>, vector<32x128xbf16>, vector<2x128xf32> -> vector<2x128xf32>
    %250 = vector.broadcast %3 : vector<1x128xf32> to vector<2x128xf32>
    %251 = arith.addf %249, %250 : vector<2x128xf32>
    %c0_156 = arith.constant 0 : index
    %c0_157 = arith.constant 0 : index
    %252 = vector.load %arg11[%c0_156, %c0_157] : memref<2x128xf32, #tpu.memory_space<vmem>>, vector<2x128xf32>
    tpu.vector_store %arg11[%c0_156, %c0_157], %251 {strides = array<i32>} : memref<2x128xf32, #tpu.memory_space<vmem>>, vector<2x128xf32>,
    return
  }
  func.func @transform_0(%arg0: i32) -> (i32, i32, i32) {
    %c0_i32 = arith.constant 0 : i32
    %c0_i32_0 = arith.constant 0 : i32
    %c0_i32_1 = arith.constant 0 : i32
    return %arg0, %c0_i32, %c0_i32_0 : i32, i32, i32
  }
  func.func @transform_1(%arg0: i32) -> (i32, i32, i32) {
    %c0_i32 = arith.constant 0 : i32
    %c0_i32_0 = arith.constant 0 : i32
    %c0_i32_1 = arith.constant 0 : i32
    return %arg0, %c0_i32, %c0_i32_0 : i32, i32, i32
  }
  func.func @transform_2(%arg0: i32) -> (i32, i32, i32) {
    %c0_i32 = arith.constant 0 : i32
    %c0_i32_0 = arith.constant 0 : i32
    %c0_i32_1 = arith.constant 0 : i32
    %c0_i32_2 = arith.constant 0 : i32
    return %c0_i32, %c0_i32_0, %c0_i32_1 : i32, i32, i32
  }
  func.func @transform_3(%arg0: i32) -> (i32, i32) {
    %c0_i32 = arith.constant 0 : i32
    %c0_i32_0 = arith.constant 0 : i32
    %c0_i32_1 = arith.constant 0 : i32
    return %c0_i32, %c0_i32_0 : i32, i32
  }
  func.func @transform_4(%arg0: i32) -> (i32, i32, i32) {
    %c0_i32 = arith.constant 0 : i32
    %c0_i32_0 = arith.constant 0 : i32
    %c0_i32_1 = arith.constant 0 : i32
    %c0_i32_2 = arith.constant 0 : i32
    return %c0_i32, %c0_i32_0, %c0_i32_1 : i32, i32, i32
  }
  func.func @transform_5(%arg0: i32) -> (i32, i32) {
    %c0_i32 = arith.constant 0 : i32
    %c0_i32_0 = arith.constant 0 : i32
    %c0_i32_1 = arith.constant 0 : i32
    return %c0_i32, %c0_i32_0 : i32, i32
  }
  func.func @transform_6(%arg0: i32) -> (i32, i32, i32) {
    %c0_i32 = arith.constant 0 : i32
    %c0_i32_0 = arith.constant 0 : i32
    %c0_i32_1 = arith.constant 0 : i32
    %c0_i32_2 = arith.constant 0 : i32
    return %c0_i32, %c0_i32_0, %c0_i32_1 : i32, i32, i32
  }
  func.func @transform_7(%arg0: i32) -> (i32, i32) {
    %c0_i32 = arith.constant 0 : i32
    %c0_i32_0 = arith.constant 0 : i32
    %c0_i32_1 = arith.constant 0 : i32
    return %c0_i32, %c0_i32_0 : i32, i32
  }
  func.func @transform_8(%arg0: i32) -> (i32, i32) {
    %c0_i32 = arith.constant 0 : i32
    %c0_i32_0 = arith.constant 0 : i32
    %c0_i32_1 = arith.constant 0 : i32
    return %c0_i32, %c0_i32_0 : i32, i32
  }
  func.func @transform_9(%arg0: i32) -> (i32, i32) {
    %c0_i32 = arith.constant 0 : i32
    %c0_i32_0 = arith.constant 0 : i32
    %c0_i32_1 = arith.constant 0 : i32
    return %c0_i32, %c0_i32_0 : i32, i32
  }
  func.func @transform_10(%arg0: i32) -> (i32, i32) {
    %c0_i32 = arith.constant 0 : i32
    %c0_i32_0 = arith.constant 0 : i32
    return %arg0, %c0_i32 : i32, i32
  }
}

</mosaic_0001>

<llo_original>
// kernel: convnet_forward.1
$region0: #{convnet_forward.1}
  #allocation0 [shape = 'u32[]', space=smem, size = 0x4, offset = 0x4, fixed_abs, tag = 'smem constant byte address 0x4 - core index']
  #allocation1 [shape = 'u32[72,128]{1,0:T(1,128)}', space=vmem, size = 0x9000, scoped, tag = 'internal scratch']
  #allocation2 [shape = 'f32[4,2,128]{2,1,0:T(2,128)}', space=vmem, size = 0x1000, scoped, tag = 'scratch operand']
  %s0 = inlined_call_operand.vmem [shape: bf16[2,9,68], index: 0, kind: input, shape index: {}]
  %s1 = inlined_call_operand.vmem [shape: bf16[2,8,68], index: 1, kind: input, shape index: {}]
  %s2 = inlined_call_operand.vmem [shape: bf16[4,68,224], index: 2, kind: input, shape index: {}]
  %s3 = inlined_call_operand.vmem [shape: f32[1,224], index: 3, kind: input, shape index: {}]
  %s4 = inlined_call_operand.vmem [shape: bf16[4,208,160], index: 4, kind: input, shape index: {}]
  %s5 = inlined_call_operand.vmem [shape: f32[1,160], index: 5, kind: input, shape index: {}]
  %s6 = inlined_call_operand.vmem [shape: bf16[4,128,32], index: 6, kind: input, shape index: {}]
  %s7 = inlined_call_operand.vmem [shape: f32[1,32], index: 7, kind: input, shape index: {}]
  %s8 = inlined_call_operand.vmem [shape: bf16[32,128], index: 8, kind: input, shape index: {}]
  %s9 = inlined_call_operand.vmem [shape: f32[1,128], index: 9, kind: input, shape index: {}]
  %s10 = inlined_call_operand.hbm [shape: f32[2,128], index: 10, kind: output, shape index: {}]
  %s11 = sld [smem:[#allocation0]]
  $region50: #{convnet_forward.1} parent=0
    _
  %s13 = ssub.s32 1, %s11
  %s14 = scalar_select 0, %s13, %s11
  $region1: #{convnet_forward.1} parent=0
    #allocation3 [shape = 'u8[1024]{0}', space=vmem, size = 0x400, scoped, tag = 'output window, operand 0, single buffered']
    #allocation4 [shape = 's32[1]{0}', space=sflag, size = 0x4, scoped, tag = 'scoped memory for convnet_forward.1']
    %15 = vsyncpa [#allocation4], 0
    // Predicated region
    $region2: #{convnet_forward.1} parent=1 // pred_check
      _
    $region3: #{convnet_forward.1} parent=1 // pred_check_branch
      %17 = sbr.rel (0) target = $region5
    $region4: #{convnet_forward.1} parent=1 // pred_region
      _
    $region5: #{convnet_forward.1} parent=1 // pred_fallthru
      _
    // Predicated region
    $region6: #{convnet_forward.1} parent=1 // pred_check
      _
    $region7: #{convnet_forward.1} parent=1 // pred_check_branch
      %19 = sbr.rel (0) target = $region9
    $region8: #{convnet_forward.1} parent=1 // pred_region
      _
    $region9: #{convnet_forward.1} parent=1 // pred_fallthru
      _
    // Predicated region
    $region10: #{convnet_forward.1} parent=1 // pred_check
      _
    $region11: #{convnet_forward.1} parent=1 // pred_check_branch
      %21 = sbr.rel (0) target = $region13
    $region12: #{convnet_forward.1} parent=1 // pred_region
      _
    $region13: #{convnet_forward.1} parent=1 // pred_fallthru
      _
    // Predicated region
    $region14: #{convnet_forward.1} parent=1 // pred_check
      _
    $region15: #{convnet_forward.1} parent=1 // pred_check_branch
      %23 = sbr.rel (0) target = $region17
    $region16: #{convnet_forward.1} parent=1 // pred_region
      _
    $region17: #{convnet_forward.1} parent=1 // pred_fallthru
      _
    // Predicated region
    $region18: #{convnet_forward.1} parent=1 // pred_check
      _
    $region19: #{convnet_forward.1} parent=1 // pred_check_branch
      %25 = sbr.rel (0) target = $region21
    $region20: #{convnet_forward.1} parent=1 // pred_region
      _
    $region21: #{convnet_forward.1} parent=1 // pred_fallthru
      _
    // Predicated region
    $region22: #{convnet_forward.1} parent=1 // pred_check
      _
    $region23: #{convnet_forward.1} parent=1 // pred_check_branch
      %27 = sbr.rel (0) target = $region25
    $region24: #{convnet_forward.1} parent=1 // pred_region
      _
    $region25: #{convnet_forward.1} parent=1 // pred_fallthru
      _
    // Predicated region
    $region26: #{convnet_forward.1} parent=1 // pred_check
      _
    $region27: #{convnet_forward.1} parent=1 // pred_check_branch
      %29 = sbr.rel (0) target = $region29
    $region28: #{convnet_forward.1} parent=1 // pred_region
      _
    $region29: #{convnet_forward.1} parent=1 // pred_fallthru
      _
    // Predicated region
    $region30: #{convnet_forward.1} parent=1 // pred_check
      _
    $region31: #{convnet_forward.1} parent=1 // pred_check_branch
      %31 = sbr.rel (0) target = $region33
    $region32: #{convnet_forward.1} parent=1 // pred_region
      _
    $region33: #{convnet_forward.1} parent=1 // pred_fallthru
      _
    // Predicated region
    $region34: #{convnet_forward.1} parent=1 // pred_check
      _
    $region35: #{convnet_forward.1} parent=1 // pred_check_branch
      %33 = sbr.rel (0) target = $region37
    $region36: #{convnet_forward.1} parent=1 // pred_region
      _
    $region37: #{convnet_forward.1} parent=1 // pred_fallthru
      _
    // Predicated region
    $region38: #{convnet_forward.1} parent=1 // pred_check
      _
    $region39: #{convnet_forward.1} parent=1 // pred_check_branch
      %35 = sbr.rel (0) target = $region41
    $region40: #{convnet_forward.1} parent=1 // pred_region
      _
    $region41: #{convnet_forward.1} parent=1 // pred_fallthru
      _
    %v37 = vld [vmem:[%s3] sm:$0x3]
    %v38 = vld [vmem:[%s5] sm:$0x3]
    %v39 = vld [vmem:[%s7] sm:$0x1]
    %v40 = vld [vmem:[%s9] sm:$0x1]
    %v41 = vld [vmem:[%s0] sm:$0xf]
    %v42 = vld [vmem:[%s0 + $0x4] sm:$0x1]
    %v43 = vld [vmem:[%s1] sm:$0xf]
    %v44 = vld [vmem:[%s2] sm:$0xff]
    %v45 = vld [vmem:[%s2 + $0x8] sm:$0xff]
    %v46 = vld [vmem:[%s2 + $0x10] sm:$0xff]
    %v47 = vld [vmem:[%s2 + $0x18] sm:$0xff]
    %v48 = vld [vmem:[%s2 + $0x20] sm:$0xff]
    %v49 = vld [vmem:[%s2 + $0x28] sm:$0xff]
    %v50 = vld [vmem:[%s2 + $0x30] sm:$0xff]
    %v51 = vld [vmem:[%s2 + $0x38] sm:$0xff]
    %v52 = vld [vmem:[%s2 + $0x40] sm:$0x33]
    %s53 = scalar_lea.vmem %s2, 72
    %v54 = vld [vmem:[%s53] sm:$0xff]
    %v55 = vld [vmem:[%s53 + $0x8] sm:$0xff]
    %v56 = vld [vmem:[%s53 + $0x10] sm:$0xff]
    %v57 = vld [vmem:[%s53 + $0x18] sm:$0xff]
    %v58 = vld [vmem:[%s53 + $0x20] sm:$0xff]
    %v59 = vld [vmem:[%s53 + $0x28] sm:$0xff]
    %v60 = vld [vmem:[%s53 + $0x30] sm:$0xff]
    %v61 = vld [vmem:[%s53 + $0x38] sm:$0xff]
    %v62 = vld [vmem:[%s53 + $0x40] sm:$0x33]
    %v72 = vunpack.c.l.b16 %v54
    %v73 = vunpack.c.h.b16 %v54
    %v74 = vunpack.c.l.b16 %v55
    %v75 = vunpack.c.h.b16 %v55
    %v76 = vunpack.c.l.b16 %v56
    %v77 = vunpack.c.h.b16 %v56
    %v78 = vunpack.c.l.b16 %v57
    %v79 = vunpack.c.h.b16 %v57
    %v80 = vunpack.c.l.b16 %v58
    %v81 = vunpack.c.h.b16 %v58
    %v82 = vunpack.c.l.b16 %v59
    %v83 = vunpack.c.h.b16 %v59
    %v84 = vunpack.c.l.b16 %v60
    %v85 = vunpack.c.h.b16 %v60
    %v86 = vunpack.c.l.b16 %v61
    %v87 = vunpack.c.h.b16 %v61
    %v88 = vunpack.c.l.b16 %v62
    %v89 = vunpack.c.h.b16 %v62
    %v90 = vpack.c.b16 %v74, %v72
    %v91 = vpack.c.b16 %v75, %v73
    %v92 = vpack.c.b16 %v78, %v76
    %v93 = vpack.c.b16 %v79, %v77
    %v94 = vpack.c.b16 %v82, %v80
    %v95 = vpack.c.b16 %v83, %v81
    %v96 = vpack.c.b16 %v86, %v84
    %v97 = vpack.c.b16 %v87, %v85
    %v98 = vpack.c.b16 %v88, %v88
    %v99 = vpack.c.b16 %v89, %v89
    %vm108 = vcmask 556032
    %v110 = vsel %vm108, %v43, 0
    %vm112 = vcmask 1041408
    %v114 = vsel %vm112, %v98, 0
    %v117 = vsel %vm112, %v99, 0
    %119 = vmatpush.bf16.msra.mxu0 0
    %120 = vmatpush.bf16.msra.mxu0 0
    %121 = vmatpush.bf16.msra.mxu0 0
    %122 = vmatpush.bf16.msra.mxu0 %v114
    %123 = vmatpush.bf16.msra.mxu0 %v96
    %124 = vmatpush.bf16.msra.mxu0 %v94
    %125 = vmatpush.bf16.msra.mxu0 %v92
    %126 = vmatpush.bf16.msra.mxu0 %v90
    %127 = vmatmul.bf16.gmra.mxu0 %v110
    %v128 = vpop.f32.mrf.mxu0
    %v129 = vadd.f32 0.0, %v128
    %v130 = vpop.f32.mrf.mxu0
    %131 = vdwg.mxu0
    %132 = vmatpush.bf16.msra.mxu0 0
    %133 = vmatpush.bf16.msra.mxu0 0
    %134 = vmatpush.bf16.msra.mxu0 0
    %135 = vmatpush.bf16.msra.mxu0 %v117
    %136 = vmatpush.bf16.msra.mxu0 %v97
    %137 = vmatpush.bf16.msra.mxu0 %v95
    %138 = vmatpush.bf16.msra.mxu0 %v93
    %139 = vmatpush.bf16.msra.mxu0 %v91
    %140 = vmatmul.bf16.gmra.mxu0 %v110
    %v141 = vpop.f32.mrf.mxu0
    %v142 = vadd.f32 0.0, %v141
    %v143 = vpop.f32.mrf.mxu0
    %144 = vdwg.mxu0
    %v154 = vunpack.c.l.b16 %v44
    %v155 = vunpack.c.h.b16 %v44
    %v156 = vunpack.c.l.b16 %v45
    %v157 = vunpack.c.h.b16 %v45
    %v158 = vunpack.c.l.b16 %v46
    %v159 = vunpack.c.h.b16 %v46
    %v160 = vunpack.c.l.b16 %v47
    %v161 = vunpack.c.h.b16 %v47
    %v162 = vunpack.c.l.b16 %v48
    %v163 = vunpack.c.h.b16 %v48
    %v164 = vunpack.c.l.b16 %v49
    %v165 = vunpack.c.h.b16 %v49
    %v166 = vunpack.c.l.b16 %v50
    %v167 = vunpack.c.h.b16 %v50
    %v168 = vunpack.c.l.b16 %v51
    %v169 = vunpack.c.h.b16 %v51
    %v170 = vunpack.c.l.b16 %v52
    %v171 = vunpack.c.h.b16 %v52
    %v172 = vpack.c.b16 %v156, %v154
    %v173 = vpack.c.b16 %v157, %v155
    %v174 = vpack.c.b16 %v160, %v158
    %v175 = vpack.c.b16 %v161, %v159
    %v176 = vpack.c.b16 %v164, %v162
    %v177 = vpack.c.b16 %v165, %v163
    %v178 = vpack.c.b16 %v168, %v166
    %v179 = vpack.c.b16 %v169, %v167
    %v180 = vpack.c.b16 %v170, %v170
    %v181 = vpack.c.b16 %v171, %v171
    %v191 = vsel %vm108, %v41, 0
    %v194 = vsel %vm112, %v180, 0
    %v197 = vsel %vm112, %v181, 0
    %199 = vmatpush.bf16.msra.mxu0 0
    %200 = vmatpush.bf16.msra.mxu0 0
    %201 = vmatpush.bf16.msra.mxu0 0
    %202 = vmatpush.bf16.msra.mxu0 %v194
    %203 = vmatpush.bf16.msra.mxu0 %v178
    %204 = vmatpush.bf16.msra.mxu0 %v176
    %205 = vmatpush.bf16.msra.mxu0 %v174
    %206 = vmatpush.bf16.msra.mxu0 %v172
    %207 = vmatmul.bf16.gmra.mxu0 %v191
    %v208 = vpop.f32.mrf.mxu0
    %v209 = vadd.f32 %v129, %v208
    %v210 = vpop.f32.mrf.mxu0
    %211 = vdwg.mxu0
    %212 = vmatpush.bf16.msra.mxu0 0
    %213 = vmatpush.bf16.msra.mxu0 0
    %214 = vmatpush.bf16.msra.mxu0 0
    %215 = vmatpush.bf16.msra.mxu0 %v197
    %216 = vmatpush.bf16.msra.mxu0 %v179
    %217 = vmatpush.bf16.msra.mxu0 %v177
    %218 = vmatpush.bf16.msra.mxu0 %v175
    %219 = vmatpush.bf16.msra.mxu0 %v173
    %220 = vmatmul.bf16.gmra.mxu0 %v191
    %v221 = vpop.f32.mrf.mxu0
    %v222 = vadd.f32 %v142, %v221
    %v223 = vpop.f32.mrf.mxu0
    %224 = vdwg.mxu0
    %v226 = vunpack.c.l.b16 %v41
    %v227 = vpack.c.b16 %v226, %v226
    %v229 = vshrl.u32 %v227, 16
    %v231 = vshll.u32 %v227, 16
    %v233 = vrot.slane %v231, 1
    %v234 = vor.u32 %v229, %v233
    %v236 = vsel %vm108, %v234, 0
    %238 = vmatpush.bf16.msra.mxu0 0
    %239 = vmatpush.bf16.msra.mxu0 0
    %240 = vmatpush.bf16.msra.mxu0 0
    %241 = vmatpush.bf16.msra.mxu0 %v114
    %242 = vmatpush.bf16.msra.mxu0 %v96
    %243 = vmatpush.bf16.msra.mxu0 %v94
    %244 = vmatpush.bf16.msra.mxu0 %v92
    %245 = vmatpush.bf16.msra.mxu0 %v90
    %246 = vmatmul.bf16.gmra.mxu0 %v236
    %v247 = vpop.f32.mrf.mxu0
    %v248 = vadd.f32 0.0, %v247
    %v249 = vpop.f32.mrf.mxu0
    %250 = vdwg.mxu0
    %251 = vmatpush.bf16.msra.mxu0 0
    %252 = vmatpush.bf16.msra.mxu0 0
    %253 = vmatpush.bf16.msra.mxu0 0
    %254 = vmatpush.bf16.msra.mxu0 %v117
    %255 = vmatpush.bf16.msra.mxu0 %v97
    %256 = vmatpush.bf16.msra.mxu0 %v95
    %257 = vmatpush.bf16.msra.mxu0 %v93
    %258 = vmatpush.bf16.msra.mxu0 %v91
    %259 = vmatmul.bf16.gmra.mxu0 %v236
    %v260 = vpop.f32.mrf.mxu0
    %v261 = vadd.f32 0.0, %v260
    %v262 = vpop.f32.mrf.mxu0
    %263 = vdwg.mxu0
    %264 = vmatpush.bf16.msra.mxu0 0
    %265 = vmatpush.bf16.msra.mxu0 0
    %266 = vmatpush.bf16.msra.mxu0 0
    %267 = vmatpush.bf16.msra.mxu0 %v194
    %268 = vmatpush.bf16.msra.mxu0 %v178
    %269 = vmatpush.bf16.msra.mxu0 %v176
    %270 = vmatpush.bf16.msra.mxu0 %v174
    %271 = vmatpush.bf16.msra.mxu0 %v172
    %272 = vmatmul.bf16.gmra.mxu0 %v110
    %v273 = vpop.f32.mrf.mxu0
    %v274 = vadd.f32 %v248, %v273
    %v275 = vpop.f32.mrf.mxu0
    %276 = vdwg.mxu0
    %277 = vmatpush.bf16.msra.mxu0 0
    %278 = vmatpush.bf16.msra.mxu0 0
    %279 = vmatpush.bf16.msra.mxu0 0
    %280 = vmatpush.bf16.msra.mxu0 %v197
    %281 = vmatpush.bf16.msra.mxu0 %v179
    %282 = vmatpush.bf16.msra.mxu0 %v177
    %283 = vmatpush.bf16.msra.mxu0 %v175
    %284 = vmatpush.bf16.msra.mxu0 %v173
    %285 = vmatmul.bf16.gmra.mxu0 %v110
    %v286 = vpop.f32.mrf.mxu0
    %v287 = vadd.f32 %v261, %v286
    %v288 = vpop.f32.mrf.mxu0
    %289 = vdwg.mxu0
    %s290 = scalar_lea.vmem %s2, 144
    %v291 = vld [vmem:[%s290] sm:$0xff]
    %v292 = vld [vmem:[%s290 + $0x8] sm:$0xff]
    %v293 = vld [vmem:[%s290 + $0x10] sm:$0xff]
    %v294 = vld [vmem:[%s290 + $0x18] sm:$0xff]
    %v295 = vld [vmem:[%s290 + $0x20] sm:$0xff]
    %v296 = vld [vmem:[%s290 + $0x28] sm:$0xff]
    %v297 = vld [vmem:[%s290 + $0x30] sm:$0xff]
    %v298 = vld [vmem:[%s290 + $0x38] sm:$0xff]
    %v299 = vld [vmem:[%s290 + $0x40] sm:$0x33]
    %s300 = scalar_lea.vmem %s2, 216
    %v301 = vld [vmem:[%s300] sm:$0xff]
    %v302 = vld [vmem:[%s300 + $0x8] sm:$0xff]
    %v303 = vld [vmem:[%s300 + $0x10] sm:$0xff]
    %v304 = vld [vmem:[%s300 + $0x18] sm:$0xff]
    %v305 = vld [vmem:[%s300 + $0x20] sm:$0xff]
    %v306 = vld [vmem:[%s300 + $0x28] sm:$0xff]
    %v307 = vld [vmem:[%s300 + $0x30] sm:$0xff]
    %v308 = vld [vmem:[%s300 + $0x38] sm:$0xff]
    %v309 = vld [vmem:[%s300 + $0x40] sm:$0x33]
    %v319 = vunpack.c.l.b16 %v291
    %v320 = vunpack.c.h.b16 %v291
    %v321 = vunpack.c.l.b16 %v292
    %v322 = vunpack.c.h.b16 %v292
    %v323 = vunpack.c.l.b16 %v293
    %v324 = vunpack.c.h.b16 %v293
    %v325 = vunpack.c.l.b16 %v294
    %v326 = vunpack.c.h.b16 %v294
    %v327 = vunpack.c.l.b16 %v295
    %v328 = vunpack.c.h.b16 %v295
    %v329 = vunpack.c.l.b16 %v296
    %v330 = vunpack.c.h.b16 %v296
    %v331 = vunpack.c.l.b16 %v297
    %v332 = vunpack.c.h.b16 %v297
    %v333 = vunpack.c.l.b16 %v298
    %v334 = vunpack.c.h.b16 %v298
    %v335 = vunpack.c.l.b16 %v299
    %v336 = vunpack.c.h.b16 %v299
    %v337 = vpack.c.b16 %v321, %v319
    %v338 = vpack.c.b16 %v322, %v320
    %v339 = vpack.c.b16 %v325, %v323
    %v340 = vpack.c.b16 %v326, %v324
    %v341 = vpack.c.b16 %v329, %v327
    %v342 = vpack.c.b16 %v330, %v328
    %v343 = vpack.c.b16 %v333, %v331
    %v344 = vpack.c.b16 %v334, %v332
    %v345 = vpack.c.b16 %v335, %v335
    %v346 = vpack.c.b16 %v336, %v336
    %v356 = vsel %vm112, %v345, 0
    %v359 = vsel %vm112, %v346, 0
    %361 = vmatpush.bf16.msra.mxu0 0
    %362 = vmatpush.bf16.msra.mxu0 0
    %363 = vmatpush.bf16.msra.mxu0 0
    %364 = vmatpush.bf16.msra.mxu0 %v356
    %365 = vmatpush.bf16.msra.mxu0 %v343
    %366 = vmatpush.bf16.msra.mxu0 %v341
    %367 = vmatpush.bf16.msra.mxu0 %v339
    %368 = vmatpush.bf16.msra.mxu0 %v337
    %369 = vmatmul.bf16.gmra.mxu0 %v236
    %v370 = vpop.f32.mrf.mxu0
    %v371 = vadd.f32 0.0, %v370
    %v372 = vpop.f32.mrf.mxu0
    %373 = vdwg.mxu0
    %374 = vmatpush.bf16.msra.mxu0 0
    %375 = vmatpush.bf16.msra.mxu0 0
    %376 = vmatpush.bf16.msra.mxu0 0
    %377 = vmatpush.bf16.msra.mxu0 %v359
    %378 = vmatpush.bf16.msra.mxu0 %v344
    %379 = vmatpush.bf16.msra.mxu0 %v342
    %380 = vmatpush.bf16.msra.mxu0 %v340
    %381 = vmatpush.bf16.msra.mxu0 %v338
    %382 = vmatmul.bf16.gmra.mxu0 %v236
    %v383 = vpop.f32.mrf.mxu0
    %v384 = vadd.f32 0.0, %v383
    %v385 = vpop.f32.mrf.mxu0
    %386 = vdwg.mxu0
    %v387 = vadd.f32 %v209, %v371
    %v388 = vadd.f32 %v222, %v384
    %v390 = vunpack.c.l.b16 %v43
    %v391 = vpack.c.b16 %v390, %v390
    %v393 = vshrl.u32 %v391, 16
    %v395 = vshll.u32 %v391, 16
    %v397 = vrot.slane %v395, 1
    %v398 = vor.u32 %v393, %v397
    %v400 = vsel %vm108, %v398, 0
    %402 = vmatpush.bf16.msra.mxu0 0
    %403 = vmatpush.bf16.msra.mxu0 0
    %404 = vmatpush.bf16.msra.mxu0 0
    %405 = vmatpush.bf16.msra.mxu0 %v356
    %406 = vmatpush.bf16.msra.mxu0 %v343
    %407 = vmatpush.bf16.msra.mxu0 %v341
    %408 = vmatpush.bf16.msra.mxu0 %v339
    %409 = vmatpush.bf16.msra.mxu0 %v337
    %410 = vmatmul.bf16.gmra.mxu0 %v400
    %v411 = vpop.f32.mrf.mxu0
    %v412 = vadd.f32 0.0, %v411
    %v413 = vpop.f32.mrf.mxu0
    %414 = vdwg.mxu0
    %415 = vmatpush.bf16.msra.mxu0 0
    %416 = vmatpush.bf16.msra.mxu0 0
    %417 = vmatpush.bf16.msra.mxu0 0
    %418 = vmatpush.bf16.msra.mxu0 %v359
    %419 = vmatpush.bf16.msra.mxu0 %v344
    %420 = vmatpush.bf16.msra.mxu0 %v342
    %421 = vmatpush.bf16.msra.mxu0 %v340
    %422 = vmatpush.bf16.msra.mxu0 %v338
    %423 = vmatmul.bf16.gmra.mxu0 %v400
    %v424 = vpop.f32.mrf.mxu0
    %v425 = vadd.f32 0.0, %v424
    %v426 = vpop.f32.mrf.mxu0
    %427 = vdwg.mxu0
    %v428 = vadd.f32 %v274, %v412
    %v429 = vadd.f32 %v287, %v425
    %v439 = vunpack.c.l.b16 %v301
    %v440 = vunpack.c.h.b16 %v301
    %v441 = vunpack.c.l.b16 %v302
    %v442 = vunpack.c.h.b16 %v302
    %v443 = vunpack.c.l.b16 %v303
    %v444 = vunpack.c.h.b16 %v303
    %v445 = vunpack.c.l.b16 %v304
    %v446 = vunpack.c.h.b16 %v304
    %v447 = vunpack.c.l.b16 %v305
    %v448 = vunpack.c.h.b16 %v305
    %v449 = vunpack.c.l.b16 %v306
    %v450 = vunpack.c.h.b16 %v306
    %v451 = vunpack.c.l.b16 %v307
    %v452 = vunpack.c.h.b16 %v307
    %v453 = vunpack.c.l.b16 %v308
    %v454 = vunpack.c.h.b16 %v308
    %v455 = vunpack.c.l.b16 %v309
    %v456 = vunpack.c.h.b16 %v309
    %v457 = vpack.c.b16 %v441, %v439
    %v458 = vpack.c.b16 %v442, %v440
    %v459 = vpack.c.b16 %v445, %v443
    %v460 = vpack.c.b16 %v446, %v444
    %v461 = vpack.c.b16 %v449, %v447
    %v462 = vpack.c.b16 %v450, %v448
    %v463 = vpack.c.b16 %v453, %v451
    %v464 = vpack.c.b16 %v454, %v452
    %v465 = vpack.c.b16 %v455, %v455
    %v466 = vpack.c.b16 %v456, %v456
    %v476 = vsel %vm112, %v465, 0
    %v479 = vsel %vm112, %v466, 0
    %481 = vmatpush.bf16.msra.mxu0 0
    %482 = vmatpush.bf16.msra.mxu0 0
    %483 = vmatpush.bf16.msra.mxu0 0
    %484 = vmatpush.bf16.msra.mxu0 %v476
    %485 = vmatpush.bf16.msra.mxu0 %v463
    %486 = vmatpush.bf16.msra.mxu0 %v461
    %487 = vmatpush.bf16.msra.mxu0 %v459
    %488 = vmatpush.bf16.msra.mxu0 %v457
    %489 = vmatmul.bf16.gmra.mxu0 %v400
    %v490 = vpop.f32.mrf.mxu0
    %v491 = vadd.f32 0.0, %v490
    %v492 = vpop.f32.mrf.mxu0
    %493 = vdwg.mxu0
    %494 = vmatpush.bf16.msra.mxu0 0
    %495 = vmatpush.bf16.msra.mxu0 0
    %496 = vmatpush.bf16.msra.mxu0 0
    %497 = vmatpush.bf16.msra.mxu0 %v479
    %498 = vmatpush.bf16.msra.mxu0 %v464
    %499 = vmatpush.bf16.msra.mxu0 %v462
    %500 = vmatpush.bf16.msra.mxu0 %v460
    %501 = vmatpush.bf16.msra.mxu0 %v458
    %502 = vmatmul.bf16.gmra.mxu0 %v400
    %v503 = vpop.f32.mrf.mxu0
    %v504 = vadd.f32 0.0, %v503
    %v505 = vpop.f32.mrf.mxu0
    %506 = vdwg.mxu0
    %v507 = vadd.f32 %v387, %v491
    %v508 = vadd.f32 %v388, %v504
    %v510 = vunpack.c.l.b16 %v42
    %v511 = vpack.c.b16 %v510, %v226
    %v512 = vrot.slane %v511, 1
    %v514 = vsel %vm108, %v512, 0
    %516 = vmatpush.bf16.msra.mxu0 0
    %517 = vmatpush.bf16.msra.mxu0 0
    %518 = vmatpush.bf16.msra.mxu0 0
    %519 = vmatpush.bf16.msra.mxu0 %v476
    %520 = vmatpush.bf16.msra.mxu0 %v463
    %521 = vmatpush.bf16.msra.mxu0 %v461
    %522 = vmatpush.bf16.msra.mxu0 %v459
    %523 = vmatpush.bf16.msra.mxu0 %v457
    %524 = vmatmul.bf16.gmra.mxu0 %v514
    %v525 = vpop.f32.mrf.mxu0
    %v526 = vadd.f32 0.0, %v525
    %v527 = vpop.f32.mrf.mxu0
    %528 = vdwg.mxu0
    %529 = vmatpush.bf16.msra.mxu0 0
    %530 = vmatpush.bf16.msra.mxu0 0
    %531 = vmatpush.bf16.msra.mxu0 0
    %532 = vmatpush.bf16.msra.mxu0 %v479
    %533 = vmatpush.bf16.msra.mxu0 %v464
    %534 = vmatpush.bf16.msra.mxu0 %v462
    %535 = vmatpush.bf16.msra.mxu0 %v460
    %536 = vmatpush.bf16.msra.mxu0 %v458
    %537 = vmatmul.bf16.gmra.mxu0 %v514
    %v538 = vpop.f32.mrf.mxu0
    %v539 = vadd.f32 0.0, %v538
    %v540 = vpop.f32.mrf.mxu0
    %541 = vdwg.mxu0
    %v542 = vadd.f32 %v428, %v526
    %v543 = vadd.f32 %v429, %v539
    %v545 = vperm.slane %v37, 0
    %v546 = vperm.slane %v37, 1
    %v549 = vadd.f32 %v507, %v545
    %v550 = vadd.f32 %v508, %v546
    %v551 = vmax.f32 %v549, 0.0
    %v552 = vmax.f32 %v550, 0.0
    %v553 = vadd.f32 %v542, %v545
    %v554 = vadd.f32 %v543, %v546
    %v555 = vmax.f32 %v553, 0.0
    %v556 = vmax.f32 %v554, 0.0
    %559 = vrot.lane.b32.xlu0 %v551, 112
    %v560 = vpop.permute.xlu0 %559
    %561 = vrot.lane.b32.xlu0 %v552, 112
    %v562 = vpop.permute.xlu0 %561
    %vm563 = vcmask 916480
    %v564 = vsel %vm563, %v560, %v562
    %v567 = vmax.f32 %v551, %v564
    %v568 = vmax.f32 %v552, %v562
    %571 = vrot.lane.b32.xlu0 %v555, 112
    %v572 = vpop.permute.xlu0 %571
    %573 = vrot.lane.b32.xlu0 %v556, 112
    %v574 = vpop.permute.xlu0 %573
    %v575 = vsel %vm563, %v572, %v574
    %v578 = vmax.f32 %v555, %v575
    %v579 = vmax.f32 %v556, %v574
    %v580 = vmax.f32 %v567, %v578
    %v581 = vmax.f32 %v568, %v579
    %v582 = vpack.c.bf16 %v581, %v580
    %v585 = vrot.slane %v567, 1
    %v586 = vrot.slane %v568, 1
    %v589 = vmax.f32 %v578, %v585
    %v590 = vmax.f32 %v579, %v586
    %v591 = vpack.c.bf16 %v590, %v589
    %v592 = vld [vmem:[%s4] sm:$0xff]
    %v593 = vld [vmem:[%s4 + $0x8] sm:$0xff]
    %v594 = vld [vmem:[%s4 + $0x10] sm:$0xff]
    %v595 = vld [vmem:[%s4 + $0x18] sm:$0xff]
    %v596 = vld [vmem:[%s4 + $0x20] sm:$0xff]
    %v597 = vld [vmem:[%s4 + $0x28] sm:$0xff]
    %v598 = vld [vmem:[%s4 + $0x30] sm:$0xff]
    %v599 = vld [vmem:[%s4 + $0x38] sm:$0xff]
    %v600 = vld [vmem:[%s4 + $0x40] sm:$0xff]
    %v601 = vld [vmem:[%s4 + $0x48] sm:$0xff]
    %v602 = vld [vmem:[%s4 + $0x50] sm:$0xff]
    %v603 = vld [vmem:[%s4 + $0x58] sm:$0xff]
    %v604 = vld [vmem:[%s4 + $0x60] sm:$0xff]
    %v605 = vld [vmem:[%s4 + $0x68] sm:$0xff]
    %v606 = vld [vmem:[%s4 + $0x70] sm:$0xff]
    %v607 = vld [vmem:[%s4 + $0x78] sm:$0xff]
    %v608 = vld [vmem:[%s4 + $0x80] sm:$0xff]
    %v609 = vld [vmem:[%s4 + $0x88] sm:$0xff]
    %v610 = vld [vmem:[%s4 + $0x90] sm:$0xff]
    %v611 = vld [vmem:[%s4 + $0x98] sm:$0xff]
    %v612 = vld [vmem:[%s4 + $0xa0] sm:$0xff]
    %v613 = vld [vmem:[%s4 + $0xa8] sm:$0xff]
    %v614 = vld [vmem:[%s4 + $0xb0] sm:$0xff]
    %v615 = vld [vmem:[%s4 + $0xb8] sm:$0xff]
    %v616 = vld [vmem:[%s4 + $0xc0] sm:$0xff]
    %v617 = vld [vmem:[%s4 + $0xc8] sm:$0xff]
    %s618 = scalar_lea.vmem %s4, 208
    %v619 = vld [vmem:[%s618] sm:$0xff]
    %v620 = vld [vmem:[%s618 + $0x8] sm:$0xff]
    %v621 = vld [vmem:[%s618 + $0x10] sm:$0xff]
    %v622 = vld [vmem:[%s618 + $0x18] sm:$0xff]
    %v623 = vld [vmem:[%s618 + $0x20] sm:$0xff]
    %v624 = vld [vmem:[%s618 + $0x28] sm:$0xff]
    %v625 = vld [vmem:[%s618 + $0x30] sm:$0xff]
    %v626 = vld [vmem:[%s618 + $0x38] sm:$0xff]
    %v627 = vld [vmem:[%s618 + $0x40] sm:$0xff]
    %v628 = vld [vmem:[%s618 + $0x48] sm:$0xff]
    %v629 = vld [vmem:[%s618 + $0x50] sm:$0xff]
    %v630 = vld [vmem:[%s618 + $0x58] sm:$0xff]
    %v631 = vld [vmem:[%s618 + $0x60] sm:$0xff]
    %v632 = vld [vmem:[%s618 + $0x68] sm:$0xff]
    %v633 = vld [vmem:[%s618 + $0x70] sm:$0xff]
    %v634 = vld [vmem:[%s618 + $0x78] sm:$0xff]
    %v635 = vld [vmem:[%s618 + $0x80] sm:$0xff]
    %v636 = vld [vmem:[%s618 + $0x88] sm:$0xff]
    %v637 = vld [vmem:[%s618 + $0x90] sm:$0xff]
    %v638 = vld [vmem:[%s618 + $0x98] sm:$0xff]
    %v639 = vld [vmem:[%s618 + $0xa0] sm:$0xff]
    %v640 = vld [vmem:[%s618 + $0xa8] sm:$0xff]
    %v641 = vld [vmem:[%s618 + $0xb0] sm:$0xff]
    %v642 = vld [vmem:[%s618 + $0xb8] sm:$0xff]
    %v643 = vld [vmem:[%s618 + $0xc0] sm:$0xff]
    %v644 = vld [vmem:[%s618 + $0xc8] sm:$0xff]
    %v646 = vunpack.c.l.b16 %v591
    %v647 = vunpack.c.h.b16 %v591
    %v648 = vpack.c.b16 %v646, %v646
    %v649 = vpack.c.b16 %v647, %v647
    %v677 = vunpack.c.l.b16 %v619
    %v678 = vunpack.c.h.b16 %v619
    %v679 = vunpack.c.l.b16 %v620
    %v680 = vunpack.c.h.b16 %v620
    %v681 = vunpack.c.l.b16 %v621
    %v682 = vunpack.c.h.b16 %v621
    %v683 = vunpack.c.l.b16 %v622
    %v684 = vunpack.c.h.b16 %v622
    %v685 = vunpack.c.l.b16 %v623
    %v686 = vunpack.c.h.b16 %v623
    %v687 = vunpack.c.l.b16 %v624
    %v688 = vunpack.c.h.b16 %v624
    %v689 = vunpack.c.l.b16 %v625
    %v690 = vunpack.c.h.b16 %v625
    %v691 = vunpack.c.l.b16 %v626
    %v692 = vunpack.c.h.b16 %v626
    %v693 = vunpack.c.l.b16 %v627
    %v694 = vunpack.c.h.b16 %v627
    %v695 = vunpack.c.l.b16 %v628
    %v696 = vunpack.c.h.b16 %v628
    %v697 = vunpack.c.l.b16 %v629
    %v698 = vunpack.c.h.b16 %v629
    %v699 = vunpack.c.l.b16 %v630
    %v700 = vunpack.c.h.b16 %v630
    %v701 = vunpack.c.l.b16 %v631
    %v702 = vunpack.c.h.b16 %v631
    %v703 = vunpack.c.l.b16 %v632
    %v704 = vunpack.c.h.b16 %v632
    %v705 = vunpack.c.l.b16 %v633
    %v706 = vunpack.c.h.b16 %v633
    %v707 = vunpack.c.l.b16 %v634
    %v708 = vunpack.c.h.b16 %v634
    %v709 = vunpack.c.l.b16 %v635
    %v710 = vunpack.c.h.b16 %v635
    %v711 = vunpack.c.l.b16 %v636
    %v712 = vunpack.c.h.b16 %v636
    %v713 = vunpack.c.l.b16 %v637
    %v714 = vunpack.c.h.b16 %v637
    %v715 = vunpack.c.l.b16 %v638
    %v716 = vunpack.c.h.b16 %v638
    %v717 = vunpack.c.l.b16 %v639
    %v718 = vunpack.c.h.b16 %v639
    %v719 = vunpack.c.l.b16 %v640
    %v720 = vunpack.c.h.b16 %v640
    %v721 = vunpack.c.l.b16 %v641
    %v722 = vunpack.c.h.b16 %v641
    %v723 = vunpack.c.l.b16 %v642
    %v724 = vunpack.c.h.b16 %v642
    %v725 = vunpack.c.l.b16 %v643
    %v726 = vunpack.c.h.b16 %v643
    %v727 = vunpack.c.l.b16 %v644
    %v728 = vunpack.c.h.b16 %v644
    %v729 = vpack.c.b16 %v679, %v677
    %v730 = vpack.c.b16 %v680, %v678
    %v731 = vpack.c.b16 %v683, %v681
    %v732 = vpack.c.b16 %v684, %v682
    %v733 = vpack.c.b16 %v687, %v685
    %v734 = vpack.c.b16 %v688, %v686
    %v735 = vpack.c.b16 %v691, %v689
    %v736 = vpack.c.b16 %v692, %v690
    %v737 = vpack.c.b16 %v695, %v693
    %v738 = vpack.c.b16 %v696, %v694
    %v739 = vpack.c.b16 %v699, %v697
    %v740 = vpack.c.b16 %v700, %v698
    %v741 = vpack.c.b16 %v703, %v701
    %v742 = vpack.c.b16 %v704, %v702
    %v743 = vpack.c.b16 %v707, %v705
    %v744 = vpack.c.b16 %v708, %v706
    %v745 = vpack.c.b16 %v711, %v709
    %v746 = vpack.c.b16 %v712, %v710
    %v747 = vpack.c.b16 %v715, %v713
    %v748 = vpack.c.b16 %v716, %v714
    %v749 = vpack.c.b16 %v719, %v717
    %v750 = vpack.c.b16 %v720, %v718
    %v751 = vpack.c.b16 %v723, %v721
    %v752 = vpack.c.b16 %v724, %v722
    %v753 = vpack.c.b16 %v727, %v725
    %v754 = vpack.c.b16 %v728, %v726
    %vm781 = vcmask 654336
    %v783 = vsel %vm781, %v649, 0
    %785 = vmatpush.bf16.msra.mxu0 %v743
    %786 = vmatpush.bf16.msra.mxu0 %v741
    %787 = vmatpush.bf16.msra.mxu0 %v739
    %788 = vmatpush.bf16.msra.mxu0 %v737
    %789 = vmatpush.bf16.msra.mxu0 %v735
    %790 = vmatpush.bf16.msra.mxu0 %v733
    %791 = vmatpush.bf16.msra.mxu0 %v731
    %792 = vmatpush.bf16.msra.mxu0 %v729
    %793 = vmatmul.bf16.gmra.mxu0 %v648
    %v794 = vpop.f32.mrf.mxu0
    %v795 = vadd.f32 0.0, %v794
    %v796 = vpop.f32.mrf.mxu0
    %797 = vdwg.mxu0
    %798 = vmatpush.bf16.msra.mxu0 0
    %799 = vmatpush.bf16.msra.mxu0 0
    %800 = vmatpush.bf16.msra.mxu0 0
    %801 = vmatpush.bf16.msra.mxu0 %v753
    %802 = vmatpush.bf16.msra.mxu0 %v751
    %803 = vmatpush.bf16.msra.mxu0 %v749
    %804 = vmatpush.bf16.msra.mxu0 %v747
    %805 = vmatpush.bf16.msra.mxu0 %v745
    %806 = vmatmul.bf16.gmra.mxu0 %v783
    %v807 = vpop.f32.mrf.mxu0
    %v808 = vadd.f32 %v795, %v807
    %v809 = vpop.f32.mrf.mxu0
    %810 = vdwg.mxu0
    %811 = vmatpush.bf16.msra.mxu0 %v744
    %812 = vmatpush.bf16.msra.mxu0 %v742
    %813 = vmatpush.bf16.msra.mxu0 %v740
    %814 = vmatpush.bf16.msra.mxu0 %v738
    %815 = vmatpush.bf16.msra.mxu0 %v736
    %816 = vmatpush.bf16.msra.mxu0 %v734
    %817 = vmatpush.bf16.msra.mxu0 %v732
    %818 = vmatpush.bf16.msra.mxu0 %v730
    %819 = vmatmul.bf16.gmra.mxu0 %v648
    %v820 = vpop.f32.mrf.mxu0
    %v821 = vadd.f32 0.0, %v820
    %v822 = vpop.f32.mrf.mxu0
    %823 = vdwg.mxu0
    %824 = vmatpush.bf16.msra.mxu0 0
    %825 = vmatpush.bf16.msra.mxu0 0
    %826 = vmatpush.bf16.msra.mxu0 0
    %827 = vmatpush.bf16.msra.mxu0 %v754
    %828 = vmatpush.bf16.msra.mxu0 %v752
    %829 = vmatpush.bf16.msra.mxu0 %v750
    %830 = vmatpush.bf16.msra.mxu0 %v748
    %831 = vmatpush.bf16.msra.mxu0 %v746
    %832 = vmatmul.bf16.gmra.mxu0 %v783
    %v833 = vpop.f32.mrf.mxu0
    %v834 = vadd.f32 %v821, %v833
    %v835 = vpop.f32.mrf.mxu0
    %836 = vdwg.mxu0
    %v838 = vunpack.c.l.b16 %v582
    %v839 = vunpack.c.h.b16 %v582
    %v840 = vpack.c.b16 %v838, %v838
    %v841 = vpack.c.b16 %v839, %v839
    %v869 = vunpack.c.l.b16 %v592
    %v870 = vunpack.c.h.b16 %v592
    %v871 = vunpack.c.l.b16 %v593
    %v872 = vunpack.c.h.b16 %v593
    %v873 = vunpack.c.l.b16 %v594
    %v874 = vunpack.c.h.b16 %v594
    %v875 = vunpack.c.l.b16 %v595
    %v876 = vunpack.c.h.b16 %v595
    %v877 = vunpack.c.l.b16 %v596
    %v878 = vunpack.c.h.b16 %v596
    %v879 = vunpack.c.l.b16 %v597
    %v880 = vunpack.c.h.b16 %v597
    %v881 = vunpack.c.l.b16 %v598
    %v882 = vunpack.c.h.b16 %v598
    %v883 = vunpack.c.l.b16 %v599
    %v884 = vunpack.c.h.b16 %v599
    %v885 = vunpack.c.l.b16 %v600
    %v886 = vunpack.c.h.b16 %v600
    %v887 = vunpack.c.l.b16 %v601
    %v888 = vunpack.c.h.b16 %v601
    %v889 = vunpack.c.l.b16 %v602
    %v890 = vunpack.c.h.b16 %v602
    %v891 = vunpack.c.l.b16 %v603
    %v892 = vunpack.c.h.b16 %v603
    %v893 = vunpack.c.l.b16 %v604
    %v894 = vunpack.c.h.b16 %v604
    %v895 = vunpack.c.l.b16 %v605
    %v896 = vunpack.c.h.b16 %v605
    %v897 = vunpack.c.l.b16 %v606
    %v898 = vunpack.c.h.b16 %v606
    %v899 = vunpack.c.l.b16 %v607
    %v900 = vunpack.c.h.b16 %v607
    %v901 = vunpack.c.l.b16 %v608
    %v902 = vunpack.c.h.b16 %v608
    %v903 = vunpack.c.l.b16 %v609
    %v904 = vunpack.c.h.b16 %v609
    %v905 = vunpack.c.l.b16 %v610
    %v906 = vunpack.c.h.b16 %v610
    %v907 = vunpack.c.l.b16 %v611
    %v908 = vunpack.c.h.b16 %v611
    %v909 = vunpack.c.l.b16 %v612
    %v910 = vunpack.c.h.b16 %v612
    %v911 = vunpack.c.l.b16 %v613
    %v912 = vunpack.c.h.b16 %v613
    %v913 = vunpack.c.l.b16 %v614
    %v914 = vunpack.c.h.b16 %v614
    %v915 = vunpack.c.l.b16 %v615
    %v916 = vunpack.c.h.b16 %v615
    %v917 = vunpack.c.l.b16 %v616
    %v918 = vunpack.c.h.b16 %v616
    %v919 = vunpack.c.l.b16 %v617
    %v920 = vunpack.c.h.b16 %v617
    %v921 = vpack.c.b16 %v871, %v869
    %v922 = vpack.c.b16 %v872, %v870
    %v923 = vpack.c.b16 %v875, %v873
    %v924 = vpack.c.b16 %v876, %v874
    %v925 = vpack.c.b16 %v879, %v877
    %v926 = vpack.c.b16 %v880, %v878
    %v927 = vpack.c.b16 %v883, %v881
    %v928 = vpack.c.b16 %v884, %v882
    %v929 = vpack.c.b16 %v887, %v885
    %v930 = vpack.c.b16 %v888, %v886
    %v931 = vpack.c.b16 %v891, %v889
    %v932 = vpack.c.b16 %v892, %v890
    %v933 = vpack.c.b16 %v895, %v893
    %v934 = vpack.c.b16 %v896, %v894
    %v935 = vpack.c.b16 %v899, %v897
    %v936 = vpack.c.b16 %v900, %v898
    %v937 = vpack.c.b16 %v903, %v901
    %v938 = vpack.c.b16 %v904, %v902
    %v939 = vpack.c.b16 %v907, %v905
    %v940 = vpack.c.b16 %v908, %v906
    %v941 = vpack.c.b16 %v911, %v909
    %v942 = vpack.c.b16 %v912, %v910
    %v943 = vpack.c.b16 %v915, %v913
    %v944 = vpack.c.b16 %v916, %v914
    %v945 = vpack.c.b16 %v919, %v917
    %v946 = vpack.c.b16 %v920, %v918
    %v974 = vsel %vm781, %v841, 0
    %976 = vmatpush.bf16.msra.mxu0 %v935
    %977 = vmatpush.bf16.msra.mxu0 %v933
    %978 = vmatpush.bf16.msra.mxu0 %v931
    %979 = vmatpush.bf16.msra.mxu0 %v929
    %980 = vmatpush.bf16.msra.mxu0 %v927
    %981 = vmatpush.bf16.msra.mxu0 %v925
    %982 = vmatpush.bf16.msra.mxu0 %v923
    %983 = vmatpush.bf16.msra.mxu0 %v921
    %984 = vmatmul.bf16.gmra.mxu0 %v840
    %v985 = vpop.f32.mrf.mxu0
    %v986 = vadd.f32 %v808, %v985
    %v987 = vpop.f32.mrf.mxu0
    %988 = vdwg.mxu0
    %989 = vmatpush.bf16.msra.mxu0 0
    %990 = vmatpush.bf16.msra.mxu0 0
    %991 = vmatpush.bf16.msra.mxu0 0
    %992 = vmatpush.bf16.msra.mxu0 %v945
    %993 = vmatpush.bf16.msra.mxu0 %v943
    %994 = vmatpush.bf16.msra.mxu0 %v941
    %995 = vmatpush.bf16.msra.mxu0 %v939
    %996 = vmatpush.bf16.msra.mxu0 %v937
    %997 = vmatmul.bf16.gmra.mxu0 %v974
    %v998 = vpop.f32.mrf.mxu0
    %v999 = vadd.f32 %v986, %v998
    %v1000 = vpop.f32.mrf.mxu0
    %1001 = vdwg.mxu0
    %1002 = vmatpush.bf16.msra.mxu0 %v936
    %1003 = vmatpush.bf16.msra.mxu0 %v934
    %1004 = vmatpush.bf16.msra.mxu0 %v932
    %1005 = vmatpush.bf16.msra.mxu0 %v930
    %1006 = vmatpush.bf16.msra.mxu0 %v928
    %1007 = vmatpush.bf16.msra.mxu0 %v926
    %1008 = vmatpush.bf16.msra.mxu0 %v924
    %1009 = vmatpush.bf16.msra.mxu0 %v922
    %1010 = vmatmul.bf16.gmra.mxu0 %v840
    %v1011 = vpop.f32.mrf.mxu0
    %v1012 = vadd.f32 %v834, %v1011
    %v1013 = vpop.f32.mrf.mxu0
    %1014 = vdwg.mxu0
    %1015 = vmatpush.bf16.msra.mxu0 0
    %1016 = vmatpush.bf16.msra.mxu0 0
    %1017 = vmatpush.bf16.msra.mxu0 0
    %1018 = vmatpush.bf16.msra.mxu0 %v946
    %1019 = vmatpush.bf16.msra.mxu0 %v944
    %1020 = vmatpush.bf16.msra.mxu0 %v942
    %1021 = vmatpush.bf16.msra.mxu0 %v940
    %1022 = vmatpush.bf16.msra.mxu0 %v938
    %1023 = vmatmul.bf16.gmra.mxu0 %v974
    %v1024 = vpop.f32.mrf.mxu0
    %v1025 = vadd.f32 %v1012, %v1024
    %v1026 = vpop.f32.mrf.mxu0
    %1027 = vdwg.mxu0
    %s1028 = scalar_lea.vmem %s4, 416
    %v1029 = vld [vmem:[%s1028] sm:$0xff]
    %v1030 = vld [vmem:[%s1028 + $0x8] sm:$0xff]
    %v1031 = vld [vmem:[%s1028 + $0x10] sm:$0xff]
    %v1032 = vld [vmem:[%s1028 + $0x18] sm:$0xff]
    %v1033 = vld [vmem:[%s1028 + $0x20] sm:$0xff]
    %v1034 = vld [vmem:[%s1028 + $0x28] sm:$0xff]
    %v1035 = vld [vmem:[%s1028 + $0x30] sm:$0xff]
    %v1036 = vld [vmem:[%s1028 + $0x38] sm:$0xff]
    %v1037 = vld [vmem:[%s1028 + $0x40] sm:$0xff]
    %v1038 = vld [vmem:[%s1028 + $0x48] sm:$0xff]
    %v1039 = vld [vmem:[%s1028 + $0x50] sm:$0xff]
    %v1040 = vld [vmem:[%s1028 + $0x58] sm:$0xff]
    %v1041 = vld [vmem:[%s1028 + $0x60] sm:$0xff]
    %v1042 = vld [vmem:[%s1028 + $0x68] sm:$0xff]
    %v1043 = vld [vmem:[%s1028 + $0x70] sm:$0xff]
    %v1044 = vld [vmem:[%s1028 + $0x78] sm:$0xff]
    %v1045 = vld [vmem:[%s1028 + $0x80] sm:$0xff]
    %v1046 = vld [vmem:[%s1028 + $0x88] sm:$0xff]
    %v1047 = vld [vmem:[%s1028 + $0x90] sm:$0xff]
    %v1048 = vld [vmem:[%s1028 + $0x98] sm:$0xff]
    %v1049 = vld [vmem:[%s1028 + $0xa0] sm:$0xff]
    %v1050 = vld [vmem:[%s1028 + $0xa8] sm:$0xff]
    %v1051 = vld [vmem:[%s1028 + $0xb0] sm:$0xff]
    %v1052 = vld [vmem:[%s1028 + $0xb8] sm:$0xff]
    %v1053 = vld [vmem:[%s1028 + $0xc0] sm:$0xff]
    %v1054 = vld [vmem:[%s1028 + $0xc8] sm:$0xff]
    %v1056 = vshrl.u32 %v840, 16
    %v1058 = vshll.u32 %v840, 16
    %v1060 = vrot.slane %v1058, 1
    %v1061 = vor.u32 %v1056, %v1060
    %v1062 = vshrl.u32 %v841, 16
    %v1064 = vshll.u32 %v841, 16
    %v1066 = vrot.slane %v1064, 1
    %v1067 = vor.u32 %v1062, %v1066
    %v1095 = vunpack.c.l.b16 %v1029
    %v1096 = vunpack.c.h.b16 %v1029
    %v1097 = vunpack.c.l.b16 %v1030
    %v1098 = vunpack.c.h.b16 %v1030
    %v1099 = vunpack.c.l.b16 %v1031
    %v1100 = vunpack.c.h.b16 %v1031
    %v1101 = vunpack.c.l.b16 %v1032
    %v1102 = vunpack.c.h.b16 %v1032
    %v1103 = vunpack.c.l.b16 %v1033
    %v1104 = vunpack.c.h.b16 %v1033
    %v1105 = vunpack.c.l.b16 %v1034
    %v1106 = vunpack.c.h.b16 %v1034
    %v1107 = vunpack.c.l.b16 %v1035
    %v1108 = vunpack.c.h.b16 %v1035
    %v1109 = vunpack.c.l.b16 %v1036
    %v1110 = vunpack.c.h.b16 %v1036
    %v1111 = vunpack.c.l.b16 %v1037
    %v1112 = vunpack.c.h.b16 %v1037
    %v1113 = vunpack.c.l.b16 %v1038
    %v1114 = vunpack.c.h.b16 %v1038
    %v1115 = vunpack.c.l.b16 %v1039
    %v1116 = vunpack.c.h.b16 %v1039
    %v1117 = vunpack.c.l.b16 %v1040
    %v1118 = vunpack.c.h.b16 %v1040
    %v1119 = vunpack.c.l.b16 %v1041
    %v1120 = vunpack.c.h.b16 %v1041
    %v1121 = vunpack.c.l.b16 %v1042
    %v1122 = vunpack.c.h.b16 %v1042
    %v1123 = vunpack.c.l.b16 %v1043
    %v1124 = vunpack.c.h.b16 %v1043
    %v1125 = vunpack.c.l.b16 %v1044
    %v1126 = vunpack.c.h.b16 %v1044
    %v1127 = vunpack.c.l.b16 %v1045
    %v1128 = vunpack.c.h.b16 %v1045
    %v1129 = vunpack.c.l.b16 %v1046
    %v1130 = vunpack.c.h.b16 %v1046
    %v1131 = vunpack.c.l.b16 %v1047
    %v1132 = vunpack.c.h.b16 %v1047
    %v1133 = vunpack.c.l.b16 %v1048
    %v1134 = vunpack.c.h.b16 %v1048
    %v1135 = vunpack.c.l.b16 %v1049
    %v1136 = vunpack.c.h.b16 %v1049
    %v1137 = vunpack.c.l.b16 %v1050
    %v1138 = vunpack.c.h.b16 %v1050
    %v1139 = vunpack.c.l.b16 %v1051
    %v1140 = vunpack.c.h.b16 %v1051
    %v1141 = vunpack.c.l.b16 %v1052
    %v1142 = vunpack.c.h.b16 %v1052
    %v1143 = vunpack.c.l.b16 %v1053
    %v1144 = vunpack.c.h.b16 %v1053
    %v1145 = vunpack.c.l.b16 %v1054
    %v1146 = vunpack.c.h.b16 %v1054
    %v1147 = vpack.c.b16 %v1097, %v1095
    %v1148 = vpack.c.b16 %v1098, %v1096
    %v1149 = vpack.c.b16 %v1101, %v1099
    %v1150 = vpack.c.b16 %v1102, %v1100
    %v1151 = vpack.c.b16 %v1105, %v1103
    %v1152 = vpack.c.b16 %v1106, %v1104
    %v1153 = vpack.c.b16 %v1109, %v1107
    %v1154 = vpack.c.b16 %v1110, %v1108
    %v1155 = vpack.c.b16 %v1113, %v1111
    %v1156 = vpack.c.b16 %v1114, %v1112
    %v1157 = vpack.c.b16 %v1117, %v1115
    %v1158 = vpack.c.b16 %v1118, %v1116
    %v1159 = vpack.c.b16 %v1121, %v1119
    %v1160 = vpack.c.b16 %v1122, %v1120
    %v1161 = vpack.c.b16 %v1125, %v1123
    %v1162 = vpack.c.b16 %v1126, %v1124
    %v1163 = vpack.c.b16 %v1129, %v1127
    %v1164 = vpack.c.b16 %v1130, %v1128
    %v1165 = vpack.c.b16 %v1133, %v1131
    %v1166 = vpack.c.b16 %v1134, %v1132
    %v1167 = vpack.c.b16 %v1137, %v1135
    %v1168 = vpack.c.b16 %v1138, %v1136
    %v1169 = vpack.c.b16 %v1141, %v1139
    %v1170 = vpack.c.b16 %v1142, %v1140
    %v1171 = vpack.c.b16 %v1145, %v1143
    %v1172 = vpack.c.b16 %v1146, %v1144
    %v1200 = vsel %vm781, %v1067, 0
    %1202 = vmatpush.bf16.msra.mxu0 %v1161
    %1203 = vmatpush.bf16.msra.mxu0 %v1159
    %1204 = vmatpush.bf16.msra.mxu0 %v1157
    %1205 = vmatpush.bf16.msra.mxu0 %v1155
    %1206 = vmatpush.bf16.msra.mxu0 %v1153
    %1207 = vmatpush.bf16.msra.mxu0 %v1151
    %1208 = vmatpush.bf16.msra.mxu0 %v1149
    %1209 = vmatpush.bf16.msra.mxu0 %v1147
    %1210 = vmatmul.bf16.gmra.mxu0 %v1061
    %v1211 = vpop.f32.mrf.mxu0
    %v1212 = vadd.f32 0.0, %v1211
    %v1213 = vpop.f32.mrf.mxu0
    %1214 = vdwg.mxu0
    %1215 = vmatpush.bf16.msra.mxu0 0
    %1216 = vmatpush.bf16.msra.mxu0 0
    %1217 = vmatpush.bf16.msra.mxu0 0
    %1218 = vmatpush.bf16.msra.mxu0 %v1171
    %1219 = vmatpush.bf16.msra.mxu0 %v1169
    %1220 = vmatpush.bf16.msra.mxu0 %v1167
    %1221 = vmatpush.bf16.msra.mxu0 %v1165
    %1222 = vmatpush.bf16.msra.mxu0 %v1163
    %1223 = vmatmul.bf16.gmra.mxu0 %v1200
    %v1224 = vpop.f32.mrf.mxu0
    %v1225 = vadd.f32 %v1212, %v1224
    %v1226 = vpop.f32.mrf.mxu0
    %1227 = vdwg.mxu0
    %1228 = vmatpush.bf16.msra.mxu0 %v1162
    %1229 = vmatpush.bf16.msra.mxu0 %v1160
    %1230 = vmatpush.bf16.msra.mxu0 %v1158
    %1231 = vmatpush.bf16.msra.mxu0 %v1156
    %1232 = vmatpush.bf16.msra.mxu0 %v1154
    %1233 = vmatpush.bf16.msra.mxu0 %v1152
    %1234 = vmatpush.bf16.msra.mxu0 %v1150
    %1235 = vmatpush.bf16.msra.mxu0 %v1148
    %1236 = vmatmul.bf16.gmra.mxu0 %v1061
    %v1237 = vpop.f32.mrf.mxu0
    %v1238 = vadd.f32 0.0, %v1237
    %v1239 = vpop.f32.mrf.mxu0
    %1240 = vdwg.mxu0
    %1241 = vmatpush.bf16.msra.mxu0 0
    %1242 = vmatpush.bf16.msra.mxu0 0
    %1243 = vmatpush.bf16.msra.mxu0 0
    %1244 = vmatpush.bf16.msra.mxu0 %v1172
    %1245 = vmatpush.bf16.msra.mxu0 %v1170
    %1246 = vmatpush.bf16.msra.mxu0 %v1168
    %1247 = vmatpush.bf16.msra.mxu0 %v1166
    %1248 = vmatpush.bf16.msra.mxu0 %v1164
    %1249 = vmatmul.bf16.gmra.mxu0 %v1200
    %v1250 = vpop.f32.mrf.mxu0
    %v1251 = vadd.f32 %v1238, %v1250
    %v1252 = vpop.f32.mrf.mxu0
    %1253 = vdwg.mxu0
    %v1254 = vadd.f32 %v999, %v1225
    %v1255 = vadd.f32 %v1025, %v1251
    %s1256 = scalar_lea.vmem %s4, 624
    %v1257 = vld [vmem:[%s1256] sm:$0xff]
    %v1258 = vld [vmem:[%s1256 + $0x8] sm:$0xff]
    %v1259 = vld [vmem:[%s1256 + $0x10] sm:$0xff]
    %v1260 = vld [vmem:[%s1256 + $0x18] sm:$0xff]
    %v1261 = vld [vmem:[%s1256 + $0x20] sm:$0xff]
    %v1262 = vld [vmem:[%s1256 + $0x28] sm:$0xff]
    %v1263 = vld [vmem:[%s1256 + $0x30] sm:$0xff]
    %v1264 = vld [vmem:[%s1256 + $0x38] sm:$0xff]
    %v1265 = vld [vmem:[%s1256 + $0x40] sm:$0xff]
    %v1266 = vld [vmem:[%s1256 + $0x48] sm:$0xff]
    %v1267 = vld [vmem:[%s1256 + $0x50] sm:$0xff]
    %v1268 = vld [vmem:[%s1256 + $0x58] sm:$0xff]
    %v1269 = vld [vmem:[%s1256 + $0x60] sm:$0xff]
    %v1270 = vld [vmem:[%s1256 + $0x68] sm:$0xff]
    %v1271 = vld [vmem:[%s1256 + $0x70] sm:$0xff]
    %v1272 = vld [vmem:[%s1256 + $0x78] sm:$0xff]
    %v1273 = vld [vmem:[%s1256 + $0x80] sm:$0xff]
    %v1274 = vld [vmem:[%s1256 + $0x88] sm:$0xff]
    %v1275 = vld [vmem:[%s1256 + $0x90] sm:$0xff]
    %v1276 = vld [vmem:[%s1256 + $0x98] sm:$0xff]
    %v1277 = vld [vmem:[%s1256 + $0xa0] sm:$0xff]
    %v1278 = vld [vmem:[%s1256 + $0xa8] sm:$0xff]
    %v1279 = vld [vmem:[%s1256 + $0xb0] sm:$0xff]
    %v1280 = vld [vmem:[%s1256 + $0xb8] sm:$0xff]
    %v1281 = vld [vmem:[%s1256 + $0xc0] sm:$0xff]
    %v1282 = vld [vmem:[%s1256 + $0xc8] sm:$0xff]
    %v1284 = vshrl.u32 %v648, 16
    %v1286 = vshll.u32 %v648, 16
    %v1288 = vrot.slane %v1286, 1
    %v1289 = vor.u32 %v1284, %v1288
    %v1290 = vshrl.u32 %v649, 16
    %v1292 = vshll.u32 %v649, 16
    %v1294 = vrot.slane %v1292, 1
    %v1295 = vor.u32 %v1290, %v1294
    %v1323 = vunpack.c.l.b16 %v1257
    %v1324 = vunpack.c.h.b16 %v1257
    %v1325 = vunpack.c.l.b16 %v1258
    %v1326 = vunpack.c.h.b16 %v1258
    %v1327 = vunpack.c.l.b16 %v1259
    %v1328 = vunpack.c.h.b16 %v1259
    %v1329 = vunpack.c.l.b16 %v1260
    %v1330 = vunpack.c.h.b16 %v1260
    %v1331 = vunpack.c.l.b16 %v1261
    %v1332 = vunpack.c.h.b16 %v1261
    %v1333 = vunpack.c.l.b16 %v1262
    %v1334 = vunpack.c.h.b16 %v1262
    %v1335 = vunpack.c.l.b16 %v1263
    %v1336 = vunpack.c.h.b16 %v1263
    %v1337 = vunpack.c.l.b16 %v1264
    %v1338 = vunpack.c.h.b16 %v1264
    %v1339 = vunpack.c.l.b16 %v1265
    %v1340 = vunpack.c.h.b16 %v1265
    %v1341 = vunpack.c.l.b16 %v1266
    %v1342 = vunpack.c.h.b16 %v1266
    %v1343 = vunpack.c.l.b16 %v1267
    %v1344 = vunpack.c.h.b16 %v1267
    %v1345 = vunpack.c.l.b16 %v1268
    %v1346 = vunpack.c.h.b16 %v1268
    %v1347 = vunpack.c.l.b16 %v1269
    %v1348 = vunpack.c.h.b16 %v1269
    %v1349 = vunpack.c.l.b16 %v1270
    %v1350 = vunpack.c.h.b16 %v1270
    %v1351 = vunpack.c.l.b16 %v1271
    %v1352 = vunpack.c.h.b16 %v1271
    %v1353 = vunpack.c.l.b16 %v1272
    %v1354 = vunpack.c.h.b16 %v1272
    %v1355 = vunpack.c.l.b16 %v1273
    %v1356 = vunpack.c.h.b16 %v1273
    %v1357 = vunpack.c.l.b16 %v1274
    %v1358 = vunpack.c.h.b16 %v1274
    %v1359 = vunpack.c.l.b16 %v1275
    %v1360 = vunpack.c.h.b16 %v1275
    %v1361 = vunpack.c.l.b16 %v1276
    %v1362 = vunpack.c.h.b16 %v1276
    %v1363 = vunpack.c.l.b16 %v1277
    %v1364 = vunpack.c.h.b16 %v1277
    %v1365 = vunpack.c.l.b16 %v1278
    %v1366 = vunpack.c.h.b16 %v1278
    %v1367 = vunpack.c.l.b16 %v1279
    %v1368 = vunpack.c.h.b16 %v1279
    %v1369 = vunpack.c.l.b16 %v1280
    %v1370 = vunpack.c.h.b16 %v1280
    %v1371 = vunpack.c.l.b16 %v1281
    %v1372 = vunpack.c.h.b16 %v1281
    %v1373 = vunpack.c.l.b16 %v1282
    %v1374 = vunpack.c.h.b16 %v1282
    %v1375 = vpack.c.b16 %v1325, %v1323
    %v1376 = vpack.c.b16 %v1326, %v1324
    %v1377 = vpack.c.b16 %v1329, %v1327
    %v1378 = vpack.c.b16 %v1330, %v1328
    %v1379 = vpack.c.b16 %v1333, %v1331
    %v1380 = vpack.c.b16 %v1334, %v1332
    %v1381 = vpack.c.b16 %v1337, %v1335
    %v1382 = vpack.c.b16 %v1338, %v1336
    %v1383 = vpack.c.b16 %v1341, %v1339
    %v1384 = vpack.c.b16 %v1342, %v1340
    %v1385 = vpack.c.b16 %v1345, %v1343
    %v1386 = vpack.c.b16 %v1346, %v1344
    %v1387 = vpack.c.b16 %v1349, %v1347
    %v1388 = vpack.c.b16 %v1350, %v1348
    %v1389 = vpack.c.b16 %v1353, %v1351
    %v1390 = vpack.c.b16 %v1354, %v1352
    %v1391 = vpack.c.b16 %v1357, %v1355
    %v1392 = vpack.c.b16 %v1358, %v1356
    %v1393 = vpack.c.b16 %v1361, %v1359
    %v1394 = vpack.c.b16 %v1362, %v1360
    %v1395 = vpack.c.b16 %v1365, %v1363
    %v1396 = vpack.c.b16 %v1366, %v1364
    %v1397 = vpack.c.b16 %v1369, %v1367
    %v1398 = vpack.c.b16 %v1370, %v1368
    %v1399 = vpack.c.b16 %v1373, %v1371
    %v1400 = vpack.c.b16 %v1374, %v1372
    %v1428 = vsel %vm781, %v1295, 0
    %1430 = vmatpush.bf16.msra.mxu0 %v1389
    %1431 = vmatpush.bf16.msra.mxu0 %v1387
    %1432 = vmatpush.bf16.msra.mxu0 %v1385
    %1433 = vmatpush.bf16.msra.mxu0 %v1383
    %1434 = vmatpush.bf16.msra.mxu0 %v1381
    %1435 = vmatpush.bf16.msra.mxu0 %v1379
    %1436 = vmatpush.bf16.msra.mxu0 %v1377
    %1437 = vmatpush.bf16.msra.mxu0 %v1375
    %1438 = vmatmul.bf16.gmra.mxu0 %v1289
    %v1439 = vpop.f32.mrf.mxu0
    %v1440 = vadd.f32 0.0, %v1439
    %v1441 = vpop.f32.mrf.mxu0
    %1442 = vdwg.mxu0
    %1443 = vmatpush.bf16.msra.mxu0 0
    %1444 = vmatpush.bf16.msra.mxu0 0
    %1445 = vmatpush.bf16.msra.mxu0 0
    %1446 = vmatpush.bf16.msra.mxu0 %v1399
    %1447 = vmatpush.bf16.msra.mxu0 %v1397
    %1448 = vmatpush.bf16.msra.mxu0 %v1395
    %1449 = vmatpush.bf16.msra.mxu0 %v1393
    %1450 = vmatpush.bf16.msra.mxu0 %v1391
    %1451 = vmatmul.bf16.gmra.mxu0 %v1428
    %v1452 = vpop.f32.mrf.mxu0
    %v1453 = vadd.f32 %v1440, %v1452
    %v1454 = vpop.f32.mrf.mxu0
    %1455 = vdwg.mxu0
    %1456 = vmatpush.bf16.msra.mxu0 %v1390
    %1457 = vmatpush.bf16.msra.mxu0 %v1388
    %1458 = vmatpush.bf16.msra.mxu0 %v1386
    %1459 = vmatpush.bf16.msra.mxu0 %v1384
    %1460 = vmatpush.bf16.msra.mxu0 %v1382
    %1461 = vmatpush.bf16.msra.mxu0 %v1380
    %1462 = vmatpush.bf16.msra.mxu0 %v1378
    %1463 = vmatpush.bf16.msra.mxu0 %v1376
    %1464 = vmatmul.bf16.gmra.mxu0 %v1289
    %v1465 = vpop.f32.mrf.mxu0
    %v1466 = vadd.f32 0.0, %v1465
    %v1467 = vpop.f32.mrf.mxu0
    %1468 = vdwg.mxu0
    %1469 = vmatpush.bf16.msra.mxu0 0
    %1470 = vmatpush.bf16.msra.mxu0 0
    %1471 = vmatpush.bf16.msra.mxu0 0
    %1472 = vmatpush.bf16.msra.mxu0 %v1400
    %1473 = vmatpush.bf16.msra.mxu0 %v1398
    %1474 = vmatpush.bf16.msra.mxu0 %v1396
    %1475 = vmatpush.bf16.msra.mxu0 %v1394
    %1476 = vmatpush.bf16.msra.mxu0 %v1392
    %1477 = vmatmul.bf16.gmra.mxu0 %v1428
    %v1478 = vpop.f32.mrf.mxu0
    %v1479 = vadd.f32 %v1466, %v1478
    %v1480 = vpop.f32.mrf.mxu0
    %1481 = vdwg.mxu0
    %v1482 = vadd.f32 %v1254, %v1453
    %v1483 = vadd.f32 %v1255, %v1479
    %v1485 = vperm.slane %v38, 0
    %v1486 = vperm.slane %v38, 1
    %v1489 = vadd.f32 %v1482, %v1485
    %v1490 = vadd.f32 %v1483, %v1486
    %v1491 = vmax.f32 %v1489, 0.0
    %v1492 = vmax.f32 %v1490, 0.0
    %1495 = vrot.lane.b32.xlu0 %v1491, 96
    %v1496 = vpop.permute.xlu0 %1495
    %1497 = vrot.lane.b32.xlu0 %v1492, 96
    %v1498 = vpop.permute.xlu0 %1497
    %vm1499 = vcmask 785408
    %v1500 = vsel %vm1499, %v1496, %v1498
    %v1502 = vmax.f32 %v1491, %v1500
    %v1504 = vrot.slane %v1502, 1
    %v1506 = vmax.f32 %v1502, %v1504
    %1507 = vst [vmem:[#allocation2] sm:$0x1] %v1506
    %s1508 = scalar_lea.vmem [#allocation2], 2
    %1509 = vst [vmem:[%s1508 - $0x1] sm:$0x2] %v1506
    %s1510 = scalar_lea.vmem [#allocation2], 4
    %1511 = vst [vmem:[%s1510 - $0x2] sm:$0x4] %v1506
    %s1512 = scalar_lea.vmem [#allocation2], 6
    %1513 = vst [vmem:[%s1512 - $0x3] sm:$0x8] %v1506
    %s1514 = scalar_lea.vmem %s0, 8
    %v1515 = vld [vmem:[%s1514] sm:$0xf]
    %v1516 = vld [vmem:[%s1514 + $0x4] sm:$0x1]
    %s1517 = scalar_lea.vmem %s1, 4
    %v1518 = vld [vmem:[%s1517] sm:$0xf]
    %v1519 = vld [vmem:[%s2] sm:$0xff]
    %v1520 = vld [vmem:[%s2 + $0x8] sm:$0xff]
    %v1521 = vld [vmem:[%s2 + $0x10] sm:$0xff]
    %v1522 = vld [vmem:[%s2 + $0x18] sm:$0xff]
    %v1523 = vld [vmem:[%s2 + $0x20] sm:$0xff]
    %v1524 = vld [vmem:[%s2 + $0x28] sm:$0xff]
    %v1525 = vld [vmem:[%s2 + $0x30] sm:$0xff]
    %v1526 = vld [vmem:[%s2 + $0x38] sm:$0xff]
    %v1527 = vld [vmem:[%s2 + $0x40] sm:$0x33]
    %v1528 = vld [vmem:[%s53] sm:$0xff]
    %v1529 = vld [vmem:[%s53 + $0x8] sm:$0xff]
    %v1530 = vld [vmem:[%s53 + $0x10] sm:$0xff]
    %v1531 = vld [vmem:[%s53 + $0x18] sm:$0xff]
    %v1532 = vld [vmem:[%s53 + $0x20] sm:$0xff]
    %v1533 = vld [vmem:[%s53 + $0x28] sm:$0xff]
    %v1534 = vld [vmem:[%s53 + $0x30] sm:$0xff]
    %v1535 = vld [vmem:[%s53 + $0x38] sm:$0xff]
    %v1536 = vld [vmem:[%s53 + $0x40] sm:$0x33]
    %v1546 = vunpack.c.l.b16 %v1528
    %v1547 = vunpack.c.h.b16 %v1528
    %v1548 = vunpack.c.l.b16 %v1529
    %v1549 = vunpack.c.h.b16 %v1529
    %v1550 = vunpack.c.l.b16 %v1530
    %v1551 = vunpack.c.h.b16 %v1530
    %v1552 = vunpack.c.l.b16 %v1531
    %v1553 = vunpack.c.h.b16 %v1531
    %v1554 = vunpack.c.l.b16 %v1532
    %v1555 = vunpack.c.h.b16 %v1532
    %v1556 = vunpack.c.l.b16 %v1533
    %v1557 = vunpack.c.h.b16 %v1533
    %v1558 = vunpack.c.l.b16 %v1534
    %v1559 = vunpack.c.h.b16 %v1534
    %v1560 = vunpack.c.l.b16 %v1535
    %v1561 = vunpack.c.h.b16 %v1535
    %v1562 = vunpack.c.l.b16 %v1536
    %v1563 = vunpack.c.h.b16 %v1536
    %v1564 = vpack.c.b16 %v1548, %v1546
    %v1565 = vpack.c.b16 %v1549, %v1547
    %v1566 = vpack.c.b16 %v1552, %v1550
    %v1567 = vpack.c.b16 %v1553, %v1551
    %v1568 = vpack.c.b16 %v1556, %v1554
    %v1569 = vpack.c.b16 %v1557, %v1555
    %v1570 = vpack.c.b16 %v1560, %v1558
    %v1571 = vpack.c.b16 %v1561, %v1559
    %v1572 = vpack.c.b16 %v1562, %v1562
    %v1573 = vpack.c.b16 %v1563, %v1563
    %v1583 = vsel %vm108, %v1518, 0
    %v1586 = vsel %vm112, %v1572, 0
    %v1589 = vsel %vm112, %v1573, 0
    %1591 = vmatpush.bf16.msra.mxu0 0
    %1592 = vmatpush.bf16.msra.mxu0 0
    %1593 = vmatpush.bf16.msra.mxu0 0
    %1594 = vmatpush.bf16.msra.mxu0 %v1586
    %1595 = vmatpush.bf16.msra.mxu0 %v1570
    %1596 = vmatpush.bf16.msra.mxu0 %v1568
    %1597 = vmatpush.bf16.msra.mxu0 %v1566
    %1598 = vmatpush.bf16.msra.mxu0 %v1564
    %1599 = vmatmul.bf16.gmra.mxu0 %v1583
    %v1600 = vpop.f32.mrf.mxu0
    %v1601 = vadd.f32 0.0, %v1600
    %v1602 = vpop.f32.mrf.mxu0
    %1603 = vdwg.mxu0
    %1604 = vmatpush.bf16.msra.mxu0 0
    %1605 = vmatpush.bf16.msra.mxu0 0
    %1606 = vmatpush.bf16.msra.mxu0 0
    %1607 = vmatpush.bf16.msra.mxu0 %v1589
    %1608 = vmatpush.bf16.msra.mxu0 %v1571
    %1609 = vmatpush.bf16.msra.mxu0 %v1569
    %1610 = vmatpush.bf16.msra.mxu0 %v1567
    %1611 = vmatpush.bf16.msra.mxu0 %v1565
    %1612 = vmatmul.bf16.gmra.mxu0 %v1583
    %v1613 = vpop.f32.mrf.mxu0
    %v1614 = vadd.f32 0.0, %v1613
    %v1615 = vpop.f32.mrf.mxu0
    %1616 = vdwg.mxu0
    %v1626 = vunpack.c.l.b16 %v1519
    %v1627 = vunpack.c.h.b16 %v1519
    %v1628 = vunpack.c.l.b16 %v1520
    %v1629 = vunpack.c.h.b16 %v1520
    %v1630 = vunpack.c.l.b16 %v1521
    %v1631 = vunpack.c.h.b16 %v1521
    %v1632 = vunpack.c.l.b16 %v1522
    %v1633 = vunpack.c.h.b16 %v1522
    %v1634 = vunpack.c.l.b16 %v1523
    %v1635 = vunpack.c.h.b16 %v1523
    %v1636 = vunpack.c.l.b16 %v1524
    %v1637 = vunpack.c.h.b16 %v1524
    %v1638 = vunpack.c.l.b16 %v1525
    %v1639 = vunpack.c.h.b16 %v1525
    %v1640 = vunpack.c.l.b16 %v1526
    %v1641 = vunpack.c.h.b16 %v1526
    %v1642 = vunpack.c.l.b16 %v1527
    %v1643 = vunpack.c.h.b16 %v1527
    %v1644 = vpack.c.b16 %v1628, %v1626
    %v1645 = vpack.c.b16 %v1629, %v1627
    %v1646 = vpack.c.b16 %v1632, %v1630
    %v1647 = vpack.c.b16 %v1633, %v1631
    %v1648 = vpack.c.b16 %v1636, %v1634
    %v1649 = vpack.c.b16 %v1637, %v1635
    %v1650 = vpack.c.b16 %v1640, %v1638
    %v1651 = vpack.c.b16 %v1641, %v1639
    %v1652 = vpack.c.b16 %v1642, %v1642
    %v1653 = vpack.c.b16 %v1643, %v1643
    %v1663 = vsel %vm108, %v1515, 0
    %v1666 = vsel %vm112, %v1652, 0
    %v1669 = vsel %vm112, %v1653, 0
    %1671 = vmatpush.bf16.msra.mxu0 0
    %1672 = vmatpush.bf16.msra.mxu0 0
    %1673 = vmatpush.bf16.msra.mxu0 0
    %1674 = vmatpush.bf16.msra.mxu0 %v1666
    %1675 = vmatpush.bf16.msra.mxu0 %v1650
    %1676 = vmatpush.bf16.msra.mxu0 %v1648
    %1677 = vmatpush.bf16.msra.mxu0 %v1646
    %1678 = vmatpush.bf16.msra.mxu0 %v1644
    %1679 = vmatmul.bf16.gmra.mxu0 %v1663
    %v1680 = vpop.f32.mrf.mxu0
    %v1681 = vadd.f32 %v1601, %v1680
    %v1682 = vpop.f32.mrf.mxu0
    %1683 = vdwg.mxu0
    %1684 = vmatpush.bf16.msra.mxu0 0
    %1685 = vmatpush.bf16.msra.mxu0 0
    %1686 = vmatpush.bf16.msra.mxu0 0
    %1687 = vmatpush.bf16.msra.mxu0 %v1669
    %1688 = vmatpush.bf16.msra.mxu0 %v1651
    %1689 = vmatpush.bf16.msra.mxu0 %v1649
    %1690 = vmatpush.bf16.msra.mxu0 %v1647
    %1691 = vmatpush.bf16.msra.mxu0 %v1645
    %1692 = vmatmul.bf16.gmra.mxu0 %v1663
    %v1693 = vpop.f32.mrf.mxu0
    %v1694 = vadd.f32 %v1614, %v1693
    %v1695 = vpop.f32.mrf.mxu0
    %1696 = vdwg.mxu0
    %v1698 = vunpack.c.l.b16 %v1515
    %v1699 = vpack.c.b16 %v1698, %v1698
    %v1701 = vshrl.u32 %v1699, 16
    %v1703 = vshll.u32 %v1699, 16
    %v1705 = vrot.slane %v1703, 1
    %v1706 = vor.u32 %v1701, %v1705
    %v1708 = vsel %vm108, %v1706, 0
    %1710 = vmatpush.bf16.msra.mxu0 0
    %1711 = vmatpush.bf16.msra.mxu0 0
    %1712 = vmatpush.bf16.msra.mxu0 0
    %1713 = vmatpush.bf16.msra.mxu0 %v1586
    %1714 = vmatpush.bf16.msra.mxu0 %v1570
    %1715 = vmatpush.bf16.msra.mxu0 %v1568
    %1716 = vmatpush.bf16.msra.mxu0 %v1566
    %1717 = vmatpush.bf16.msra.mxu0 %v1564
    %1718 = vmatmul.bf16.gmra.mxu0 %v1708
    %v1719 = vpop.f32.mrf.mxu0
    %v1720 = vadd.f32 0.0, %v1719
    %v1721 = vpop.f32.mrf.mxu0
    %1722 = vdwg.mxu0
    %1723 = vmatpush.bf16.msra.mxu0 0
    %1724 = vmatpush.bf16.msra.mxu0 0
    %1725 = vmatpush.bf16.msra.mxu0 0
    %1726 = vmatpush.bf16.msra.mxu0 %v1589
    %1727 = vmatpush.bf16.msra.mxu0 %v1571
    %1728 = vmatpush.bf16.msra.mxu0 %v1569
    %1729 = vmatpush.bf16.msra.mxu0 %v1567
    %1730 = vmatpush.bf16.msra.mxu0 %v1565
    %1731 = vmatmul.bf16.gmra.mxu0 %v1708
    %v1732 = vpop.f32.mrf.mxu0
    %v1733 = vadd.f32 0.0, %v1732
    %v1734 = vpop.f32.mrf.mxu0
    %1735 = vdwg.mxu0
    %1736 = vmatpush.bf16.msra.mxu0 0
    %1737 = vmatpush.bf16.msra.mxu0 0
    %1738 = vmatpush.bf16.msra.mxu0 0
    %1739 = vmatpush.bf16.msra.mxu0 %v1666
    %1740 = vmatpush.bf16.msra.mxu0 %v1650
    %1741 = vmatpush.bf16.msra.mxu0 %v1648
    %1742 = vmatpush.bf16.msra.mxu0 %v1646
    %1743 = vmatpush.bf16.msra.mxu0 %v1644
    %1744 = vmatmul.bf16.gmra.mxu0 %v1583
    %v1745 = vpop.f32.mrf.mxu0
    %v1746 = vadd.f32 %v1720, %v1745
    %v1747 = vpop.f32.mrf.mxu0
    %1748 = vdwg.mxu0
    %1749 = vmatpush.bf16.msra.mxu0 0
    %1750 = vmatpush.bf16.msra.mxu0 0
    %1751 = vmatpush.bf16.msra.mxu0 0
    %1752 = vmatpush.bf16.msra.mxu0 %v1669
    %1753 = vmatpush.bf16.msra.mxu0 %v1651
    %1754 = vmatpush.bf16.msra.mxu0 %v1649
    %1755 = vmatpush.bf16.msra.mxu0 %v1647
    %1756 = vmatpush.bf16.msra.mxu0 %v1645
    %1757 = vmatmul.bf16.gmra.mxu0 %v1583
    %v1758 = vpop.f32.mrf.mxu0
    %v1759 = vadd.f32 %v1733, %v1758
    %v1760 = vpop.f32.mrf.mxu0
    %1761 = vdwg.mxu0
    %v1762 = vld [vmem:[%s290] sm:$0xff]
    %v1763 = vld [vmem:[%s290 + $0x8] sm:$0xff]
    %v1764 = vld [vmem:[%s290 + $0x10] sm:$0xff]
    %v1765 = vld [vmem:[%s290 + $0x18] sm:$0xff]
    %v1766 = vld [vmem:[%s290 + $0x20] sm:$0xff]
    %v1767 = vld [vmem:[%s290 + $0x28] sm:$0xff]
    %v1768 = vld [vmem:[%s290 + $0x30] sm:$0xff]
    %v1769 = vld [vmem:[%s290 + $0x38] sm:$0xff]
    %v1770 = vld [vmem:[%s290 + $0x40] sm:$0x33]
    %v1771 = vld [vmem:[%s300] sm:$0xff]
    %v1772 = vld [vmem:[%s300 + $0x8] sm:$0xff]
    %v1773 = vld [vmem:[%s300 + $0x10] sm:$0xff]
    %v1774 = vld [vmem:[%s300 + $0x18] sm:$0xff]
    %v1775 = vld [vmem:[%s300 + $0x20] sm:$0xff]
    %v1776 = vld [vmem:[%s300 + $0x28] sm:$0xff]
    %v1777 = vld [vmem:[%s300 + $0x30] sm:$0xff]
    %v1778 = vld [vmem:[%s300 + $0x38] sm:$0xff]
    %v1779 = vld [vmem:[%s300 + $0x40] sm:$0x33]
    %v1789 = vunpack.c.l.b16 %v1762
    %v1790 = vunpack.c.h.b16 %v1762
    %v1791 = vunpack.c.l.b16 %v1763
    %v1792 = vunpack.c.h.b16 %v1763
    %v1793 = vunpack.c.l.b16 %v1764
    %v1794 = vunpack.c.h.b16 %v1764
    %v1795 = vunpack.c.l.b16 %v1765
    %v1796 = vunpack.c.h.b16 %v1765
    %v1797 = vunpack.c.l.b16 %v1766
    %v1798 = vunpack.c.h.b16 %v1766
    %v1799 = vunpack.c.l.b16 %v1767
    %v1800 = vunpack.c.h.b16 %v1767
    %v1801 = vunpack.c.l.b16 %v1768
    %v1802 = vunpack.c.h.b16 %v1768
    %v1803 = vunpack.c.l.b16 %v1769
    %v1804 = vunpack.c.h.b16 %v1769
    %v1805 = vunpack.c.l.b16 %v1770
    %v1806 = vunpack.c.h.b16 %v1770
    %v1807 = vpack.c.b16 %v1791, %v1789
    %v1808 = vpack.c.b16 %v1792, %v1790
    %v1809 = vpack.c.b16 %v1795, %v1793
    %v1810 = vpack.c.b16 %v1796, %v1794
    %v1811 = vpack.c.b16 %v1799, %v1797
    %v1812 = vpack.c.b16 %v1800, %v1798
    %v1813 = vpack.c.b16 %v1803, %v1801
    %v1814 = vpack.c.b16 %v1804, %v1802
    %v1815 = vpack.c.b16 %v1805, %v1805
    %v1816 = vpack.c.b16 %v1806, %v1806
    %v1826 = vsel %vm112, %v1815, 0
    %v1829 = vsel %vm112, %v1816, 0
    %1831 = vmatpush.bf16.msra.mxu0 0
    %1832 = vmatpush.bf16.msra.mxu0 0
    %1833 = vmatpush.bf16.msra.mxu0 0
    %1834 = vmatpush.bf16.msra.mxu0 %v1826
    %1835 = vmatpush.bf16.msra.mxu0 %v1813
    %1836 = vmatpush.bf16.msra.mxu0 %v1811
    %1837 = vmatpush.bf16.msra.mxu0 %v1809
    %1838 = vmatpush.bf16.msra.mxu0 %v1807
    %1839 = vmatmul.bf16.gmra.mxu0 %v1708
    %v1840 = vpop.f32.mrf.mxu0
    %v1841 = vadd.f32 0.0, %v1840
    %v1842 = vpop.f32.mrf.mxu0
    %1843 = vdwg.mxu0
    %1844 = vmatpush.bf16.msra.mxu0 0
    %1845 = vmatpush.bf16.msra.mxu0 0
    %1846 = vmatpush.bf16.msra.mxu0 0
    %1847 = vmatpush.bf16.msra.mxu0 %v1829
    %1848 = vmatpush.bf16.msra.mxu0 %v1814
    %1849 = vmatpush.bf16.msra.mxu0 %v1812
    %1850 = vmatpush.bf16.msra.mxu0 %v1810
    %1851 = vmatpush.bf16.msra.mxu0 %v1808
    %1852 = vmatmul.bf16.gmra.mxu0 %v1708
    %v1853 = vpop.f32.mrf.mxu0
    %v1854 = vadd.f32 0.0, %v1853
    %v1855 = vpop.f32.mrf.mxu0
    %1856 = vdwg.mxu0
    %v1857 = vadd.f32 %v1681, %v1841
    %v1858 = vadd.f32 %v1694, %v1854
    %v1860 = vunpack.c.l.b16 %v1518
    %v1861 = vpack.c.b16 %v1860, %v1860
    %v1863 = vshrl.u32 %v1861, 16
    %v1865 = vshll.u32 %v1861, 16
    %v1867 = vrot.slane %v1865, 1
    %v1868 = vor.u32 %v1863, %v1867
    %v1870 = vsel %vm108, %v1868, 0
    %1872 = vmatpush.bf16.msra.mxu0 0
    %1873 = vmatpush.bf16.msra.mxu0 0
    %1874 = vmatpush.bf16.msra.mxu0 0
    %1875 = vmatpush.bf16.msra.mxu0 %v1826
    %1876 = vmatpush.bf16.msra.mxu0 %v1813
    %1877 = vmatpush.bf16.msra.mxu0 %v1811
    %1878 = vmatpush.bf16.msra.mxu0 %v1809
    %1879 = vmatpush.bf16.msra.mxu0 %v1807
    %1880 = vmatmul.bf16.gmra.mxu0 %v1870
    %v1881 = vpop.f32.mrf.mxu0
    %v1882 = vadd.f32 0.0, %v1881
    %v1883 = vpop.f32.mrf.mxu0
    %1884 = vdwg.mxu0
    %1885 = vmatpush.bf16.msra.mxu0 0
    %1886 = vmatpush.bf16.msra.mxu0 0
    %1887 = vmatpush.bf16.msra.mxu0 0
    %1888 = vmatpush.bf16.msra.mxu0 %v1829
    %1889 = vmatpush.bf16.msra.mxu0 %v1814
    %1890 = vmatpush.bf16.msra.mxu0 %v1812
    %1891 = vmatpush.bf16.msra.mxu0 %v1810
    %1892 = vmatpush.bf16.msra.mxu0 %v1808
    %1893 = vmatmul.bf16.gmra.mxu0 %v1870
    %v1894 = vpop.f32.mrf.mxu0
    %v1895 = vadd.f32 0.0, %v1894
    %v1896 = vpop.f32.mrf.mxu0
    %1897 = vdwg.mxu0
    %v1898 = vadd.f32 %v1746, %v1882
    %v1899 = vadd.f32 %v1759, %v1895
    %v1909 = vunpack.c.l.b16 %v1771
    %v1910 = vunpack.c.h.b16 %v1771
    %v1911 = vunpack.c.l.b16 %v1772
    %v1912 = vunpack.c.h.b16 %v1772
    %v1913 = vunpack.c.l.b16 %v1773
    %v1914 = vunpack.c.h.b16 %v1773
    %v1915 = vunpack.c.l.b16 %v1774
    %v1916 = vunpack.c.h.b16 %v1774
    %v1917 = vunpack.c.l.b16 %v1775
    %v1918 = vunpack.c.h.b16 %v1775
    %v1919 = vunpack.c.l.b16 %v1776
    %v1920 = vunpack.c.h.b16 %v1776
    %v1921 = vunpack.c.l.b16 %v1777
    %v1922 = vunpack.c.h.b16 %v1777
    %v1923 = vunpack.c.l.b16 %v1778
    %v1924 = vunpack.c.h.b16 %v1778
    %v1925 = vunpack.c.l.b16 %v1779
    %v1926 = vunpack.c.h.b16 %v1779
    %v1927 = vpack.c.b16 %v1911, %v1909
    %v1928 = vpack.c.b16 %v1912, %v1910
    %v1929 = vpack.c.b16 %v1915, %v1913
    %v1930 = vpack.c.b16 %v1916, %v1914
    %v1931 = vpack.c.b16 %v1919, %v1917
    %v1932 = vpack.c.b16 %v1920, %v1918
    %v1933 = vpack.c.b16 %v1923, %v1921
    %v1934 = vpack.c.b16 %v1924, %v1922
    %v1935 = vpack.c.b16 %v1925, %v1925
    %v1936 = vpack.c.b16 %v1926, %v1926
    %v1946 = vsel %vm112, %v1935, 0
    %v1949 = vsel %vm112, %v1936, 0
    %1951 = vmatpush.bf16.msra.mxu0 0
    %1952 = vmatpush.bf16.msra.mxu0 0
    %1953 = vmatpush.bf16.msra.mxu0 0
    %1954 = vmatpush.bf16.msra.mxu0 %v1946
    %1955 = vmatpush.bf16.msra.mxu0 %v1933
    %1956 = vmatpush.bf16.msra.mxu0 %v1931
    %1957 = vmatpush.bf16.msra.mxu0 %v1929
    %1958 = vmatpush.bf16.msra.mxu0 %v1927
    %1959 = vmatmul.bf16.gmra.mxu0 %v1870
    %v1960 = vpop.f32.mrf.mxu0
    %v1961 = vadd.f32 0.0, %v1960
    %v1962 = vpop.f32.mrf.mxu0
    %1963 = vdwg.mxu0
    %1964 = vmatpush.bf16.msra.mxu0 0
    %1965 = vmatpush.bf16.msra.mxu0 0
    %1966 = vmatpush.bf16.msra.mxu0 0
    %1967 = vmatpush.bf16.msra.mxu0 %v1949
    %1968 = vmatpush.bf16.msra.mxu0 %v1934
    %1969 = vmatpush.bf16.msra.mxu0 %v1932
    %1970 = vmatpush.bf16.msra.mxu0 %v1930
    %1971 = vmatpush.bf16.msra.mxu0 %v1928
    %1972 = vmatmul.bf16.gmra.mxu0 %v1870
    %v1973 = vpop.f32.mrf.mxu0
    %v1974 = vadd.f32 0.0, %v1973
    %v1975 = vpop.f32.mrf.mxu0
    %1976 = vdwg.mxu0
    %v1977 = vadd.f32 %v1857, %v1961
    %v1978 = vadd.f32 %v1858, %v1974
    %v1980 = vunpack.c.l.b16 %v1516
    %v1981 = vpack.c.b16 %v1980, %v1698
    %v1982 = vrot.slane %v1981, 1
    %v1984 = vsel %vm108, %v1982, 0
    %1986 = vmatpush.bf16.msra.mxu0 0
    %1987 = vmatpush.bf16.msra.mxu0 0
    %1988 = vmatpush.bf16.msra.mxu0 0
    %1989 = vmatpush.bf16.msra.mxu0 %v1946
    %1990 = vmatpush.bf16.msra.mxu0 %v1933
    %1991 = vmatpush.bf16.msra.mxu0 %v1931
    %1992 = vmatpush.bf16.msra.mxu0 %v1929
    %1993 = vmatpush.bf16.msra.mxu0 %v1927
    %1994 = vmatmul.bf16.gmra.mxu0 %v1984
    %v1995 = vpop.f32.mrf.mxu0
    %v1996 = vadd.f32 0.0, %v1995
    %v1997 = vpop.f32.mrf.mxu0
    %1998 = vdwg.mxu0
    %1999 = vmatpush.bf16.msra.mxu0 0
    %2000 = vmatpush.bf16.msra.mxu0 0
    %2001 = vmatpush.bf16.msra.mxu0 0
    %2002 = vmatpush.bf16.msra.mxu0 %v1949
    %2003 = vmatpush.bf16.msra.mxu0 %v1934
    %2004 = vmatpush.bf16.msra.mxu0 %v1932
    %2005 = vmatpush.bf16.msra.mxu0 %v1930
    %2006 = vmatpush.bf16.msra.mxu0 %v1928
    %2007 = vmatmul.bf16.gmra.mxu0 %v1984
    %v2008 = vpop.f32.mrf.mxu0
    %v2009 = vadd.f32 0.0, %v2008
    %v2010 = vpop.f32.mrf.mxu0
    %2011 = vdwg.mxu0
    %v2012 = vadd.f32 %v1898, %v1996
    %v2013 = vadd.f32 %v1899, %v2009
    %v2014 = vadd.f32 %v1977, %v545
    %v2015 = vadd.f32 %v1978, %v546
    %v2016 = vmax.f32 %v2014, 0.0
    %v2017 = vmax.f32 %v2015, 0.0
    %v2018 = vadd.f32 %v2012, %v545
    %v2019 = vadd.f32 %v2013, %v546
    %v2020 = vmax.f32 %v2018, 0.0
    %v2021 = vmax.f32 %v2019, 0.0
    %2024 = vrot.lane.b32.xlu0 %v2016, 112
    %v2025 = vpop.permute.xlu0 %2024
    %2026 = vrot.lane.b32.xlu0 %v2017, 112
    %v2027 = vpop.permute.xlu0 %2026
    %v2028 = vsel %vm563, %v2025, %v2027
    %v2031 = vmax.f32 %v2016, %v2028
    %v2032 = vmax.f32 %v2017, %v2027
    %2035 = vrot.lane.b32.xlu0 %v2020, 112
    %v2036 = vpop.permute.xlu0 %2035
    %2037 = vrot.lane.b32.xlu0 %v2021, 112
    %v2038 = vpop.permute.xlu0 %2037
    %v2039 = vsel %vm563, %v2036, %v2038
    %v2042 = vmax.f32 %v2020, %v2039
    %v2043 = vmax.f32 %v2021, %v2038
    %v2044 = vmax.f32 %v2031, %v2042
    %v2045 = vmax.f32 %v2032, %v2043
    %v2046 = vpack.c.bf16 %v2045, %v2044
    %v2049 = vrot.slane %v2031, 1
    %v2050 = vrot.slane %v2032, 1
    %v2053 = vmax.f32 %v2042, %v2049
    %v2054 = vmax.f32 %v2043, %v2050
    %v2055 = vpack.c.bf16 %v2054, %v2053
    %v2056 = vld [vmem:[%s4] sm:$0xff]
    %v2057 = vld [vmem:[%s4 + $0x8] sm:$0xff]
    %v2058 = vld [vmem:[%s4 + $0x10] sm:$0xff]
    %v2059 = vld [vmem:[%s4 + $0x18] sm:$0xff]
    %v2060 = vld [vmem:[%s4 + $0x20] sm:$0xff]
    %v2061 = vld [vmem:[%s4 + $0x28] sm:$0xff]
    %v2062 = vld [vmem:[%s4 + $0x30] sm:$0xff]
    %v2063 = vld [vmem:[%s4 + $0x38] sm:$0xff]
    %v2064 = vld [vmem:[%s4 + $0x40] sm:$0xff]
    %v2065 = vld [vmem:[%s4 + $0x48] sm:$0xff]
    %v2066 = vld [vmem:[%s4 + $0x50] sm:$0xff]
    %v2067 = vld [vmem:[%s4 + $0x58] sm:$0xff]
    %v2068 = vld [vmem:[%s4 + $0x60] sm:$0xff]
    %v2069 = vld [vmem:[%s4 + $0x68] sm:$0xff]
    %v2070 = vld [vmem:[%s4 + $0x70] sm:$0xff]
    %v2071 = vld [vmem:[%s4 + $0x78] sm:$0xff]
    %v2072 = vld [vmem:[%s4 + $0x80] sm:$0xff]
    %v2073 = vld [vmem:[%s4 + $0x88] sm:$0xff]
    %v2074 = vld [vmem:[%s4 + $0x90] sm:$0xff]
    %v2075 = vld [vmem:[%s4 + $0x98] sm:$0xff]
    %v2076 = vld [vmem:[%s4 + $0xa0] sm:$0xff]
    %v2077 = vld [vmem:[%s4 + $0xa8] sm:$0xff]
    %v2078 = vld [vmem:[%s4 + $0xb0] sm:$0xff]
    %v2079 = vld [vmem:[%s4 + $0xb8] sm:$0xff]
    %v2080 = vld [vmem:[%s4 + $0xc0] sm:$0xff]
    %v2081 = vld [vmem:[%s4 + $0xc8] sm:$0xff]
    %v2082 = vld [vmem:[%s618] sm:$0xff]
    %v2083 = vld [vmem:[%s618 + $0x8] sm:$0xff]
    %v2084 = vld [vmem:[%s618 + $0x10] sm:$0xff]
    %v2085 = vld [vmem:[%s618 + $0x18] sm:$0xff]
    %v2086 = vld [vmem:[%s618 + $0x20] sm:$0xff]
    %v2087 = vld [vmem:[%s618 + $0x28] sm:$0xff]
    %v2088 = vld [vmem:[%s618 + $0x30] sm:$0xff]
    %v2089 = vld [vmem:[%s618 + $0x38] sm:$0xff]
    %v2090 = vld [vmem:[%s618 + $0x40] sm:$0xff]
    %v2091 = vld [vmem:[%s618 + $0x48] sm:$0xff]
    %v2092 = vld [vmem:[%s618 + $0x50] sm:$0xff]
    %v2093 = vld [vmem:[%s618 + $0x58] sm:$0xff]
    %v2094 = vld [vmem:[%s618 + $0x60] sm:$0xff]
    %v2095 = vld [vmem:[%s618 + $0x68] sm:$0xff]
    %v2096 = vld [vmem:[%s618 + $0x70] sm:$0xff]
    %v2097 = vld [vmem:[%s618 + $0x78] sm:$0xff]
    %v2098 = vld [vmem:[%s618 + $0x80] sm:$0xff]
    %v2099 = vld [vmem:[%s618 + $0x88] sm:$0xff]
    %v2100 = vld [vmem:[%s618 + $0x90] sm:$0xff]
    %v2101 = vld [vmem:[%s618 + $0x98] sm:$0xff]
    %v2102 = vld [vmem:[%s618 + $0xa0] sm:$0xff]
    %v2103 = vld [vmem:[%s618 + $0xa8] sm:$0xff]
    %v2104 = vld [vmem:[%s618 + $0xb0] sm:$0xff]
    %v2105 = vld [vmem:[%s618 + $0xb8] sm:$0xff]
    %v2106 = vld [vmem:[%s618 + $0xc0] sm:$0xff]
    %v2107 = vld [vmem:[%s618 + $0xc8] sm:$0xff]
    %v2109 = vunpack.c.l.b16 %v2055
    %v2110 = vunpack.c.h.b16 %v2055
    %v2111 = vpack.c.b16 %v2109, %v2109
    %v2112 = vpack.c.b16 %v2110, %v2110
    %v2140 = vunpack.c.l.b16 %v2082
    %v2141 = vunpack.c.h.b16 %v2082
    %v2142 = vunpack.c.l.b16 %v2083
    %v2143 = vunpack.c.h.b16 %v2083
    %v2144 = vunpack.c.l.b16 %v2084
    %v2145 = vunpack.c.h.b16 %v2084
    %v2146 = vunpack.c.l.b16 %v2085
    %v2147 = vunpack.c.h.b16 %v2085
    %v2148 = vunpack.c.l.b16 %v2086
    %v2149 = vunpack.c.h.b16 %v2086
    %v2150 = vunpack.c.l.b16 %v2087
    %v2151 = vunpack.c.h.b16 %v2087
    %v2152 = vunpack.c.l.b16 %v2088
    %v2153 = vunpack.c.h.b16 %v2088
    %v2154 = vunpack.c.l.b16 %v2089
    %v2155 = vunpack.c.h.b16 %v2089
    %v2156 = vunpack.c.l.b16 %v2090
    %v2157 = vunpack.c.h.b16 %v2090
    %v2158 = vunpack.c.l.b16 %v2091
    %v2159 = vunpack.c.h.b16 %v2091
    %v2160 = vunpack.c.l.b16 %v2092
    %v2161 = vunpack.c.h.b16 %v2092
    %v2162 = vunpack.c.l.b16 %v2093
    %v2163 = vunpack.c.h.b16 %v2093
    %v2164 = vunpack.c.l.b16 %v2094
    %v2165 = vunpack.c.h.b16 %v2094
    %v2166 = vunpack.c.l.b16 %v2095
    %v2167 = vunpack.c.h.b16 %v2095
    %v2168 = vunpack.c.l.b16 %v2096
    %v2169 = vunpack.c.h.b16 %v2096
    %v2170 = vunpack.c.l.b16 %v2097
    %v2171 = vunpack.c.h.b16 %v2097
    %v2172 = vunpack.c.l.b16 %v2098
    %v2173 = vunpack.c.h.b16 %v2098
    %v2174 = vunpack.c.l.b16 %v2099
    %v2175 = vunpack.c.h.b16 %v2099
    %v2176 = vunpack.c.l.b16 %v2100
    %v2177 = vunpack.c.h.b16 %v2100
    %v2178 = vunpack.c.l.b16 %v2101
    %v2179 = vunpack.c.h.b16 %v2101
    %v2180 = vunpack.c.l.b16 %v2102
    %v2181 = vunpack.c.h.b16 %v2102
    %v2182 = vunpack.c.l.b16 %v2103
    %v2183 = vunpack.c.h.b16 %v2103
    %v2184 = vunpack.c.l.b16 %v2104
    %v2185 = vunpack.c.h.b16 %v2104
    %v2186 = vunpack.c.l.b16 %v2105
    %v2187 = vunpack.c.h.b16 %v2105
    %v2188 = vunpack.c.l.b16 %v2106
    %v2189 = vunpack.c.h.b16 %v2106
    %v2190 = vunpack.c.l.b16 %v2107
    %v2191 = vunpack.c.h.b16 %v2107
    %v2192 = vpack.c.b16 %v2142, %v2140
    %v2193 = vpack.c.b16 %v2143, %v2141
    %v2194 = vpack.c.b16 %v2146, %v2144
    %v2195 = vpack.c.b16 %v2147, %v2145
    %v2196 = vpack.c.b16 %v2150, %v2148
    %v2197 = vpack.c.b16 %v2151, %v2149
    %v2198 = vpack.c.b16 %v2154, %v2152
    %v2199 = vpack.c.b16 %v2155, %v2153
    %v2200 = vpack.c.b16 %v2158, %v2156
    %v2201 = vpack.c.b16 %v2159, %v2157
    %v2202 = vpack.c.b16 %v2162, %v2160
    %v2203 = vpack.c.b16 %v2163, %v2161
    %v2204 = vpack.c.b16 %v2166, %v2164
    %v2205 = vpack.c.b16 %v2167, %v2165
    %v2206 = vpack.c.b16 %v2170, %v2168
    %v2207 = vpack.c.b16 %v2171, %v2169
    %v2208 = vpack.c.b16 %v2174, %v2172
    %v2209 = vpack.c.b16 %v2175, %v2173
    %v2210 = vpack.c.b16 %v2178, %v2176
    %v2211 = vpack.c.b16 %v2179, %v2177
    %v2212 = vpack.c.b16 %v2182, %v2180
    %v2213 = vpack.c.b16 %v2183, %v2181
    %v2214 = vpack.c.b16 %v2186, %v2184
    %v2215 = vpack.c.b16 %v2187, %v2185
    %v2216 = vpack.c.b16 %v2190, %v2188
    %v2217 = vpack.c.b16 %v2191, %v2189
    %v2245 = vsel %vm781, %v2112, 0
    %2247 = vmatpush.bf16.msra.mxu0 %v2206
    %2248 = vmatpush.bf16.msra.mxu0 %v2204
    %2249 = vmatpush.bf16.msra.mxu0 %v2202
    %2250 = vmatpush.bf16.msra.mxu0 %v2200
    %2251 = vmatpush.bf16.msra.mxu0 %v2198
    %2252 = vmatpush.bf16.msra.mxu0 %v2196
    %2253 = vmatpush.bf16.msra.mxu0 %v2194
    %2254 = vmatpush.bf16.msra.mxu0 %v2192
    %2255 = vmatmul.bf16.gmra.mxu0 %v2111
    %v2256 = vpop.f32.mrf.mxu0
    %v2257 = vadd.f32 0.0, %v2256
    %v2258 = vpop.f32.mrf.mxu0
    %2259 = vdwg.mxu0
    %2260 = vmatpush.bf16.msra.mxu0 0
    %2261 = vmatpush.bf16.msra.mxu0 0
    %2262 = vmatpush.bf16.msra.mxu0 0
    %2263 = vmatpush.bf16.msra.mxu0 %v2216
    %2264 = vmatpush.bf16.msra.mxu0 %v2214
    %2265 = vmatpush.bf16.msra.mxu0 %v2212
    %2266 = vmatpush.bf16.msra.mxu0 %v2210
    %2267 = vmatpush.bf16.msra.mxu0 %v2208
    %2268 = vmatmul.bf16.gmra.mxu0 %v2245
    %v2269 = vpop.f32.mrf.mxu0
    %v2270 = vadd.f32 %v2257, %v2269
    %v2271 = vpop.f32.mrf.mxu0
    %2272 = vdwg.mxu0
    %2273 = vmatpush.bf16.msra.mxu0 %v2207
    %2274 = vmatpush.bf16.msra.mxu0 %v2205
    %2275 = vmatpush.bf16.msra.mxu0 %v2203
    %2276 = vmatpush.bf16.msra.mxu0 %v2201
    %2277 = vmatpush.bf16.msra.mxu0 %v2199
    %2278 = vmatpush.bf16.msra.mxu0 %v2197
    %2279 = vmatpush.bf16.msra.mxu0 %v2195
    %2280 = vmatpush.bf16.msra.mxu0 %v2193
    %2281 = vmatmul.bf16.gmra.mxu0 %v2111
    %v2282 = vpop.f32.mrf.mxu0
    %v2283 = vadd.f32 0.0, %v2282
    %v2284 = vpop.f32.mrf.mxu0
    %2285 = vdwg.mxu0
    %2286 = vmatpush.bf16.msra.mxu0 0
    %2287 = vmatpush.bf16.msra.mxu0 0
    %2288 = vmatpush.bf16.msra.mxu0 0
    %2289 = vmatpush.bf16.msra.mxu0 %v2217
    %2290 = vmatpush.bf16.msra.mxu0 %v2215
    %2291 = vmatpush.bf16.msra.mxu0 %v2213
    %2292 = vmatpush.bf16.msra.mxu0 %v2211
    %2293 = vmatpush.bf16.msra.mxu0 %v2209
    %2294 = vmatmul.bf16.gmra.mxu0 %v2245
    %v2295 = vpop.f32.mrf.mxu0
    %v2296 = vadd.f32 %v2283, %v2295
    %v2297 = vpop.f32.mrf.mxu0
    %2298 = vdwg.mxu0
    %v2300 = vunpack.c.l.b16 %v2046
    %v2301 = vunpack.c.h.b16 %v2046
    %v2302 = vpack.c.b16 %v2300, %v2300
    %v2303 = vpack.c.b16 %v2301, %v2301
    %v2331 = vunpack.c.l.b16 %v2056
    %v2332 = vunpack.c.h.b16 %v2056
    %v2333 = vunpack.c.l.b16 %v2057
    %v2334 = vunpack.c.h.b16 %v2057
    %v2335 = vunpack.c.l.b16 %v2058
    %v2336 = vunpack.c.h.b16 %v2058
    %v2337 = vunpack.c.l.b16 %v2059
    %v2338 = vunpack.c.h.b16 %v2059
    %v2339 = vunpack.c.l.b16 %v2060
    %v2340 = vunpack.c.h.b16 %v2060
    %v2341 = vunpack.c.l.b16 %v2061
    %v2342 = vunpack.c.h.b16 %v2061
    %v2343 = vunpack.c.l.b16 %v2062
    %v2344 = vunpack.c.h.b16 %v2062
    %v2345 = vunpack.c.l.b16 %v2063
    %v2346 = vunpack.c.h.b16 %v2063
    %v2347 = vunpack.c.l.b16 %v2064
    %v2348 = vunpack.c.h.b16 %v2064
    %v2349 = vunpack.c.l.b16 %v2065
    %v2350 = vunpack.c.h.b16 %v2065
    %v2351 = vunpack.c.l.b16 %v2066
    %v2352 = vunpack.c.h.b16 %v2066
    %v2353 = vunpack.c.l.b16 %v2067
    %v2354 = vunpack.c.h.b16 %v2067
    %v2355 = vunpack.c.l.b16 %v2068
    %v2356 = vunpack.c.h.b16 %v2068
    %v2357 = vunpack.c.l.b16 %v2069
    %v2358 = vunpack.c.h.b16 %v2069
    %v2359 = vunpack.c.l.b16 %v2070
    %v2360 = vunpack.c.h.b16 %v2070
    %v2361 = vunpack.c.l.b16 %v2071
    %v2362 = vunpack.c.h.b16 %v2071
    %v2363 = vunpack.c.l.b16 %v2072
    %v2364 = vunpack.c.h.b16 %v2072
    %v2365 = vunpack.c.l.b16 %v2073
    %v2366 = vunpack.c.h.b16 %v2073
    %v2367 = vunpack.c.l.b16 %v2074
    %v2368 = vunpack.c.h.b16 %v2074
    %v2369 = vunpack.c.l.b16 %v2075
    %v2370 = vunpack.c.h.b16 %v2075
    %v2371 = vunpack.c.l.b16 %v2076
    %v2372 = vunpack.c.h.b16 %v2076
    %v2373 = vunpack.c.l.b16 %v2077
    %v2374 = vunpack.c.h.b16 %v2077
    %v2375 = vunpack.c.l.b16 %v2078
    %v2376 = vunpack.c.h.b16 %v2078
    %v2377 = vunpack.c.l.b16 %v2079
    %v2378 = vunpack.c.h.b16 %v2079
    %v2379 = vunpack.c.l.b16 %v2080
    %v2380 = vunpack.c.h.b16 %v2080
    %v2381 = vunpack.c.l.b16 %v2081
    %v2382 = vunpack.c.h.b16 %v2081
    %v2383 = vpack.c.b16 %v2333, %v2331
    %v2384 = vpack.c.b16 %v2334, %v2332
    %v2385 = vpack.c.b16 %v2337, %v2335
    %v2386 = vpack.c.b16 %v2338, %v2336
    %v2387 = vpack.c.b16 %v2341, %v2339
    %v2388 = vpack.c.b16 %v2342, %v2340
    %v2389 = vpack.c.b16 %v2345, %v2343
    %v2390 = vpack.c.b16 %v2346, %v2344
    %v2391 = vpack.c.b16 %v2349, %v2347
    %v2392 = vpack.c.b16 %v2350, %v2348
    %v2393 = vpack.c.b16 %v2353, %v2351
    %v2394 = vpack.c.b16 %v2354, %v2352
    %v2395 = vpack.c.b16 %v2357, %v2355
    %v2396 = vpack.c.b16 %v2358, %v2356
    %v2397 = vpack.c.b16 %v2361, %v2359
    %v2398 = vpack.c.b16 %v2362, %v2360
    %v2399 = vpack.c.b16 %v2365, %v2363
    %v2400 = vpack.c.b16 %v2366, %v2364
    %v2401 = vpack.c.b16 %v2369, %v2367
    %v2402 = vpack.c.b16 %v2370, %v2368
    %v2403 = vpack.c.b16 %v2373, %v2371
    %v2404 = vpack.c.b16 %v2374, %v2372
    %v2405 = vpack.c.b16 %v2377, %v2375
    %v2406 = vpack.c.b16 %v2378, %v2376
    %v2407 = vpack.c.b16 %v2381, %v2379
    %v2408 = vpack.c.b16 %v2382, %v2380
    %v2436 = vsel %vm781, %v2303, 0
    %2438 = vmatpush.bf16.msra.mxu0 %v2397
    %2439 = vmatpush.bf16.msra.mxu0 %v2395
    %2440 = vmatpush.bf16.msra.mxu0 %v2393
    %2441 = vmatpush.bf16.msra.mxu0 %v2391
    %2442 = vmatpush.bf16.msra.mxu0 %v2389
    %2443 = vmatpush.bf16.msra.mxu0 %v2387
    %2444 = vmatpush.bf16.msra.mxu0 %v2385
    %2445 = vmatpush.bf16.msra.mxu0 %v2383
    %2446 = vmatmul.bf16.gmra.mxu0 %v2302
    %v2447 = vpop.f32.mrf.mxu0
    %v2448 = vadd.f32 %v2270, %v2447
    %v2449 = vpop.f32.mrf.mxu0
    %2450 = vdwg.mxu0
    %2451 = vmatpush.bf16.msra.mxu0 0
    %2452 = vmatpush.bf16.msra.mxu0 0
    %2453 = vmatpush.bf16.msra.mxu0 0
    %2454 = vmatpush.bf16.msra.mxu0 %v2407
    %2455 = vmatpush.bf16.msra.mxu0 %v2405
    %2456 = vmatpush.bf16.msra.mxu0 %v2403
    %2457 = vmatpush.bf16.msra.mxu0 %v2401
    %2458 = vmatpush.bf16.msra.mxu0 %v2399
    %2459 = vmatmul.bf16.gmra.mxu0 %v2436
    %v2460 = vpop.f32.mrf.mxu0
    %v2461 = vadd.f32 %v2448, %v2460
    %v2462 = vpop.f32.mrf.mxu0
    %2463 = vdwg.mxu0
    %2464 = vmatpush.bf16.msra.mxu0 %v2398
    %2465 = vmatpush.bf16.msra.mxu0 %v2396
    %2466 = vmatpush.bf16.msra.mxu0 %v2394
    %2467 = vmatpush.bf16.msra.mxu0 %v2392
    %2468 = vmatpush.bf16.msra.mxu0 %v2390
    %2469 = vmatpush.bf16.msra.mxu0 %v2388
    %2470 = vmatpush.bf16.msra.mxu0 %v2386
    %2471 = vmatpush.bf16.msra.mxu0 %v2384
    %2472 = vmatmul.bf16.gmra.mxu0 %v2302
    %v2473 = vpop.f32.mrf.mxu0
    %v2474 = vadd.f32 %v2296, %v2473
    %v2475 = vpop.f32.mrf.mxu0
    %2476 = vdwg.mxu0
    %2477 = vmatpush.bf16.msra.mxu0 0
    %2478 = vmatpush.bf16.msra.mxu0 0
    %2479 = vmatpush.bf16.msra.mxu0 0
    %2480 = vmatpush.bf16.msra.mxu0 %v2408
    %2481 = vmatpush.bf16.msra.mxu0 %v2406
    %2482 = vmatpush.bf16.msra.mxu0 %v2404
    %2483 = vmatpush.bf16.msra.mxu0 %v2402
    %2484 = vmatpush.bf16.msra.mxu0 %v2400
    %2485 = vmatmul.bf16.gmra.mxu0 %v2436
    %v2486 = vpop.f32.mrf.mxu0
    %v2487 = vadd.f32 %v2474, %v2486
    %v2488 = vpop.f32.mrf.mxu0
    %2489 = vdwg.mxu0
    %v2490 = vld [vmem:[%s1028] sm:$0xff]
    %v2491 = vld [vmem:[%s1028 + $0x8] sm:$0xff]
    %v2492 = vld [vmem:[%s1028 + $0x10] sm:$0xff]
    %v2493 = vld [vmem:[%s1028 + $0x18] sm:$0xff]
    %v2494 = vld [vmem:[%s1028 + $0x20] sm:$0xff]
    %v2495 = vld [vmem:[%s1028 + $0x28] sm:$0xff]
    %v2496 = vld [vmem:[%s1028 + $0x30] sm:$0xff]
    %v2497 = vld [vmem:[%s1028 + $0x38] sm:$0xff]
    %v2498 = vld [vmem:[%s1028 + $0x40] sm:$0xff]
    %v2499 = vld [vmem:[%s1028 + $0x48] sm:$0xff]
    %v2500 = vld [vmem:[%s1028 + $0x50] sm:$0xff]
    %v2501 = vld [vmem:[%s1028 + $0x58] sm:$0xff]
    %v2502 = vld [vmem:[%s1028 + $0x60] sm:$0xff]
    %v2503 = vld [vmem:[%s1028 + $0x68] sm:$0xff]
    %v2504 = vld [vmem:[%s1028 + $0x70] sm:$0xff]
    %v2505 = vld [vmem:[%s1028 + $0x78] sm:$0xff]
    %v2506 = vld [vmem:[%s1028 + $0x80] sm:$0xff]
    %v2507 = vld [vmem:[%s1028 + $0x88] sm:$0xff]
    %v2508 = vld [vmem:[%s1028 + $0x90] sm:$0xff]
    %v2509 = vld [vmem:[%s1028 + $0x98] sm:$0xff]
    %v2510 = vld [vmem:[%s1028 + $0xa0] sm:$0xff]
    %v2511 = vld [vmem:[%s1028 + $0xa8] sm:$0xff]
    %v2512 = vld [vmem:[%s1028 + $0xb0] sm:$0xff]
    %v2513 = vld [vmem:[%s1028 + $0xb8] sm:$0xff]
    %v2514 = vld [vmem:[%s1028 + $0xc0] sm:$0xff]
    %v2515 = vld [vmem:[%s1028 + $0xc8] sm:$0xff]
    %v2517 = vshrl.u32 %v2302, 16
    %v2519 = vshll.u32 %v2302, 16
    %v2521 = vrot.slane %v2519, 1
    %v2522 = vor.u32 %v2517, %v2521
    %v2523 = vshrl.u32 %v2303, 16
    %v2525 = vshll.u32 %v2303, 16
    %v2527 = vrot.slane %v2525, 1
    %v2528 = vor.u32 %v2523, %v2527
    %v2556 = vunpack.c.l.b16 %v2490
    %v2557 = vunpack.c.h.b16 %v2490
    %v2558 = vunpack.c.l.b16 %v2491
    %v2559 = vunpack.c.h.b16 %v2491
    %v2560 = vunpack.c.l.b16 %v2492
    %v2561 = vunpack.c.h.b16 %v2492
    %v2562 = vunpack.c.l.b16 %v2493
    %v2563 = vunpack.c.h.b16 %v2493
    %v2564 = vunpack.c.l.b16 %v2494
    %v2565 = vunpack.c.h.b16 %v2494
    %v2566 = vunpack.c.l.b16 %v2495
    %v2567 = vunpack.c.h.b16 %v2495
    %v2568 = vunpack.c.l.b16 %v2496
    %v2569 = vunpack.c.h.b16 %v2496
    %v2570 = vunpack.c.l.b16 %v2497
    %v2571 = vunpack.c.h.b16 %v2497
    %v2572 = vunpack.c.l.b16 %v2498
    %v2573 = vunpack.c.h.b16 %v2498
    %v2574 = vunpack.c.l.b16 %v2499
    %v2575 = vunpack.c.h.b16 %v2499
    %v2576 = vunpack.c.l.b16 %v2500
    %v2577 = vunpack.c.h.b16 %v2500
    %v2578 = vunpack.c.l.b16 %v2501
    %v2579 = vunpack.c.h.b16 %v2501
    %v2580 = vunpack.c.l.b16 %v2502
    %v2581 = vunpack.c.h.b16 %v2502
    %v2582 = vunpack.c.l.b16 %v2503
    %v2583 = vunpack.c.h.b16 %v2503
    %v2584 = vunpack.c.l.b16 %v2504
    %v2585 = vunpack.c.h.b16 %v2504
    %v2586 = vunpack.c.l.b16 %v2505
    %v2587 = vunpack.c.h.b16 %v2505
    %v2588 = vunpack.c.l.b16 %v2506
    %v2589 = vunpack.c.h.b16 %v2506
    %v2590 = vunpack.c.l.b16 %v2507
    %v2591 = vunpack.c.h.b16 %v2507
    %v2592 = vunpack.c.l.b16 %v2508
    %v2593 = vunpack.c.h.b16 %v2508
    %v2594 = vunpack.c.l.b16 %v2509
    %v2595 = vunpack.c.h.b16 %v2509
    %v2596 = vunpack.c.l.b16 %v2510
    %v2597 = vunpack.c.h.b16 %v2510
    %v2598 = vunpack.c.l.b16 %v2511
    %v2599 = vunpack.c.h.b16 %v2511
    %v2600 = vunpack.c.l.b16 %v2512
    %v2601 = vunpack.c.h.b16 %v2512
    %v2602 = vunpack.c.l.b16 %v2513
    %v2603 = vunpack.c.h.b16 %v2513
    %v2604 = vunpack.c.l.b16 %v2514
    %v2605 = vunpack.c.h.b16 %v2514
    %v2606 = vunpack.c.l.b16 %v2515
    %v2607 = vunpack.c.h.b16 %v2515
    %v2608 = vpack.c.b16 %v2558, %v2556
    %v2609 = vpack.c.b16 %v2559, %v2557
    %v2610 = vpack.c.b16 %v2562, %v2560
    %v2611 = vpack.c.b16 %v2563, %v2561
    %v2612 = vpack.c.b16 %v2566, %v2564
    %v2613 = vpack.c.b16 %v2567, %v2565
    %v2614 = vpack.c.b16 %v2570, %v2568
    %v2615 = vpack.c.b16 %v2571, %v2569
    %v2616 = vpack.c.b16 %v2574, %v2572
    %v2617 = vpack.c.b16 %v2575, %v2573
    %v2618 = vpack.c.b16 %v2578, %v2576
    %v2619 = vpack.c.b16 %v2579, %v2577
    %v2620 = vpack.c.b16 %v2582, %v2580
    %v2621 = vpack.c.b16 %v2583, %v2581
    %v2622 = vpack.c.b16 %v2586, %v2584
    %v2623 = vpack.c.b16 %v2587, %v2585
    %v2624 = vpack.c.b16 %v2590, %v2588
    %v2625 = vpack.c.b16 %v2591, %v2589
    %v2626 = vpack.c.b16 %v2594, %v2592
    %v2627 = vpack.c.b16 %v2595, %v2593
    %v2628 = vpack.c.b16 %v2598, %v2596
    %v2629 = vpack.c.b16 %v2599, %v2597
    %v2630 = vpack.c.b16 %v2602, %v2600
    %v2631 = vpack.c.b16 %v2603, %v2601
    %v2632 = vpack.c.b16 %v2606, %v2604
    %v2633 = vpack.c.b16 %v2607, %v2605
    %v2661 = vsel %vm781, %v2528, 0
    %2663 = vmatpush.bf16.msra.mxu0 %v2622
    %2664 = vmatpush.bf16.msra.mxu0 %v2620
    %2665 = vmatpush.bf16.msra.mxu0 %v2618
    %2666 = vmatpush.bf16.msra.mxu0 %v2616
    %2667 = vmatpush.bf16.msra.mxu0 %v2614
    %2668 = vmatpush.bf16.msra.mxu0 %v2612
    %2669 = vmatpush.bf16.msra.mxu0 %v2610
    %2670 = vmatpush.bf16.msra.mxu0 %v2608
    %2671 = vmatmul.bf16.gmra.mxu0 %v2522
    %v2672 = vpop.f32.mrf.mxu0
    %v2673 = vadd.f32 0.0, %v2672
    %v2674 = vpop.f32.mrf.mxu0
    %2675 = vdwg.mxu0
    %2676 = vmatpush.bf16.msra.mxu0 0
    %2677 = vmatpush.bf16.msra.mxu0 0
    %2678 = vmatpush.bf16.msra.mxu0 0
    %2679 = vmatpush.bf16.msra.mxu0 %v2632
    %2680 = vmatpush.bf16.msra.mxu0 %v2630
    %2681 = vmatpush.bf16.msra.mxu0 %v2628
    %2682 = vmatpush.bf16.msra.mxu0 %v2626
    %2683 = vmatpush.bf16.msra.mxu0 %v2624
    %2684 = vmatmul.bf16.gmra.mxu0 %v2661
    %v2685 = vpop.f32.mrf.mxu0
    %v2686 = vadd.f32 %v2673, %v2685
    %v2687 = vpop.f32.mrf.mxu0
    %2688 = vdwg.mxu0
    %2689 = vmatpush.bf16.msra.mxu0 %v2623
    %2690 = vmatpush.bf16.msra.mxu0 %v2621
    %2691 = vmatpush.bf16.msra.mxu0 %v2619
    %2692 = vmatpush.bf16.msra.mxu0 %v2617
    %2693 = vmatpush.bf16.msra.mxu0 %v2615
    %2694 = vmatpush.bf16.msra.mxu0 %v2613
    %2695 = vmatpush.bf16.msra.mxu0 %v2611
    %2696 = vmatpush.bf16.msra.mxu0 %v2609
    %2697 = vmatmul.bf16.gmra.mxu0 %v2522
    %v2698 = vpop.f32.mrf.mxu0
    %v2699 = vadd.f32 0.0, %v2698
    %v2700 = vpop.f32.mrf.mxu0
    %2701 = vdwg.mxu0
    %2702 = vmatpush.bf16.msra.mxu0 0
    %2703 = vmatpush.bf16.msra.mxu0 0
    %2704 = vmatpush.bf16.msra.mxu0 0
    %2705 = vmatpush.bf16.msra.mxu0 %v2633
    %2706 = vmatpush.bf16.msra.mxu0 %v2631
    %2707 = vmatpush.bf16.msra.mxu0 %v2629
    %2708 = vmatpush.bf16.msra.mxu0 %v2627
    %2709 = vmatpush.bf16.msra.mxu0 %v2625
    %2710 = vmatmul.bf16.gmra.mxu0 %v2661
    %v2711 = vpop.f32.mrf.mxu0
    %v2712 = vadd.f32 %v2699, %v2711
    %v2713 = vpop.f32.mrf.mxu0
    %2714 = vdwg.mxu0
    %v2715 = vadd.f32 %v2461, %v2686
    %v2716 = vadd.f32 %v2487, %v2712
    %v2717 = vld [vmem:[%s1256] sm:$0xff]
    %v2718 = vld [vmem:[%s1256 + $0x8] sm:$0xff]
    %v2719 = vld [vmem:[%s1256 + $0x10] sm:$0xff]
    %v2720 = vld [vmem:[%s1256 + $0x18] sm:$0xff]
    %v2721 = vld [vmem:[%s1256 + $0x20] sm:$0xff]
    %v2722 = vld [vmem:[%s1256 + $0x28] sm:$0xff]
    %v2723 = vld [vmem:[%s1256 + $0x30] sm:$0xff]
    %v2724 = vld [vmem:[%s1256 + $0x38] sm:$0xff]
    %v2725 = vld [vmem:[%s1256 + $0x40] sm:$0xff]
    %v2726 = vld [vmem:[%s1256 + $0x48] sm:$0xff]
    %v2727 = vld [vmem:[%s1256 + $0x50] sm:$0xff]
    %v2728 = vld [vmem:[%s1256 + $0x58] sm:$0xff]
    %v2729 = vld [vmem:[%s1256 + $0x60] sm:$0xff]
    %v2730 = vld [vmem:[%s1256 + $0x68] sm:$0xff]
    %v2731 = vld [vmem:[%s1256 + $0x70] sm:$0xff]
    %v2732 = vld [vmem:[%s1256 + $0x78] sm:$0xff]
    %v2733 = vld [vmem:[%s1256 + $0x80] sm:$0xff]
    %v2734 = vld [vmem:[%s1256 + $0x88] sm:$0xff]
    %v2735 = vld [vmem:[%s1256 + $0x90] sm:$0xff]
    %v2736 = vld [vmem:[%s1256 + $0x98] sm:$0xff]
    %v2737 = vld [vmem:[%s1256 + $0xa0] sm:$0xff]
    %v2738 = vld [vmem:[%s1256 + $0xa8] sm:$0xff]
    %v2739 = vld [vmem:[%s1256 + $0xb0] sm:$0xff]
    %v2740 = vld [vmem:[%s1256 + $0xb8] sm:$0xff]
    %v2741 = vld [vmem:[%s1256 + $0xc0] sm:$0xff]
    %v2742 = vld [vmem:[%s1256 + $0xc8] sm:$0xff]
    %v2744 = vshrl.u32 %v2111, 16
    %v2746 = vshll.u32 %v2111, 16
    %v2748 = vrot.slane %v2746, 1
    %v2749 = vor.u32 %v2744, %v2748
    %v2750 = vshrl.u32 %v2112, 16
    %v2752 = vshll.u32 %v2112, 16
    %v2754 = vrot.slane %v2752, 1
    %v2755 = vor.u32 %v2750, %v2754
    %v2783 = vunpack.c.l.b16 %v2717
    %v2784 = vunpack.c.h.b16 %v2717
    %v2785 = vunpack.c.l.b16 %v2718
    %v2786 = vunpack.c.h.b16 %v2718
    %v2787 = vunpack.c.l.b16 %v2719
    %v2788 = vunpack.c.h.b16 %v2719
    %v2789 = vunpack.c.l.b16 %v2720
    %v2790 = vunpack.c.h.b16 %v2720
    %v2791 = vunpack.c.l.b16 %v2721
    %v2792 = vunpack.c.h.b16 %v2721
    %v2793 = vunpack.c.l.b16 %v2722
    %v2794 = vunpack.c.h.b16 %v2722
    %v2795 = vunpack.c.l.b16 %v2723
    %v2796 = vunpack.c.h.b16 %v2723
    %v2797 = vunpack.c.l.b16 %v2724
    %v2798 = vunpack.c.h.b16 %v2724
    %v2799 = vunpack.c.l.b16 %v2725
    %v2800 = vunpack.c.h.b16 %v2725
    %v2801 = vunpack.c.l.b16 %v2726
    %v2802 = vunpack.c.h.b16 %v2726
    %v2803 = vunpack.c.l.b16 %v2727
    %v2804 = vunpack.c.h.b16 %v2727
    %v2805 = vunpack.c.l.b16 %v2728
    %v2806 = vunpack.c.h.b16 %v2728
    %v2807 = vunpack.c.l.b16 %v2729
    %v2808 = vunpack.c.h.b16 %v2729
    %v2809 = vunpack.c.l.b16 %v2730
    %v2810 = vunpack.c.h.b16 %v2730
    %v2811 = vunpack.c.l.b16 %v2731
    %v2812 = vunpack.c.h.b16 %v2731
    %v2813 = vunpack.c.l.b16 %v2732
    %v2814 = vunpack.c.h.b16 %v2732
    %v2815 = vunpack.c.l.b16 %v2733
    %v2816 = vunpack.c.h.b16 %v2733
    %v2817 = vunpack.c.l.b16 %v2734
    %v2818 = vunpack.c.h.b16 %v2734
    %v2819 = vunpack.c.l.b16 %v2735
    %v2820 = vunpack.c.h.b16 %v2735
    %v2821 = vunpack.c.l.b16 %v2736
    %v2822 = vunpack.c.h.b16 %v2736
    %v2823 = vunpack.c.l.b16 %v2737
    %v2824 = vunpack.c.h.b16 %v2737
    %v2825 = vunpack.c.l.b16 %v2738
    %v2826 = vunpack.c.h.b16 %v2738
    %v2827 = vunpack.c.l.b16 %v2739
    %v2828 = vunpack.c.h.b16 %v2739
    %v2829 = vunpack.c.l.b16 %v2740
    %v2830 = vunpack.c.h.b16 %v2740
    %v2831 = vunpack.c.l.b16 %v2741
    %v2832 = vunpack.c.h.b16 %v2741
    %v2833 = vunpack.c.l.b16 %v2742
    %v2834 = vunpack.c.h.b16 %v2742
    %v2835 = vpack.c.b16 %v2785, %v2783
    %v2836 = vpack.c.b16 %v2786, %v2784
    %v2837 = vpack.c.b16 %v2789, %v2787
    %v2838 = vpack.c.b16 %v2790, %v2788
    %v2839 = vpack.c.b16 %v2793, %v2791
    %v2840 = vpack.c.b16 %v2794, %v2792
    %v2841 = vpack.c.b16 %v2797, %v2795
    %v2842 = vpack.c.b16 %v2798, %v2796
    %v2843 = vpack.c.b16 %v2801, %v2799
    %v2844 = vpack.c.b16 %v2802, %v2800
    %v2845 = vpack.c.b16 %v2805, %v2803
    %v2846 = vpack.c.b16 %v2806, %v2804
    %v2847 = vpack.c.b16 %v2809, %v2807
    %v2848 = vpack.c.b16 %v2810, %v2808
    %v2849 = vpack.c.b16 %v2813, %v2811
    %v2850 = vpack.c.b16 %v2814, %v2812
    %v2851 = vpack.c.b16 %v2817, %v2815
    %v2852 = vpack.c.b16 %v2818, %v2816
    %v2853 = vpack.c.b16 %v2821, %v2819
    %v2854 = vpack.c.b16 %v2822, %v2820
    %v2855 = vpack.c.b16 %v2825, %v2823
    %v2856 = vpack.c.b16 %v2826, %v2824
    %v2857 = vpack.c.b16 %v2829, %v2827
    %v2858 = vpack.c.b16 %v2830, %v2828
    %v2859 = vpack.c.b16 %v2833, %v2831
    %v2860 = vpack.c.b16 %v2834, %v2832
    %v2888 = vsel %vm781, %v2755, 0
    %2890 = vmatpush.bf16.msra.mxu0 %v2849
    %2891 = vmatpush.bf16.msra.mxu0 %v2847
    %2892 = vmatpush.bf16.msra.mxu0 %v2845
    %2893 = vmatpush.bf16.msra.mxu0 %v2843
    %2894 = vmatpush.bf16.msra.mxu0 %v2841
    %2895 = vmatpush.bf16.msra.mxu0 %v2839
    %2896 = vmatpush.bf16.msra.mxu0 %v2837
    %2897 = vmatpush.bf16.msra.mxu0 %v2835
    %2898 = vmatmul.bf16.gmra.mxu0 %v2749
    %v2899 = vpop.f32.mrf.mxu0
    %v2900 = vadd.f32 0.0, %v2899
    %v2901 = vpop.f32.mrf.mxu0
    %2902 = vdwg.mxu0
    %2903 = vmatpush.bf16.msra.mxu0 0
    %2904 = vmatpush.bf16.msra.mxu0 0
    %2905 = vmatpush.bf16.msra.mxu0 0
    %2906 = vmatpush.bf16.msra.mxu0 %v2859
    %2907 = vmatpush.bf16.msra.mxu0 %v2857
    %2908 = vmatpush.bf16.msra.mxu0 %v2855
    %2909 = vmatpush.bf16.msra.mxu0 %v2853
    %2910 = vmatpush.bf16.msra.mxu0 %v2851
    %2911 = vmatmul.bf16.gmra.mxu0 %v2888
    %v2912 = vpop.f32.mrf.mxu0
    %v2913 = vadd.f32 %v2900, %v2912
    %v2914 = vpop.f32.mrf.mxu0
    %2915 = vdwg.mxu0
    %2916 = vmatpush.bf16.msra.mxu0 %v2850
    %2917 = vmatpush.bf16.msra.mxu0 %v2848
    %2918 = vmatpush.bf16.msra.mxu0 %v2846
    %2919 = vmatpush.bf16.msra.mxu0 %v2844
    %2920 = vmatpush.bf16.msra.mxu0 %v2842
    %2921 = vmatpush.bf16.msra.mxu0 %v2840
    %2922 = vmatpush.bf16.msra.mxu0 %v2838
    %2923 = vmatpush.bf16.msra.mxu0 %v2836
    %2924 = vmatmul.bf16.gmra.mxu0 %v2749
    %v2925 = vpop.f32.mrf.mxu0
    %v2926 = vadd.f32 0.0, %v2925
    %v2927 = vpop.f32.mrf.mxu0
    %2928 = vdwg.mxu0
    %2929 = vmatpush.bf16.msra.mxu0 0
    %2930 = vmatpush.bf16.msra.mxu0 0
    %2931 = vmatpush.bf16.msra.mxu0 0
    %2932 = vmatpush.bf16.msra.mxu0 %v2860
    %2933 = vmatpush.bf16.msra.mxu0 %v2858
    %2934 = vmatpush.bf16.msra.mxu0 %v2856
    %2935 = vmatpush.bf16.msra.mxu0 %v2854
    %2936 = vmatpush.bf16.msra.mxu0 %v2852
    %2937 = vmatmul.bf16.gmra.mxu0 %v2888
    %v2938 = vpop.f32.mrf.mxu0
    %v2939 = vadd.f32 %v2926, %v2938
    %v2940 = vpop.f32.mrf.mxu0
    %2941 = vdwg.mxu0
    %v2942 = vadd.f32 %v2715, %v2913
    %v2943 = vadd.f32 %v2716, %v2939
    %v2944 = vadd.f32 %v2942, %v1485
    %v2945 = vadd.f32 %v2943, %v1486
    %v2946 = vmax.f32 %v2944, 0.0
    %v2947 = vmax.f32 %v2945, 0.0
    %2950 = vrot.lane.b32.xlu0 %v2946, 96
    %v2951 = vpop.permute.xlu0 %2950
    %2952 = vrot.lane.b32.xlu0 %v2947, 96
    %v2953 = vpop.permute.xlu0 %2952
    %v2954 = vsel %vm1499, %v2951, %v2953
    %v2956 = vmax.f32 %v2946, %v2954
    %v2958 = vrot.slane %v2956, 1
    %v2960 = vmax.f32 %v2956, %v2958
    %2961 = vst [vmem:[#allocation2 + $0x1] sm:$0x1] %v2960
    %2962 = vst [vmem:[%s1508] sm:$0x2] %v2960
    %2963 = vst [vmem:[%s1510 - $0x1] sm:$0x4] %v2960
    %2964 = vst [vmem:[%s1512 - $0x2] sm:$0x8] %v2960
    %v2965 = vld [vmem:[#allocation2] sm:$0x3]
    %v2966 = vpack.c.bf16 %v2965, %v2965
    %v2967 = vld [vmem:[%s6] sm:$0xf]
    %v2968 = vld [vmem:[%s6 + $0x4] sm:$0xf]
    %v2969 = vld [vmem:[%s6 + $0x8] sm:$0xf]
    %v2970 = vld [vmem:[%s6 + $0xc] sm:$0xf]
    %v2971 = vld [vmem:[%s6 + $0x10] sm:$0xf]
    %v2972 = vld [vmem:[%s6 + $0x14] sm:$0xf]
    %v2973 = vld [vmem:[%s6 + $0x18] sm:$0xf]
    %v2974 = vld [vmem:[%s6 + $0x1c] sm:$0xf]
    %v2975 = vld [vmem:[%s6 + $0x20] sm:$0xf]
    %v2976 = vld [vmem:[%s6 + $0x24] sm:$0xf]
    %v2977 = vld [vmem:[%s6 + $0x28] sm:$0xf]
    %v2978 = vld [vmem:[%s6 + $0x2c] sm:$0xf]
    %v2979 = vld [vmem:[%s6 + $0x30] sm:$0xf]
    %v2980 = vld [vmem:[%s6 + $0x34] sm:$0xf]
    %v2981 = vld [vmem:[%s6 + $0x38] sm:$0xf]
    %v2982 = vld [vmem:[%s6 + $0x3c] sm:$0xf]
    %v2983 = vld [vmem:[%s1508] sm:$0x3]
    %v2984 = vpack.c.bf16 %v2983, %v2983
    %s2985 = scalar_lea.vmem %s6, 64
    %v2986 = vld [vmem:[%s2985] sm:$0xf]
    %v2987 = vld [vmem:[%s2985 + $0x4] sm:$0xf]
    %v2988 = vld [vmem:[%s2985 + $0x8] sm:$0xf]
    %v2989 = vld [vmem:[%s2985 + $0xc] sm:$0xf]
    %v2990 = vld [vmem:[%s2985 + $0x10] sm:$0xf]
    %v2991 = vld [vmem:[%s2985 + $0x14] sm:$0xf]
    %v2992 = vld [vmem:[%s2985 + $0x18] sm:$0xf]
    %v2993 = vld [vmem:[%s2985 + $0x1c] sm:$0xf]
    %v2994 = vld [vmem:[%s2985 + $0x20] sm:$0xf]
    %v2995 = vld [vmem:[%s2985 + $0x24] sm:$0xf]
    %v2996 = vld [vmem:[%s2985 + $0x28] sm:$0xf]
    %v2997 = vld [vmem:[%s2985 + $0x2c] sm:$0xf]
    %v2998 = vld [vmem:[%s2985 + $0x30] sm:$0xf]
    %v2999 = vld [vmem:[%s2985 + $0x34] sm:$0xf]
    %v3000 = vld [vmem:[%s2985 + $0x38] sm:$0xf]
    %v3001 = vld [vmem:[%s2985 + $0x3c] sm:$0xf]
    %v3018 = vunpack.c.l.b16 %v2986
    %v3019 = vunpack.c.l.b16 %v2987
    %v3020 = vunpack.c.l.b16 %v2988
    %v3021 = vunpack.c.l.b16 %v2989
    %v3022 = vunpack.c.l.b16 %v2990
    %v3023 = vunpack.c.l.b16 %v2991
    %v3024 = vunpack.c.l.b16 %v2992
    %v3025 = vunpack.c.l.b16 %v2993
    %v3026 = vunpack.c.l.b16 %v2994
    %v3027 = vunpack.c.l.b16 %v2995
    %v3028 = vunpack.c.l.b16 %v2996
    %v3029 = vunpack.c.l.b16 %v2997
    %v3030 = vunpack.c.l.b16 %v2998
    %v3031 = vunpack.c.l.b16 %v2999
    %v3032 = vunpack.c.l.b16 %v3000
    %v3033 = vunpack.c.l.b16 %v3001
    %v3034 = vpack.c.b16 %v3019, %v3018
    %v3035 = vpack.c.b16 %v3021, %v3020
    %v3036 = vpack.c.b16 %v3023, %v3022
    %v3037 = vpack.c.b16 %v3025, %v3024
    %v3038 = vpack.c.b16 %v3027, %v3026
    %v3039 = vpack.c.b16 %v3029, %v3028
    %v3040 = vpack.c.b16 %v3031, %v3030
    %v3041 = vpack.c.b16 %v3033, %v3032
    %3050 = vmatpush.bf16.msra.mxu0 %v3041
    %3051 = vmatpush.bf16.msra.mxu0 %v3040
    %3052 = vmatpush.bf16.msra.mxu0 %v3039
    %3053 = vmatpush.bf16.msra.mxu0 %v3038
    %3054 = vmatpush.bf16.msra.mxu0 %v3037
    %3055 = vmatpush.bf16.msra.mxu0 %v3036
    %3056 = vmatpush.bf16.msra.mxu0 %v3035
    %3057 = vmatpush.bf16.msra.mxu0 %v3034
    %3058 = vmatmul.bf16.gmra.mxu0 %v2984
    %v3059 = vpop.f32.mrf.mxu0
    %v3060 = vadd.f32 0.0, %v3059
    %v3061 = vpop.f32.mrf.mxu0
    %3062 = vdwg.mxu0
    %v3079 = vunpack.c.l.b16 %v2967
    %v3080 = vunpack.c.l.b16 %v2968
    %v3081 = vunpack.c.l.b16 %v2969
    %v3082 = vunpack.c.l.b16 %v2970
    %v3083 = vunpack.c.l.b16 %v2971
    %v3084 = vunpack.c.l.b16 %v2972
    %v3085 = vunpack.c.l.b16 %v2973
    %v3086 = vunpack.c.l.b16 %v2974
    %v3087 = vunpack.c.l.b16 %v2975
    %v3088 = vunpack.c.l.b16 %v2976
    %v3089 = vunpack.c.l.b16 %v2977
    %v3090 = vunpack.c.l.b16 %v2978
    %v3091 = vunpack.c.l.b16 %v2979
    %v3092 = vunpack.c.l.b16 %v2980
    %v3093 = vunpack.c.l.b16 %v2981
    %v3094 = vunpack.c.l.b16 %v2982
    %v3095 = vpack.c.b16 %v3080, %v3079
    %v3096 = vpack.c.b16 %v3082, %v3081
    %v3097 = vpack.c.b16 %v3084, %v3083
    %v3098 = vpack.c.b16 %v3086, %v3085
    %v3099 = vpack.c.b16 %v3088, %v3087
    %v3100 = vpack.c.b16 %v3090, %v3089
    %v3101 = vpack.c.b16 %v3092, %v3091
    %v3102 = vpack.c.b16 %v3094, %v3093
    %3111 = vmatpush.bf16.msra.mxu0 %v3102
    %3112 = vmatpush.bf16.msra.mxu0 %v3101
    %3113 = vmatpush.bf16.msra.mxu0 %v3100
    %3114 = vmatpush.bf16.msra.mxu0 %v3099
    %3115 = vmatpush.bf16.msra.mxu0 %v3098
    %3116 = vmatpush.bf16.msra.mxu0 %v3097
    %3117 = vmatpush.bf16.msra.mxu0 %v3096
    %3118 = vmatpush.bf16.msra.mxu0 %v3095
    %3119 = vmatmul.bf16.gmra.mxu0 %v2966
    %v3120 = vpop.f32.mrf.mxu0
    %v3121 = vadd.f32 %v3060, %v3120
    %v3122 = vpop.f32.mrf.mxu0
    %3123 = vdwg.mxu0
    %v3124 = vld [vmem:[%s1510] sm:$0x3]
    %v3125 = vpack.c.bf16 %v3124, %v3124
    %s3126 = scalar_lea.vmem %s6, 128
    %v3127 = vld [vmem:[%s3126] sm:$0xf]
    %v3128 = vld [vmem:[%s3126 + $0x4] sm:$0xf]
    %v3129 = vld [vmem:[%s3126 + $0x8] sm:$0xf]
    %v3130 = vld [vmem:[%s3126 + $0xc] sm:$0xf]
    %v3131 = vld [vmem:[%s3126 + $0x10] sm:$0xf]
    %v3132 = vld [vmem:[%s3126 + $0x14] sm:$0xf]
    %v3133 = vld [vmem:[%s3126 + $0x18] sm:$0xf]
    %v3134 = vld [vmem:[%s3126 + $0x1c] sm:$0xf]
    %v3135 = vld [vmem:[%s3126 + $0x20] sm:$0xf]
    %v3136 = vld [vmem:[%s3126 + $0x24] sm:$0xf]
    %v3137 = vld [vmem:[%s3126 + $0x28] sm:$0xf]
    %v3138 = vld [vmem:[%s3126 + $0x2c] sm:$0xf]
    %v3139 = vld [vmem:[%s3126 + $0x30] sm:$0xf]
    %v3140 = vld [vmem:[%s3126 + $0x34] sm:$0xf]
    %v3141 = vld [vmem:[%s3126 + $0x38] sm:$0xf]
    %v3142 = vld [vmem:[%s3126 + $0x3c] sm:$0xf]
    %v3159 = vunpack.c.l.b16 %v3127
    %v3160 = vunpack.c.l.b16 %v3128
    %v3161 = vunpack.c.l.b16 %v3129
    %v3162 = vunpack.c.l.b16 %v3130
    %v3163 = vunpack.c.l.b16 %v3131
    %v3164 = vunpack.c.l.b16 %v3132
    %v3165 = vunpack.c.l.b16 %v3133
    %v3166 = vunpack.c.l.b16 %v3134
    %v3167 = vunpack.c.l.b16 %v3135
    %v3168 = vunpack.c.l.b16 %v3136
    %v3169 = vunpack.c.l.b16 %v3137
    %v3170 = vunpack.c.l.b16 %v3138
    %v3171 = vunpack.c.l.b16 %v3139
    %v3172 = vunpack.c.l.b16 %v3140
    %v3173 = vunpack.c.l.b16 %v3141
    %v3174 = vunpack.c.l.b16 %v3142
    %v3175 = vpack.c.b16 %v3160, %v3159
    %v3176 = vpack.c.b16 %v3162, %v3161
    %v3177 = vpack.c.b16 %v3164, %v3163
    %v3178 = vpack.c.b16 %v3166, %v3165
    %v3179 = vpack.c.b16 %v3168, %v3167
    %v3180 = vpack.c.b16 %v3170, %v3169
    %v3181 = vpack.c.b16 %v3172, %v3171
    %v3182 = vpack.c.b16 %v3174, %v3173
    %3191 = vmatpush.bf16.msra.mxu0 %v3182
    %3192 = vmatpush.bf16.msra.mxu0 %v3181
    %3193 = vmatpush.bf16.msra.mxu0 %v3180
    %3194 = vmatpush.bf16.msra.mxu0 %v3179
    %3195 = vmatpush.bf16.msra.mxu0 %v3178
    %3196 = vmatpush.bf16.msra.mxu0 %v3177
    %3197 = vmatpush.bf16.msra.mxu0 %v3176
    %3198 = vmatpush.bf16.msra.mxu0 %v3175
    %3199 = vmatmul.bf16.gmra.mxu0 %v3125
    %v3200 = vpop.f32.mrf.mxu0
    %v3201 = vadd.f32 0.0, %v3200
    %v3202 = vpop.f32.mrf.mxu0
    %3203 = vdwg.mxu0
    %v3204 = vadd.f32 %v3121, %v3201
    %v3205 = vld [vmem:[%s1512] sm:$0x3]
    %v3206 = vpack.c.bf16 %v3205, %v3205
    %s3207 = scalar_lea.vmem %s6, 192
    %v3208 = vld [vmem:[%s3207] sm:$0xf]
    %v3209 = vld [vmem:[%s3207 + $0x4] sm:$0xf]
    %v3210 = vld [vmem:[%s3207 + $0x8] sm:$0xf]
    %v3211 = vld [vmem:[%s3207 + $0xc] sm:$0xf]
    %v3212 = vld [vmem:[%s3207 + $0x10] sm:$0xf]
    %v3213 = vld [vmem:[%s3207 + $0x14] sm:$0xf]
    %v3214 = vld [vmem:[%s3207 + $0x18] sm:$0xf]
    %v3215 = vld [vmem:[%s3207 + $0x1c] sm:$0xf]
    %v3216 = vld [vmem:[%s3207 + $0x20] sm:$0xf]
    %v3217 = vld [vmem:[%s3207 + $0x24] sm:$0xf]
    %v3218 = vld [vmem:[%s3207 + $0x28] sm:$0xf]
    %v3219 = vld [vmem:[%s3207 + $0x2c] sm:$0xf]
    %v3220 = vld [vmem:[%s3207 + $0x30] sm:$0xf]
    %v3221 = vld [vmem:[%s3207 + $0x34] sm:$0xf]
    %v3222 = vld [vmem:[%s3207 + $0x38] sm:$0xf]
    %v3223 = vld [vmem:[%s3207 + $0x3c] sm:$0xf]
    %v3240 = vunpack.c.l.b16 %v3208
    %v3241 = vunpack.c.l.b16 %v3209
    %v3242 = vunpack.c.l.b16 %v3210
    %v3243 = vunpack.c.l.b16 %v3211
    %v3244 = vunpack.c.l.b16 %v3212
    %v3245 = vunpack.c.l.b16 %v3213
    %v3246 = vunpack.c.l.b16 %v3214
    %v3247 = vunpack.c.l.b16 %v3215
    %v3248 = vunpack.c.l.b16 %v3216
    %v3249 = vunpack.c.l.b16 %v3217
    %v3250 = vunpack.c.l.b16 %v3218
    %v3251 = vunpack.c.l.b16 %v3219
    %v3252 = vunpack.c.l.b16 %v3220
    %v3253 = vunpack.c.l.b16 %v3221
    %v3254 = vunpack.c.l.b16 %v3222
    %v3255 = vunpack.c.l.b16 %v3223
    %v3256 = vpack.c.b16 %v3241, %v3240
    %v3257 = vpack.c.b16 %v3243, %v3242
    %v3258 = vpack.c.b16 %v3245, %v3244
    %v3259 = vpack.c.b16 %v3247, %v3246
    %v3260 = vpack.c.b16 %v3249, %v3248
    %v3261 = vpack.c.b16 %v3251, %v3250
    %v3262 = vpack.c.b16 %v3253, %v3252
    %v3263 = vpack.c.b16 %v3255, %v3254
    %3272 = vmatpush.bf16.msra.mxu0 %v3263
    %3273 = vmatpush.bf16.msra.mxu0 %v3262
    %3274 = vmatpush.bf16.msra.mxu0 %v3261
    %3275 = vmatpush.bf16.msra.mxu0 %v3260
    %3276 = vmatpush.bf16.msra.mxu0 %v3259
    %3277 = vmatpush.bf16.msra.mxu0 %v3258
    %3278 = vmatpush.bf16.msra.mxu0 %v3257
    %3279 = vmatpush.bf16.msra.mxu0 %v3256
    %3280 = vmatmul.bf16.gmra.mxu0 %v3206
    %v3281 = vpop.f32.mrf.mxu0
    %v3282 = vadd.f32 0.0, %v3281
    %v3283 = vpop.f32.mrf.mxu0
    %3284 = vdwg.mxu0
    %v3285 = vadd.f32 %v3204, %v3282
    %v3287 = vperm.slane %v39, 0
    %v3289 = vadd.f32 %v3285, %v3287
    %v3290 = vmax.f32 %v3289, 0.0
    %v3291 = vpack.c.bf16 %v3290, %v3290
    %v3292 = vld [vmem:[%s8] sm:$0xf]
    %v3293 = vld [vmem:[%s8 + $0x4] sm:$0xf]
    %v3294 = vld [vmem:[%s8 + $0x8] sm:$0xf]
    %v3295 = vld [vmem:[%s8 + $0xc] sm:$0xf]
    %v3297 = vperm.slane %v40, 0
    %v3303 = vunpack.c.l.b16 %v3292
    %v3304 = vunpack.c.l.b16 %v3293
    %v3305 = vunpack.c.l.b16 %v3294
    %v3306 = vunpack.c.l.b16 %v3295
    %v3307 = vpack.c.b16 %v3304, %v3303
    %v3308 = vpack.c.b16 %v3306, %v3305
    %vm3311 = vcmask 261120
    %v3313 = vsel %vm3311, %v3291, 0
    %3315 = vmatpush.bf16.msra.mxu0 0
    %3316 = vmatpush.bf16.msra.mxu0 0
    %3317 = vmatpush.bf16.msra.mxu0 0
    %3318 = vmatpush.bf16.msra.mxu0 0
    %3319 = vmatpush.bf16.msra.mxu0 0
    %3320 = vmatpush.bf16.msra.mxu0 0
    %3321 = vmatpush.bf16.msra.mxu0 %v3308
    %3322 = vmatpush.bf16.msra.mxu0 %v3307
    %3323 = vmatmul.bf16.gmra.mxu0 %v3313
    %v3324 = vpop.f32.mrf.mxu0
    %v3325 = vadd.f32 %v3297, %v3324
    %v3326 = vpop.f32.mrf.mxu0
    %3327 = vdwg.mxu0
    %3328 = vst [vmem:[#allocation3] sm:$0x3] %v3325
    // Predicated region
    $region42: #{convnet_forward.1} parent=1 // pred_check
      _
    $region43: #{convnet_forward.1} parent=1 // pred_check_branch
      %3330 = sbr.rel (0) target = $region45
    $region44: #{convnet_forward.1} parent=1 // pred_region
      %3332 = vsyncadd [#allocation4], 0
      %s3334 = sshll.u32 [#allocation3], 4
      %s3335 = int_to_ptr.vmem [resolvable:$true] %s3334
      %s3336 = sshll.u32 %s10, 4
      %s3337 = int_to_ptr.hbm [resolvable:$true] %s3336
      %3339 = dma.vmem_to_hbm [thread:$0]  %s3335, 32, %s3337, [#allocation4]
    $region45: #{convnet_forward.1} parent=1 // pred_fallthru
      _
    // Predicated region
    $region46: #{convnet_forward.1} parent=1 // pred_check
      _
    $region47: #{convnet_forward.1} parent=1 // pred_check_branch
      %3341 = sbr.rel (0) target = $region49
    $region48: #{convnet_forward.1} parent=1 // pred_region
      %3343 = dma.done [#allocation4], 32
    $region49: #{convnet_forward.1} parent=1 // pred_fallthru
      _
    %3344 = vsyncpa [#allocation4], 1

</llo_original>
